<compile_context>
chip_gen: v7x
topology: tpu7x:2x2x1
jax: 0.10.0
libtpu: 0.0.40
codegen_flags: <defaults>
</compile_context>

<pallas_src>
import math

import jax
import jax.numpy as jnp
from jax.experimental import pallas as pl
from jax.experimental.pallas import tpu as pltpu

# ----------------------- configuration (small shapes) -----------------------
NUM_INPUTS = 8
OUTPUT_SIZE = 10
M = 8                      # memory word size
N = 16                     # number of memory locations
R = 2                      # num_read_heads
W = 1                      # num_write_heads
CTRL_SIZE = 32
CTRL_LAYERS = 2
BATCH = 2
SEQ_LEN = 8
NUM_READ_MODE = 1 + 2 * W
CTRL_IN = NUM_INPUTS + M * R
PROC_IN = CTRL_SIZE + R * M
H4 = 4 * CTRL_SIZE         # 128 = exactly one lane width

HEAD_SEGMENTS = [
    ('write_vectors', W * M), ('erase_vectors', W * M), ('free_gate', R),
    ('allocation_gate', W), ('write_gate', W), ('read_mode', R * NUM_READ_MODE),
    ('write_keys', W * M), ('write_strengths', W), ('read_keys', R * M),
    ('read_strengths', R),
]
_SEG = {}
_off = 0
for _name, _size in HEAD_SEGMENTS:
    _SEG[_name] = (_off, _off + _size)
    _off += _size
HEAD_TOTAL = _off            # 53
PROJ_TOTAL = HEAD_TOTAL + OUTPUT_SIZE   # 63 (heads + proc(c_output) fused)

# packed recurrent-state slab layout: [read_w (R) | write_w (W) | usage (W) | prec (W)]
NS_ROWS = R + 3 * W


# ----------------------------- in-kernel helpers ------------------------------
def _softplus(x):
    # numerically-stable softplus using only exp/log
    return jnp.maximum(x, 0.0) + jnp.log(1.0 + jnp.exp(-jnp.abs(x)))


def _softmax_lastdim(x):
    # exact division: addressing weights feed back through recurrent state
    x = x - jnp.max(x, axis=-1, keepdims=True)
    e = jnp.exp(x)
    return e / jnp.sum(e, axis=-1, keepdims=True)


# ------------------------------- fused kernel --------------------------------
def _dnc_seq_kernel(x_ref, rv0_ref, hc0_ref, ns0_ref, L0_ref,
                    wx0_ref, wr0_ref, wsm_ref, lb_ref,
                    hpw_ref, hpb_ref, pwr_ref, mem_ref,
                    out_ref, rv_out_ref, hc_out_ref, ns_out_ref, L_out_ref,
                    rv_s, hc_s, ns_s, L_s):
    t = pl.program_id(0)

    # ---- step 0: load the externally supplied recurrent state into scratch ---
    @pl.when(t == 0)
    def _init():
        rv_s[...] = rv0_ref[...]
        hc_s[...] = hc0_ref[...]
        ns_s[...] = ns0_ref[...]
        L_s[...] = L0_ref[...]

    # ---- load previous state (values, so later ref writes cannot clobber) ----
    x = x_ref[0]                     # (B, NUM_INPUTS)
    r_flat_prev = rv_s[...]          # (B, R*M)     previous read vectors
    ns_prev = ns_s[...]              # (NS_ROWS, B, N)
    mem = mem_ref[...]               # (B, N, M)

    # ---- controller: 2-layer LSTM with fused 4H=128-lane gate matmuls --------
    # TODO(synk): `controller` source not provided; standard multi-layer LSTM
    # (PyTorch gate order i,f,g,o, output = top-layer h) assumed.
    cur = None
    for layer in range(CTRL_LAYERS):
        h_prev = hc_s[layer]
        c_prev = hc_s[CTRL_LAYERS + layer]
        b = lb_ref[layer]            # (1, 4H)
        if layer == 0:
            pre = (jnp.dot(x, wx0_ref[...], preferred_element_type=jnp.float32)
                   + jnp.dot(r_flat_prev, wr0_ref[...],
                             preferred_element_type=jnp.float32)
                   + jnp.dot(h_prev, wsm_ref[0],
                             preferred_element_type=jnp.float32)
                   + b)
        else:
            pre = (jnp.dot(cur, wsm_ref[1], preferred_element_type=jnp.float32)
                   + jnp.dot(h_prev, wsm_ref[2],
                             preferred_element_type=jnp.float32)
                   + b)
        i_g = jax.nn.sigmoid(pre[:, 0:CTRL_SIZE])
        f_g = jax.nn.sigmoid(pre[:, CTRL_SIZE:2 * CTRL_SIZE])
        g_g = jnp.tanh(pre[:, 2 * CTRL_SIZE:3 * CTRL_SIZE])
        o_g = jax.nn.sigmoid(pre[:, 3 * CTRL_SIZE:4 * CTRL_SIZE])
        c_new = f_g * c_prev + i_g * g_g
        h_new = o_g * jnp.tanh(c_new)
        hc_s[layer] = h_new
        hc_s[CTRL_LAYERS + layer] = c_new
        cur = h_new
    c_output = cur                                           # (B, CTRL_SIZE)

    # ---- fused projection: all 10 Linear heads + proc(c_output) part ---------
    raw = (jnp.dot(c_output, hpw_ref[...],
                   preferred_element_type=jnp.float32) + hpb_ref[...])  # (B, 63)

    def seg(name):
        lo, hi = _SEG[name]
        return raw[:, lo:hi]

    free_gate = jax.nn.sigmoid(seg('free_gate'))             # (B, R)
    alloc_gate = jax.nn.sigmoid(seg('allocation_gate'))      # (B, W)
    write_gate = jax.nn.sigmoid(seg('write_gate'))           # (B, W)
    # TODO(synk): write_vectors / erase_vectors are produced by
    # param_operations in the reference but never consumed inside
    # processor.forward (memory is not updated there), so they are not used.

    inv_mnorm = jax.lax.rsqrt(jnp.sum(mem * mem, axis=-1) + 1e-8)   # (B, N)

    def content(key, beta):
        # key: (B, M), beta: (B, 1) -> softmax_N(beta * cos_sim(key, memory))
        dots = jnp.sum(key[:, None, :] * mem, axis=-1)       # (B, N), VPU (M=8)
        inv_knorm = jax.lax.rsqrt(
            jnp.sum(key * key, axis=-1, keepdims=True) + 1e-8)
        # TODO(synk): eps applied per-norm (reference head source unavailable).
        return _softmax_lastdim(dots * inv_knorm * inv_mnorm * beta)

    # ---- memory-retention psi --------------------------------------------------
    psi = 1.0 - free_gate[:, 0:1] * ns_prev[0]
    for r in range(1, R):
        psi = psi * (1.0 - free_gate[:, r:r + 1] * ns_prev[r])

    # iotas with the "other" index k on the LAST (lane) axis
    kk = jax.lax.broadcasted_iota(jnp.int32, (N, N), 1)[None]    # k index
    nn_ = jax.lax.broadcasted_iota(jnp.int32, (N, N), 0)[None]   # own index n
    tie_le = kk <= nn_
    diag = kk == nn_

    lo_wk, _ = _SEG['write_keys']
    lo_ws, _ = _SEG['write_strengths']
    new_links = []
    for j in range(W):
        u_prev = ns_prev[R + W + j]                          # (B, N)
        w_prev = ns_prev[R + j]                              # (B, N)
        u = (u_prev + w_prev - u_prev * w_prev) * psi
        ns_s[R + W + j] = u

        # allocation: alloc[n] = (1 - u[n]) * prod_{rank(k) <= rank(n)} u[k]
        # Exact match of the reference's stable argsort + INCLUSIVE cumprod
        # (the reference uses torch.cumprod, which is inclusive), computed as a
        # pairwise-rank masked product with k on the lane axis and a log2(N)
        # pairwise-tree reduce (no argsort, no serial 15-multiply chain).
        u_n = u[:, :, None]                                  # varies over n (axis 1)
        u_k = u[:, None, :]                                  # varies over k (axis 2)
        sel = (u_k < u_n) | ((u_k == u_n) & tie_le)
        factors = jnp.where(sel, u_k, 1.0)                   # (B, N, N), k on lanes
        prod = factors
        size = N
        while size > 1:
            half = size // 2
            prod = prod[:, :, :half] * prod[:, :, half:size]
            size = half
        prod = prod[:, :, 0]
        alloc = (1.0 - u) * prod                             # (B, N)

        # ---- write addressing ------------------------------------------------
        # TODO(synk): DNC_write_head source not provided; gated content +
        # allocation write addressing assumed.
        wkey = raw[:, lo_wk + j * M: lo_wk + (j + 1) * M]    # (B, M)
        wbeta = 1.0 + _softplus(raw[:, lo_ws + j: lo_ws + j + 1])
        wcw = content(wkey, wbeta)                           # (B, N)
        g_a = alloc_gate[:, j:j + 1]
        g_w = write_gate[:, j:j + 1]
        w_write = g_w * (g_a * alloc + (1.0 - g_a) * wcw)    # (B, N)
        ns_s[R + j] = w_write

        # ---- temporal linkage update ----------------------------------------
        p_prev = ns_prev[R + 2 * W + j]                      # (B, N)
        L_prev = L_s[j]                                      # (B, N, N)
        wi = w_write[:, :, None]
        wj = w_write[:, None, :]
        newL = (1.0 - wi - wj) * L_prev + wi * p_prev[:, None, :]
        newL = jnp.where(diag, 0.0, newL)
        L_s[j] = newL
        new_links.append(newL)
        ns_s[R + 2 * W + j] = ((1.0 - jnp.sum(w_write, axis=1, keepdims=True))
                               * p_prev + w_write)

    # ---- read heads: backward | content | forward mixing + memory read -------
    # TODO(synk): DNC_read_head source not provided; standard DNC directional
    # read addressing (mode order: backward | content | forward) assumed.
    lo_rm, _ = _SEG['read_mode']
    lo_rk, _ = _SEG['read_keys']
    lo_rs, _ = _SEG['read_strengths']

    for r in range(R):
        mode = _softmax_lastdim(
            raw[:, lo_rm + r * NUM_READ_MODE: lo_rm + (r + 1) * NUM_READ_MODE])
        rkey = raw[:, lo_rk + r * M: lo_rk + (r + 1) * M]
        rbeta = 1.0 + _softplus(raw[:, lo_rs + r: lo_rs + r + 1])
        rcw = content(rkey, rbeta)                           # (B, N)
        prevw_r = ns_prev[r]                                 # (B, N)

        combined = mode[:, W:W + 1] * rcw
        for j in range(W):
            Lj = new_links[j]                                # (B, N, N)
            # fwd[b,i] = sum_n prevw[b,n] * L[b,i,n]
            fwd = jnp.sum(prevw_r[:, None, :] * Lj, axis=-1)
            # bwd[b,i] = sum_n prevw[b,n] * L[b,n,i]
            bwd = jnp.sum(prevw_r[:, :, None] * Lj, axis=1)
            combined = (combined
                        + mode[:, j:j + 1] * bwd
                        + mode[:, W + 1 + j:W + 2 + j] * fwd)
        ns_s[r] = combined
        rvec = jnp.sum(combined[:, :, None] * mem, axis=1)   # (B, M)
        rv_s[:, r * M:(r + 1) * M] = rvec                    # pack lane-dense

    # ---- output projection: fused proc(c_output) part + one (B,16)x(16,10) ---
    rv_new = rv_s[...]                                       # (B, R*M), new read vecs
    out = (raw[:, HEAD_TOTAL:PROJ_TOTAL]
           + jnp.dot(rv_new, pwr_ref[...], preferred_element_type=jnp.float32))
    out_ref[0] = out

    # ---- last step: write the carried state back out --------------------------
    @pl.when(t == pl.num_programs(0) - 1)
    def _final():
        rv_out_ref[...] = rv_s[...]
        hc_out_ref[...] = hc_s[...]
        ns_out_ref[...] = ns_s[...]
        L_out_ref[...] = L_s[...]


def _resident(shape):
    nd = len(shape)
    return pl.BlockSpec(shape, lambda t, _nd=nd: (0,) * _nd)


def _dnc_seq(x_seq, rv0, hc0, ns0, L0, params, memory):
    T, B = x_seq.shape[0], x_seq.shape[1]

    in_specs = [
        pl.BlockSpec((1, B, NUM_INPUTS), lambda t: (t, 0, 0)),   # per-step X
        _resident(rv0.shape), _resident(hc0.shape),
        _resident(ns0.shape), _resident(L0.shape),
        _resident(params['lstm_wx0'].shape), _resident(params['lstm_wr0'].shape),
        _resident(params['lstm_wsm'].shape), _resident(params['lstm_b'].shape),
        _resident(params['headproj_w'].shape), _resident(params['headproj_b'].shape),
        _resident(params['proc_wr'].shape), _resident(memory.shape),
    ]
    out_shapes = (
        jax.ShapeDtypeStruct((T, B, OUTPUT_SIZE), jnp.float32),           # out seq
        jax.ShapeDtypeStruct((B, R * M), jnp.float32),                    # read vecs
        jax.ShapeDtypeStruct((2 * CTRL_LAYERS, B, CTRL_SIZE), jnp.float32),  # h|c
        jax.ShapeDtypeStruct((NS_ROWS, B, N), jnp.float32),               # rw|ww|u|p
        jax.ShapeDtypeStruct((W, B, N, N), jnp.float32),                  # links
    )
    out_specs = (
        pl.BlockSpec((1, B, OUTPUT_SIZE), lambda t: (t, 0, 0)),
        _resident((B, R * M)),
        _resident((2 * CTRL_LAYERS, B, CTRL_SIZE)),
        _resident((NS_ROWS, B, N)),
        _resident((W, B, N, N)),
    )
    scratch_shapes = [
        pltpu.VMEM((B, R * M), jnp.float32),
        pltpu.VMEM((2 * CTRL_LAYERS, B, CTRL_SIZE), jnp.float32),
        pltpu.VMEM((NS_ROWS, B, N), jnp.float32),
        pltpu.VMEM((W, B, N, N), jnp.float32),
    ]
    return pl.pallas_call(
        _dnc_seq_kernel,
        grid=(T,),
        out_shape=out_shapes,
        in_specs=in_specs,
        out_specs=out_specs,
        scratch_shapes=scratch_shapes,
        compiler_params=pltpu.CompilerParams(
            dimension_semantics=("arbitrary",),          # time is sequential
            vmem_limit_bytes=16 * 1024 * 1024),
    )(x_seq, rv0, hc0, ns0, L0,
      params['lstm_wx0'], params['lstm_wr0'], params['lstm_wsm'],
      params['lstm_b'], params['headproj_w'], params['headproj_b'],
      params['proc_wr'], memory)


# ------------------------------ parameter setup ------------------------------
def _xavier(key, fan_in, fan_out):
    limit = math.sqrt(6.0 / (fan_in + fan_out))
    return jax.random.uniform(key, (fan_in, fan_out), jnp.float32, -limit, limit)


def init_params(key):
    keys = iter(jax.random.split(key, 32))
    kscale = 1.0 / math.sqrt(CTRL_SIZE)

    def uni(k, shape):
        return jax.random.uniform(k, shape, jnp.float32, -kscale, kscale)

    # LSTM weights, gate order (i,f,g,o), fused along the 4H=128 lane axis;
    # layer-0 input weight is split into x-part and read-vector-part so the
    # controller input never needs an XLA-side concat.
    lstm_wx0 = uni(next(keys), (NUM_INPUTS, H4))
    lstm_wr0 = uni(next(keys), (R * M, H4))
    whh0 = uni(next(keys), (CTRL_SIZE, H4))
    wih1 = uni(next(keys), (CTRL_SIZE, H4))
    whh1 = uni(next(keys), (CTRL_SIZE, H4))
    lstm_wsm = jnp.stack([whh0, wih1, whh1], axis=0)        # (3, H, 4H)
    lstm_b = uni(next(keys), (CTRL_LAYERS, 1, H4))          # b_ih + b_hh folded

    init_r = jax.random.normal(next(keys), (1, R * M), jnp.float32) * 0.01

    ws, bs = [], []
    for _, size in HEAD_SEGMENTS:
        ws.append(_xavier(next(keys), CTRL_SIZE, size))
        bs.append(jax.random.normal(next(keys), (size,), jnp.float32) * 0.01)
    head_w = jnp.concatenate(ws, axis=1)                    # (H, 53)
    head_b = jnp.concatenate(bs, axis=0)                    # (53,)

    proc_w = _xavier(next(keys), PROC_IN, OUTPUT_SIZE)      # (48, 10)
    proc_b = jax.random.normal(next(keys), (OUTPUT_SIZE,), jnp.float32) * 0.01

    # fuse the c_output part of proc into the head projection: (H, 63)
    headproj_w = jnp.concatenate([head_w, proc_w[:CTRL_SIZE]], axis=1)
    headproj_b = jnp.concatenate([head_b, proc_b], axis=0).reshape(1, PROJ_TOTAL)

    return {
        'lstm_wx0': lstm_wx0,
        'lstm_wr0': lstm_wr0,
        'lstm_wsm': lstm_wsm,
        'lstm_b': lstm_b,
        'init_r': init_r,
        'headproj_w': headproj_w,
        'headproj_b': headproj_b,
        'proc_wr': proc_w[CTRL_SIZE:],                      # (R*M, OUTPUT_SIZE)
    }


def create_new_state(params, batch):
    rv0 = jnp.tile(params['init_r'], (batch, 1))            # (B, R*M)
    hc0 = jnp.zeros((2 * CTRL_LAYERS, batch, CTRL_SIZE), jnp.float32)
    ns0 = jnp.zeros((NS_ROWS, batch, N), jnp.float32)       # rw | ww | usage | prec
    L0 = jnp.zeros((W, batch, N, N), jnp.float32)
    return (rv0, hc0, ns0, L0)


# --------------------------------- forward -----------------------------------
def processor_forward_seq(params, X_seq, prev_state, memory):
    """Runs T consecutive applications of the original module's forward."""
    rv0, hc0, ns0, L0 = prev_state
    out_seq, rv, hc, ns, L = _dnc_seq(X_seq, rv0, hc0, ns0, L0, params, memory)
    return out_seq, (rv, hc, ns, L)


def processor_forward(params, X, prev_state, memory):
    """Original single-step forward semantics (T == 1)."""
    out_seq, new_state = processor_forward_seq(params, X[None], prev_state, memory)
    return out_seq[0], new_state


# ----------------------------------- main -------------------------------------
if __name__ == "__main__":
    key = jax.random.PRNGKey(0)
    k_params, k_x, k_mem = jax.random.split(key, 3)

    params = init_params(k_params)
    X_seq = jax.random.normal(k_x, (SEQ_LEN, BATCH, NUM_INPUTS), jnp.float32)
    memory = jax.random.normal(k_mem, (BATCH, N, M), jnp.float32) * 0.1
    state0 = create_new_state(params, BATCH)

    run_seq = jax.jit(processor_forward_seq)
    out_seq, state_T = run_seq(params, X_seq, state0, memory)
    out_seq = jax.block_until_ready(out_seq)
    jax.block_until_ready(state_T)

    # single original-module step chained from the fused-sequence final state
    run_step = jax.jit(processor_forward)
    out1, state1 = run_step(params, X_seq[-1], state_T, memory)
    out1 = jax.block_until_ready(out1)
    jax.block_until_ready(state1)

    assert out_seq.shape == (SEQ_LEN, BATCH, OUTPUT_SIZE)
    assert out1.shape == (BATCH, OUTPUT_SIZE)
    rv, hc, ns, L = state_T
    assert rv.shape == (BATCH, R * M)                        # read vectors
    assert hc.shape == (2 * CTRL_LAYERS, BATCH, CTRL_SIZE)   # controller h|c
    assert ns.shape == (NS_ROWS, BATCH, N)                   # rw|ww|usage|prec
    assert L.shape == (W, BATCH, N, N)                       # temporal links
    assert bool(jnp.all(jnp.isfinite(out_seq)))
    assert bool(jnp.all(jnp.isfinite(out1)))
    print("KERNEL_OK")
</pallas_src>

<mosaic_0001>
module attributes {stable_mosaic.version = 11 : i64} {
  func.func @_dnc_seq_kernel(%arg0: i32, %arg1: memref<1x2x8xf32, #tpu.memory_space<vmem>>, %arg2: memref<2x16xf32, #tpu.memory_space<vmem>>, %arg3: memref<4x2x32xf32, #tpu.memory_space<vmem>>, %arg4: memref<5x2x16xf32, #tpu.memory_space<vmem>>, %arg5: memref<1x2x16x16xf32, #tpu.memory_space<vmem>>, %arg6: memref<8x128xf32, #tpu.memory_space<vmem>>, %arg7: memref<16x128xf32, #tpu.memory_space<vmem>>, %arg8: memref<3x32x128xf32, #tpu.memory_space<vmem>>, %arg9: memref<2x1x128xf32, #tpu.memory_space<vmem>>, %arg10: memref<32x63xf32, #tpu.memory_space<vmem>>, %arg11: memref<1x63xf32, #tpu.memory_space<vmem>>, %arg12: memref<16x10xf32, #tpu.memory_space<vmem>>, %arg13: memref<2x16x8xf32, #tpu.memory_space<vmem>>, %arg14: memref<1x2x10xf32, #tpu.memory_space<vmem>>, %arg15: memref<2x16xf32, #tpu.memory_space<vmem>>, %arg16: memref<4x2x32xf32, #tpu.memory_space<vmem>>, %arg17: memref<5x2x16xf32, #tpu.memory_space<vmem>>, %arg18: memref<1x2x16x16xf32, #tpu.memory_space<vmem>>, %arg19: memref<2x16xf32, #tpu.memory_space<vmem>>, %arg20: memref<4x2x32xf32, #tpu.memory_space<vmem>>, %arg21: memref<5x2x16xf32, #tpu.memory_space<vmem>>, %arg22: memref<1x2x16x16xf32, #tpu.memory_space<vmem>>) attributes {dimension_semantics = [#tpu.dimension_semantics<arbitrary>], iteration_bounds = array<i64: 8>, scalar_prefetch = 0 : i64, scratch_operands = 4 : i64, tpu.core_type = #tpu.core_type<tc>, window_params = [{transform_indices = @transform_0, window_bounds = array<i64: 1, 2, 8>}, {pipeline_mode = #tpu.pipeline_mode<synchronous>, transform_indices = @transform_1, window_bounds = array<i64: 2, 16>}, {pipeline_mode = #tpu.pipeline_mode<synchronous>, transform_indices = @transform_2, window_bounds = array<i64: 4, 2, 32>}, {pipeline_mode = #tpu.pipeline_mode<synchronous>, transform_indices = @transform_3, window_bounds = array<i64: 5, 2, 16>}, {pipeline_mode = #tpu.pipeline_mode<synchronous>, transform_indices = @transform_4, window_bounds = array<i64: 1, 2, 16, 16>}, {pipeline_mode = #tpu.pipeline_mode<synchronous>, transform_indices = @transform_5, window_bounds = array<i64: 8, 128>}, {pipeline_mode = #tpu.pipeline_mode<synchronous>, transform_indices = @transform_6, window_bounds = array<i64: 16, 128>}, {pipeline_mode = #tpu.pipeline_mode<synchronous>, transform_indices = @transform_7, window_bounds = array<i64: 3, 32, 128>}, {pipeline_mode = #tpu.pipeline_mode<synchronous>, transform_indices = @transform_8, window_bounds = array<i64: 2, 1, 128>}, {pipeline_mode = #tpu.pipeline_mode<synchronous>, transform_indices = @transform_9, window_bounds = array<i64: 32, 63>}, {pipeline_mode = #tpu.pipeline_mode<synchronous>, transform_indices = @transform_10, window_bounds = array<i64: 1, 63>}, {pipeline_mode = #tpu.pipeline_mode<synchronous>, transform_indices = @transform_11, window_bounds = array<i64: 16, 10>}, {pipeline_mode = #tpu.pipeline_mode<synchronous>, transform_indices = @transform_12, window_bounds = array<i64: 2, 16, 8>}, {transform_indices = @transform_13, window_bounds = array<i64: 1, 2, 10>}, {pipeline_mode = #tpu.pipeline_mode<synchronous>, transform_indices = @transform_14, window_bounds = array<i64: 2, 16>}, {pipeline_mode = #tpu.pipeline_mode<synchronous>, transform_indices = @transform_15, window_bounds = array<i64: 4, 2, 32>}, {pipeline_mode = #tpu.pipeline_mode<synchronous>, transform_indices = @transform_16, window_bounds = array<i64: 5, 2, 16>}, {pipeline_mode = #tpu.pipeline_mode<synchronous>, transform_indices = @transform_17, window_bounds = array<i64: 1, 2, 16, 16>}]} {
    %c0_i32 = arith.constant 0 : i32
    %0 = arith.cmpi eq, %arg0, %c0_i32 : i32
    %1 = arith.extui %0 : i1 to i32
    %c0_i32_0 = arith.constant 0 : i32
    %2 = arith.cmpi ne, %1, %c0_i32_0 : i32
    scf.if %2 {
      %c0_151 = arith.constant 0 : index
      %c0_152 = arith.constant 0 : index
      %442 = vector.load %arg2[%c0_151, %c0_152] : memref<2x16xf32, #tpu.memory_space<vmem>>, vector<2x16xf32>
      %c0_153 = arith.constant 0 : index
      %c0_154 = arith.constant 0 : index
      %443 = vector.load %arg19[%c0_153, %c0_154] : memref<2x16xf32, #tpu.memory_space<vmem>>, vector<2x16xf32>
      tpu.vector_store %arg19[%c0_153, %c0_154], %442 {strides = array<i32>} : memref<2x16xf32, #tpu.memory_space<vmem>>, vector<2x16xf32>,
      %c0_155 = arith.constant 0 : index
      %c0_156 = arith.constant 0 : index
      %c0_157 = arith.constant 0 : index
      %444 = vector.load %arg3[%c0_155, %c0_156, %c0_157] : memref<4x2x32xf32, #tpu.memory_space<vmem>>, vector<4x2x32xf32>
      %c0_158 = arith.constant 0 : index
      %c0_159 = arith.constant 0 : index
      %c0_160 = arith.constant 0 : index
      %445 = vector.load %arg20[%c0_158, %c0_159, %c0_160] : memref<4x2x32xf32, #tpu.memory_space<vmem>>, vector<4x2x32xf32>
      tpu.vector_store %arg20[%c0_158, %c0_159, %c0_160], %444 {strides = array<i32>} : memref<4x2x32xf32, #tpu.memory_space<vmem>>, vector<4x2x32xf32>,
      %c0_161 = arith.constant 0 : index
      %c0_162 = arith.constant 0 : index
      %c0_163 = arith.constant 0 : index
      %446 = vector.load %arg4[%c0_161, %c0_162, %c0_163] : memref<5x2x16xf32, #tpu.memory_space<vmem>>, vector<5x2x16xf32>
      %c0_164 = arith.constant 0 : index
      %c0_165 = arith.constant 0 : index
      %c0_166 = arith.constant 0 : index
      %447 = vector.load %arg21[%c0_164, %c0_165, %c0_166] : memref<5x2x16xf32, #tpu.memory_space<vmem>>, vector<5x2x16xf32>
      tpu.vector_store %arg21[%c0_164, %c0_165, %c0_166], %446 {strides = array<i32>} : memref<5x2x16xf32, #tpu.memory_space<vmem>>, vector<5x2x16xf32>,
      %c0_167 = arith.constant 0 : index
      %c0_168 = arith.constant 0 : index
      %c0_169 = arith.constant 0 : index
      %c0_170 = arith.constant 0 : index
      %448 = vector.load %arg5[%c0_167, %c0_168, %c0_169, %c0_170] : memref<1x2x16x16xf32, #tpu.memory_space<vmem>>, vector<1x2x16x16xf32>
      %c0_171 = arith.constant 0 : index
      %c0_172 = arith.constant 0 : index
      %c0_173 = arith.constant 0 : index
      %c0_174 = arith.constant 0 : index
      %449 = vector.load %arg22[%c0_171, %c0_172, %c0_173, %c0_174] : memref<1x2x16x16xf32, #tpu.memory_space<vmem>>, vector<1x2x16x16xf32>
      tpu.vector_store %arg22[%c0_171, %c0_172, %c0_173, %c0_174], %448 {strides = array<i32>} : memref<1x2x16x16xf32, #tpu.memory_space<vmem>>, vector<1x2x16x16xf32>,
    } else {
    }
    %c0 = arith.constant 0 : index
    %c0_1 = arith.constant 0 : index
    %c0_2 = arith.constant 0 : index
    %3 = vector.load %arg1[%c0, %c0_1, %c0_2] : memref<1x2x8xf32, #tpu.memory_space<vmem>>, vector<1x2x8xf32>
    %4 = vector.shape_cast %3 : vector<1x2x8xf32> to vector<2x8xf32>
    %c0_3 = arith.constant 0 : index
    %c0_4 = arith.constant 0 : index
    %5 = vector.load %arg19[%c0_3, %c0_4] : memref<2x16xf32, #tpu.memory_space<vmem>>, vector<2x16xf32>
    %c0_5 = arith.constant 0 : index
    %c0_6 = arith.constant 0 : index
    %c0_7 = arith.constant 0 : index
    %6 = vector.load %arg21[%c0_5, %c0_6, %c0_7] : memref<5x2x16xf32, #tpu.memory_space<vmem>>, vector<5x2x16xf32>
    %c0_8 = arith.constant 0 : index
    %c0_9 = arith.constant 0 : index
    %c0_10 = arith.constant 0 : index
    %7 = vector.load %arg13[%c0_8, %c0_9, %c0_10] : memref<2x16x8xf32, #tpu.memory_space<vmem>>, vector<2x16x8xf32>
    %c0_11 = arith.constant 0 : index
    %c0_12 = arith.constant 0 : index
    %c0_13 = arith.constant 0 : index
    %8 = vector.load %arg20[%c0_11, %c0_12, %c0_13] : memref<4x2x32xf32, #tpu.memory_space<vmem>>, vector<1x2x32xf32>
    %9 = vector.shape_cast %8 : vector<1x2x32xf32> to vector<2x32xf32>
    %c2 = arith.constant 2 : index
    %c0_14 = arith.constant 0 : index
    %c0_15 = arith.constant 0 : index
    %10 = vector.load %arg20[%c2, %c0_14, %c0_15] : memref<4x2x32xf32, #tpu.memory_space<vmem>>, vector<1x2x32xf32>
    %11 = vector.shape_cast %10 : vector<1x2x32xf32> to vector<2x32xf32>
    %c0_16 = arith.constant 0 : index
    %c0_17 = arith.constant 0 : index
    %c0_18 = arith.constant 0 : index
    %12 = vector.load %arg9[%c0_16, %c0_17, %c0_18] : memref<2x1x128xf32, #tpu.memory_space<vmem>>, vector<1x1x128xf32>
    %13 = vector.shape_cast %12 : vector<1x1x128xf32> to vector<1x128xf32>
    %c0_19 = arith.constant 0 : index
    %c0_20 = arith.constant 0 : index
    %14 = vector.load %arg6[%c0_19, %c0_20] : memref<8x128xf32, #tpu.memory_space<vmem>>, vector<8x128xf32>
    %cst = arith.constant dense<0.000000e+00> : vector<2x128xf32>
    %15 = tpu.matmul %4, %14, %cst {dimension_numbers = #tpu.dot_dimension_numbers<[1], [0], [0], [1], [0, 0, 1, 1], [], []>} : vector<2x8xf32>, vector<8x128xf32>, vector<2x128xf32> -> vector<2x128xf32>
    %c0_21 = arith.constant 0 : index
    %c0_22 = arith.constant 0 : index
    %16 = vector.load %arg7[%c0_21, %c0_22] : memref<16x128xf32, #tpu.memory_space<vmem>>, vector<16x128xf32>
    %cst_23 = arith.constant dense<0.000000e+00> : vector<2x128xf32>
    %17 = tpu.matmul %5, %16, %cst_23 {dimension_numbers = #tpu.dot_dimension_numbers<[1], [0], [0], [1], [0, 0, 1, 1], [], []>} : vector<2x16xf32>, vector<16x128xf32>, vector<2x128xf32> -> vector<2x128xf32>
    %18 = arith.addf %15, %17 : vector<2x128xf32>
    %c0_24 = arith.constant 0 : index
    %c0_25 = arith.constant 0 : index
    %c0_26 = arith.constant 0 : index
    %19 = vector.load %arg8[%c0_24, %c0_25, %c0_26] : memref<3x32x128xf32, #tpu.memory_space<vmem>>, vector<1x32x128xf32>
    %20 = vector.shape_cast %19 : vector<1x32x128xf32> to vector<32x128xf32>
    %cst_27 = arith.constant dense<0.000000e+00> : vector<2x128xf32>
    %21 = tpu.matmul %9, %20, %cst_27 {dimension_numbers = #tpu.dot_dimension_numbers<[1], [0], [0], [1], [0, 0, 1, 1], [], []>} : vector<2x32xf32>, vector<32x128xf32>, vector<2x128xf32> -> vector<2x128xf32>
    %22 = arith.addf %18, %21 : vector<2x128xf32>
    %23 = vector.broadcast %13 : vector<1x128xf32> to vector<2x128xf32>
    %24 = arith.addf %22, %23 : vector<2x128xf32>
    %25 = vector.extract_strided_slice %24 {offsets = [0, 0], sizes = [2, 32], strides = [1, 1]} : vector<2x128xf32> to vector<2x32xf32>
    %26 = arith.negf %25 : vector<2x32xf32>
    %27 = math.exp %26 : vector<2x32xf32>
    %cst_28 = arith.constant 1.000000e+00 : f32
    %28 = vector.broadcast %cst_28 : f32 to vector<2x32xf32>
    %29 = arith.addf %28, %27 : vector<2x32xf32>
    %30 = arith.divf %28, %29 : vector<2x32xf32>
    %31 = vector.extract_strided_slice %24 {offsets = [0, 32], sizes = [2, 32], strides = [1, 1]} : vector<2x128xf32> to vector<2x32xf32>
    %32 = arith.negf %31 : vector<2x32xf32>
    %33 = math.exp %32 : vector<2x32xf32>
    %cst_29 = arith.constant 1.000000e+00 : f32
    %34 = vector.broadcast %cst_29 : f32 to vector<2x32xf32>
    %35 = arith.addf %34, %33 : vector<2x32xf32>
    %36 = arith.divf %34, %35 : vector<2x32xf32>
    %37 = vector.extract_strided_slice %24 {offsets = [0, 64], sizes = [2, 32], strides = [1, 1]} : vector<2x128xf32> to vector<2x32xf32>
    %38 = math.tanh %37 : vector<2x32xf32>
    %39 = vector.extract_strided_slice %24 {offsets = [0, 96], sizes = [2, 32], strides = [1, 1]} : vector<2x128xf32> to vector<2x32xf32>
    %40 = arith.negf %39 : vector<2x32xf32>
    %41 = math.exp %40 : vector<2x32xf32>
    %cst_30 = arith.constant 1.000000e+00 : f32
    %42 = vector.broadcast %cst_30 : f32 to vector<2x32xf32>
    %43 = arith.addf %42, %41 : vector<2x32xf32>
    %44 = arith.divf %42, %43 : vector<2x32xf32>
    %45 = arith.mulf %36, %11 : vector<2x32xf32>
    %46 = arith.mulf %30, %38 : vector<2x32xf32>
    %47 = arith.addf %45, %46 : vector<2x32xf32>
    %48 = math.tanh %47 : vector<2x32xf32>
    %49 = arith.mulf %44, %48 : vector<2x32xf32>
    %c0_31 = arith.constant 0 : index
    %c0_32 = arith.constant 0 : index
    %c0_33 = arith.constant 0 : index
    %50 = vector.load %arg20[%c0_31, %c0_32, %c0_33] : memref<4x2x32xf32, #tpu.memory_space<vmem>>, vector<1x2x32xf32>
    %51 = vector.shape_cast %50 : vector<1x2x32xf32> to vector<2x32xf32>
    %52 = vector.shape_cast %49 : vector<2x32xf32> to vector<1x2x32xf32>
    tpu.vector_store %arg20[%c0_31, %c0_32, %c0_33], %52 {strides = array<i32>} : memref<4x2x32xf32, #tpu.memory_space<vmem>>, vector<1x2x32xf32>,
    %c2_34 = arith.constant 2 : index
    %c0_35 = arith.constant 0 : index
    %c0_36 = arith.constant 0 : index
    %53 = vector.load %arg20[%c2_34, %c0_35, %c0_36] : memref<4x2x32xf32, #tpu.memory_space<vmem>>, vector<1x2x32xf32>
    %54 = vector.shape_cast %53 : vector<1x2x32xf32> to vector<2x32xf32>
    %55 = vector.shape_cast %47 : vector<2x32xf32> to vector<1x2x32xf32>
    tpu.vector_store %arg20[%c2_34, %c0_35, %c0_36], %55 {strides = array<i32>} : memref<4x2x32xf32, #tpu.memory_space<vmem>>, vector<1x2x32xf32>,
    %c1 = arith.constant 1 : index
    %c0_37 = arith.constant 0 : index
    %c0_38 = arith.constant 0 : index
    %56 = vector.load %arg20[%c1, %c0_37, %c0_38] : memref<4x2x32xf32, #tpu.memory_space<vmem>>, vector<1x2x32xf32>
    %57 = vector.shape_cast %56 : vector<1x2x32xf32> to vector<2x32xf32>
    %c3 = arith.constant 3 : index
    %c0_39 = arith.constant 0 : index
    %c0_40 = arith.constant 0 : index
    %58 = vector.load %arg20[%c3, %c0_39, %c0_40] : memref<4x2x32xf32, #tpu.memory_space<vmem>>, vector<1x2x32xf32>
    %59 = vector.shape_cast %58 : vector<1x2x32xf32> to vector<2x32xf32>
    %c1_41 = arith.constant 1 : index
    %c0_42 = arith.constant 0 : index
    %c0_43 = arith.constant 0 : index
    %60 = vector.load %arg9[%c1_41, %c0_42, %c0_43] : memref<2x1x128xf32, #tpu.memory_space<vmem>>, vector<1x1x128xf32>
    %61 = vector.shape_cast %60 : vector<1x1x128xf32> to vector<1x128xf32>
    %c1_44 = arith.constant 1 : index
    %c0_45 = arith.constant 0 : index
    %c0_46 = arith.constant 0 : index
    %62 = vector.load %arg8[%c1_44, %c0_45, %c0_46] : memref<3x32x128xf32, #tpu.memory_space<vmem>>, vector<1x32x128xf32>
    %63 = vector.shape_cast %62 : vector<1x32x128xf32> to vector<32x128xf32>
    %cst_47 = arith.constant dense<0.000000e+00> : vector<2x128xf32>
    %64 = tpu.matmul %49, %63, %cst_47 {dimension_numbers = #tpu.dot_dimension_numbers<[1], [0], [0], [1], [0, 0, 1, 1], [], []>} : vector<2x32xf32>, vector<32x128xf32>, vector<2x128xf32> -> vector<2x128xf32>
    %c2_48 = arith.constant 2 : index
    %c0_49 = arith.constant 0 : index
    %c0_50 = arith.constant 0 : index
    %65 = vector.load %arg8[%c2_48, %c0_49, %c0_50] : memref<3x32x128xf32, #tpu.memory_space<vmem>>, vector<1x32x128xf32>
    %66 = vector.shape_cast %65 : vector<1x32x128xf32> to vector<32x128xf32>
    %cst_51 = arith.constant dense<0.000000e+00> : vector<2x128xf32>
    %67 = tpu.matmul %57, %66, %cst_51 {dimension_numbers = #tpu.dot_dimension_numbers<[1], [0], [0], [1], [0, 0, 1, 1], [], []>} : vector<2x32xf32>, vector<32x128xf32>, vector<2x128xf32> -> vector<2x128xf32>
    %68 = arith.addf %64, %67 : vector<2x128xf32>
    %69 = vector.broadcast %61 : vector<1x128xf32> to vector<2x128xf32>
    %70 = arith.addf %68, %69 : vector<2x128xf32>
    %71 = vector.extract_strided_slice %70 {offsets = [0, 0], sizes = [2, 32], strides = [1, 1]} : vector<2x128xf32> to vector<2x32xf32>
    %72 = arith.negf %71 : vector<2x32xf32>
    %73 = math.exp %72 : vector<2x32xf32>
    %cst_52 = arith.constant 1.000000e+00 : f32
    %74 = vector.broadcast %cst_52 : f32 to vector<2x32xf32>
    %75 = arith.addf %74, %73 : vector<2x32xf32>
    %76 = arith.divf %74, %75 : vector<2x32xf32>
    %77 = vector.extract_strided_slice %70 {offsets = [0, 32], sizes = [2, 32], strides = [1, 1]} : vector<2x128xf32> to vector<2x32xf32>
    %78 = arith.negf %77 : vector<2x32xf32>
    %79 = math.exp %78 : vector<2x32xf32>
    %cst_53 = arith.constant 1.000000e+00 : f32
    %80 = vector.broadcast %cst_53 : f32 to vector<2x32xf32>
    %81 = arith.addf %80, %79 : vector<2x32xf32>
    %82 = arith.divf %80, %81 : vector<2x32xf32>
    %83 = vector.extract_strided_slice %70 {offsets = [0, 64], sizes = [2, 32], strides = [1, 1]} : vector<2x128xf32> to vector<2x32xf32>
    %84 = math.tanh %83 : vector<2x32xf32>
    %85 = vector.extract_strided_slice %70 {offsets = [0, 96], sizes = [2, 32], strides = [1, 1]} : vector<2x128xf32> to vector<2x32xf32>
    %86 = arith.negf %85 : vector<2x32xf32>
    %87 = math.exp %86 : vector<2x32xf32>
    %cst_54 = arith.constant 1.000000e+00 : f32
    %88 = vector.broadcast %cst_54 : f32 to vector<2x32xf32>
    %89 = arith.addf %88, %87 : vector<2x32xf32>
    %90 = arith.divf %88, %89 : vector<2x32xf32>
    %91 = arith.mulf %82, %59 : vector<2x32xf32>
    %92 = arith.mulf %76, %84 : vector<2x32xf32>
    %93 = arith.addf %91, %92 : vector<2x32xf32>
    %94 = math.tanh %93 : vector<2x32xf32>
    %95 = arith.mulf %90, %94 : vector<2x32xf32>
    %c1_55 = arith.constant 1 : index
    %c0_56 = arith.constant 0 : index
    %c0_57 = arith.constant 0 : index
    %96 = vector.load %arg20[%c1_55, %c0_56, %c0_57] : memref<4x2x32xf32, #tpu.memory_space<vmem>>, vector<1x2x32xf32>
    %97 = vector.shape_cast %96 : vector<1x2x32xf32> to vector<2x32xf32>
    %98 = vector.shape_cast %95 : vector<2x32xf32> to vector<1x2x32xf32>
    tpu.vector_store %arg20[%c1_55, %c0_56, %c0_57], %98 {strides = array<i32>} : memref<4x2x32xf32, #tpu.memory_space<vmem>>, vector<1x2x32xf32>,
    %c3_58 = arith.constant 3 : index
    %c0_59 = arith.constant 0 : index
    %c0_60 = arith.constant 0 : index
    %99 = vector.load %arg20[%c3_58, %c0_59, %c0_60] : memref<4x2x32xf32, #tpu.memory_space<vmem>>, vector<1x2x32xf32>
    %100 = vector.shape_cast %99 : vector<1x2x32xf32> to vector<2x32xf32>
    %101 = vector.shape_cast %93 : vector<2x32xf32> to vector<1x2x32xf32>
    tpu.vector_store %arg20[%c3_58, %c0_59, %c0_60], %101 {strides = array<i32>} : memref<4x2x32xf32, #tpu.memory_space<vmem>>, vector<1x2x32xf32>,
    %c0_61 = arith.constant 0 : index
    %c0_62 = arith.constant 0 : index
    %102 = vector.load %arg10[%c0_61, %c0_62] : memref<32x63xf32, #tpu.memory_space<vmem>>, vector<32x63xf32>
    %cst_63 = arith.constant dense<0.000000e+00> : vector<2x63xf32>
    %103 = tpu.matmul %95, %102, %cst_63 {dimension_numbers = #tpu.dot_dimension_numbers<[1], [0], [0], [1], [0, 0, 1, 1], [], []>} : vector<2x32xf32>, vector<32x63xf32>, vector<2x63xf32> -> vector<2x63xf32>
    %c0_64 = arith.constant 0 : index
    %c0_65 = arith.constant 0 : index
    %104 = vector.load %arg11[%c0_64, %c0_65] : memref<1x63xf32, #tpu.memory_space<vmem>>, vector<1x63xf32>
    %105 = vector.broadcast %104 : vector<1x63xf32> to vector<2x63xf32>
    %106 = arith.addf %103, %105 : vector<2x63xf32>
    %107 = vector.extract_strided_slice %106 {offsets = [0, 16], sizes = [2, 2], strides = [1, 1]} : vector<2x63xf32> to vector<2x2xf32>
    %108 = arith.negf %107 : vector<2x2xf32>
    %109 = math.exp %108 : vector<2x2xf32>
    %cst_66 = arith.constant 1.000000e+00 : f32
    %110 = vector.broadcast %cst_66 : f32 to vector<2x2xf32>
    %111 = arith.addf %110, %109 : vector<2x2xf32>
    %112 = arith.divf %110, %111 : vector<2x2xf32>
    %113 = vector.extract_strided_slice %106 {offsets = [0, 18], sizes = [2, 1], strides = [1, 1]} : vector<2x63xf32> to vector<2x1xf32>
    %114 = arith.negf %113 : vector<2x1xf32>
    %115 = math.exp %114 : vector<2x1xf32>
    %cst_67 = arith.constant 1.000000e+00 : f32
    %116 = vector.broadcast %cst_67 : f32 to vector<2x1xf32>
    %117 = arith.addf %116, %115 : vector<2x1xf32>
    %118 = arith.divf %116, %117 : vector<2x1xf32>
    %119 = vector.extract_strided_slice %106 {offsets = [0, 19], sizes = [2, 1], strides = [1, 1]} : vector<2x63xf32> to vector<2x1xf32>
    %120 = arith.negf %119 : vector<2x1xf32>
    %121 = math.exp %120 : vector<2x1xf32>
    %cst_68 = arith.constant 1.000000e+00 : f32
    %122 = vector.broadcast %cst_68 : f32 to vector<2x1xf32>
    %123 = arith.addf %122, %121 : vector<2x1xf32>
    %124 = arith.divf %122, %123 : vector<2x1xf32>
    %125 = arith.mulf %7, %7 : vector<2x16x8xf32>
    %cst_69 = arith.constant dense<0.000000e+00> : vector<2x16xf32>
    %126 = vector.multi_reduction <add>, %125, %cst_69 [2] : vector<2x16x8xf32> to vector<2x16xf32>
    %cst_70 = arith.constant 9.99999993E-9 : f32
    %127 = vector.broadcast %cst_70 : f32 to vector<2x16xf32>
    %128 = arith.addf %126, %127 : vector<2x16xf32>
    %129 = math.rsqrt %128 : vector<2x16xf32>
    %130 = vector.extract_strided_slice %112 {offsets = [0, 0], sizes = [2, 1], strides = [1, 1]} : vector<2x2xf32> to vector<2x1xf32>
    %131 = vector.extract_strided_slice %6 {offsets = [0, 0, 0], sizes = [1, 2, 16], strides = [1, 1, 1]} : vector<5x2x16xf32> to vector<1x2x16xf32>
    %132 = vector.shape_cast %131 : vector<1x2x16xf32> to vector<2x16xf32>
    %133 = vector.broadcast %130 : vector<2x1xf32> to vector<2x16xf32>
    %134 = arith.mulf %133, %132 : vector<2x16xf32>
    %cst_71 = arith.constant 1.000000e+00 : f32
    %135 = vector.broadcast %cst_71 : f32 to vector<2x16xf32>
    %136 = arith.subf %135, %134 : vector<2x16xf32>
    %137 = vector.extract_strided_slice %112 {offsets = [0, 1], sizes = [2, 1], strides = [1, 1]} : vector<2x2xf32> to vector<2x1xf32>
    %138 = vector.extract_strided_slice %6 {offsets = [1, 0, 0], sizes = [1, 2, 16], strides = [1, 1, 1]} : vector<5x2x16xf32> to vector<1x2x16xf32>
    %139 = vector.shape_cast %138 : vector<1x2x16xf32> to vector<2x16xf32>
    %140 = vector.broadcast %137 : vector<2x1xf32> to vector<2x16xf32>
    %141 = arith.mulf %140, %139 : vector<2x16xf32>
    %cst_72 = arith.constant 1.000000e+00 : f32
    %142 = vector.broadcast %cst_72 : f32 to vector<2x16xf32>
    %143 = arith.subf %142, %141 : vector<2x16xf32>
    %144 = arith.mulf %136, %143 : vector<2x16xf32>
    %145 = tpu.iota {dimensions = array<i32: 1>} : vector<16x16xi32>
    %146 = vector.shape_cast %145 : vector<16x16xi32> to vector<1x16x16xi32>
    %147 = tpu.iota {dimensions = array<i32: 0>} : vector<16x16xi32>
    %148 = vector.shape_cast %147 : vector<16x16xi32> to vector<1x16x16xi32>
    %149 = arith.cmpi sle, %146, %148 : vector<1x16x16xi32>
    %150 = arith.cmpi eq, %146, %148 : vector<1x16x16xi32>
    %151 = vector.extract_strided_slice %6 {offsets = [3, 0, 0], sizes = [1, 2, 16], strides = [1, 1, 1]} : vector<5x2x16xf32> to vector<1x2x16xf32>
    %152 = vector.shape_cast %151 : vector<1x2x16xf32> to vector<2x16xf32>
    %153 = vector.extract_strided_slice %6 {offsets = [2, 0, 0], sizes = [1, 2, 16], strides = [1, 1, 1]} : vector<5x2x16xf32> to vector<1x2x16xf32>
    %154 = vector.shape_cast %153 : vector<1x2x16xf32> to vector<2x16xf32>
    %155 = arith.addf %152, %154 : vector<2x16xf32>
    %156 = arith.mulf %152, %154 : vector<2x16xf32>
    %157 = arith.subf %155, %156 : vector<2x16xf32>
    %158 = arith.mulf %157, %144 : vector<2x16xf32>
    %c3_73 = arith.constant 3 : index
    %c0_74 = arith.constant 0 : index
    %c0_75 = arith.constant 0 : index
    %159 = vector.load %arg21[%c3_73, %c0_74, %c0_75] : memref<5x2x16xf32, #tpu.memory_space<vmem>>, vector<1x2x16xf32>
    %160 = vector.shape_cast %159 : vector<1x2x16xf32> to vector<2x16xf32>
    %161 = vector.shape_cast %158 : vector<2x16xf32> to vector<1x2x16xf32>
    tpu.vector_store %arg21[%c3_73, %c0_74, %c0_75], %161 {strides = array<i32>} : memref<5x2x16xf32, #tpu.memory_space<vmem>>, vector<1x2x16xf32>,
    %162 = vector.shape_cast %158 : vector<2x16xf32> to vector<2x16x1xf32>
    %163 = vector.shape_cast %158 : vector<2x16xf32> to vector<2x1x16xf32>
    %164 = vector.broadcast %163 : vector<2x1x16xf32> to vector<2x16x16xf32>
    %165 = vector.broadcast %162 : vector<2x16x1xf32> to vector<2x16x16xf32>
    %166 = arith.cmpf olt, %164, %165 : vector<2x16x16xf32>
    %167 = vector.broadcast %163 : vector<2x1x16xf32> to vector<2x16x16xf32>
    %168 = vector.broadcast %162 : vector<2x16x1xf32> to vector<2x16x16xf32>
    %169 = arith.cmpf oeq, %167, %168 : vector<2x16x16xf32>
    %170 = vector.broadcast %149 : vector<1x16x16xi1> to vector<2x16x16xi1>
    %171 = arith.andi %169, %170 : vector<2x16x16xi1>
    %172 = arith.ori %166, %171 : vector<2x16x16xi1>
    %cst_76 = arith.constant 1.000000e+00 : f32
    %173 = vector.shape_cast %163 : vector<2x1x16xf32> to vector<2x1x16xf32>
    %174 = vector.broadcast %173 : vector<2x1x16xf32> to vector<2x16x16xf32>
    %175 = vector.broadcast %cst_76 : f32 to vector<2x16x16xf32>
    %176 = arith.select %172, %174, %175 : vector<2x16x16xi1>, vector<2x16x16xf32>
    %177 = vector.extract_strided_slice %176 {offsets = [0, 0, 0], sizes = [2, 16, 8], strides = [1, 1, 1]} : vector<2x16x16xf32> to vector<2x16x8xf32>
    %178 = vector.extract_strided_slice %176 {offsets = [0, 0, 8], sizes = [2, 16, 8], strides = [1, 1, 1]} : vector<2x16x16xf32> to vector<2x16x8xf32>
    %179 = arith.mulf %177, %178 : vector<2x16x8xf32>
    %180 = vector.extract_strided_slice %179 {offsets = [0, 0, 0], sizes = [2, 16, 4], strides = [1, 1, 1]} : vector<2x16x8xf32> to vector<2x16x4xf32>
    %181 = vector.extract_strided_slice %179 {offsets = [0, 0, 4], sizes = [2, 16, 4], strides = [1, 1, 1]} : vector<2x16x8xf32> to vector<2x16x4xf32>
    %182 = arith.mulf %180, %181 : vector<2x16x4xf32>
    %183 = vector.extract_strided_slice %182 {offsets = [0, 0, 0], sizes = [2, 16, 2], strides = [1, 1, 1]} : vector<2x16x4xf32> to vector<2x16x2xf32>
    %184 = vector.extract_strided_slice %182 {offsets = [0, 0, 2], sizes = [2, 16, 2], strides = [1, 1, 1]} : vector<2x16x4xf32> to vector<2x16x2xf32>
    %185 = arith.mulf %183, %184 : vector<2x16x2xf32>
    %186 = vector.extract_strided_slice %185 {offsets = [0, 0, 0], sizes = [2, 16, 1], strides = [1, 1, 1]} : vector<2x16x2xf32> to vector<2x16x1xf32>
    %187 = vector.extract_strided_slice %185 {offsets = [0, 0, 1], sizes = [2, 16, 1], strides = [1, 1, 1]} : vector<2x16x2xf32> to vector<2x16x1xf32>
    %188 = arith.mulf %186, %187 : vector<2x16x1xf32>
    %189 = vector.shape_cast %188 : vector<2x16x1xf32> to vector<2x16xf32>
    %cst_77 = arith.constant 1.000000e+00 : f32
    %190 = vector.broadcast %cst_77 : f32 to vector<2x16xf32>
    %191 = arith.subf %190, %158 : vector<2x16xf32>
    %192 = arith.mulf %191, %189 : vector<2x16xf32>
    %193 = vector.extract_strided_slice %106 {offsets = [0, 26], sizes = [2, 8], strides = [1, 1]} : vector<2x63xf32> to vector<2x8xf32>
    %194 = vector.extract_strided_slice %106 {offsets = [0, 34], sizes = [2, 1], strides = [1, 1]} : vector<2x63xf32> to vector<2x1xf32>
    %cst_78 = arith.constant 0.000000e+00 : f32
    %195 = vector.broadcast %cst_78 : f32 to vector<2x1xf32>
    %196 = arith.maximumf %194, %195 : vector<2x1xf32>
    %197 = math.absf %194 : vector<2x1xf32>
    %cst_79 = arith.constant 0.000000e+00 : f32
    %198 = vector.broadcast %cst_79 : f32 to vector<2x1xf32>
    %199 = arith.subf %198, %197 : vector<2x1xf32>
    %200 = math.exp %199 : vector<2x1xf32>
    %cst_80 = arith.constant 1.000000e+00 : f32
    %201 = vector.broadcast %cst_80 : f32 to vector<2x1xf32>
    %202 = arith.addf %201, %200 : vector<2x1xf32>
    %203 = math.log %202 : vector<2x1xf32>
    %204 = arith.addf %196, %203 : vector<2x1xf32>
    %cst_81 = arith.constant 1.000000e+00 : f32
    %205 = vector.broadcast %cst_81 : f32 to vector<2x1xf32>
    %206 = arith.addf %205, %204 : vector<2x1xf32>
    %207 = vector.shape_cast %193 : vector<2x8xf32> to vector<2x1x8xf32>
    %208 = vector.broadcast %207 : vector<2x1x8xf32> to vector<2x16x8xf32>
    %209 = arith.mulf %208, %7 : vector<2x16x8xf32>
    %cst_82 = arith.constant dense<0.000000e+00> : vector<2x16xf32>
    %210 = vector.multi_reduction <add>, %209, %cst_82 [2] : vector<2x16x8xf32> to vector<2x16xf32>
    %211 = arith.mulf %193, %193 : vector<2x8xf32>
    %cst_83 = arith.constant dense<0.000000e+00> : vector<2xf32>
    %212 = vector.multi_reduction <add>, %211, %cst_83 [1] : vector<2x8xf32> to vector<2xf32>
    %213 = vector.shape_cast %212 : vector<2xf32> to vector<2x1xf32>
    %cst_84 = arith.constant 9.99999993E-9 : f32
    %214 = vector.broadcast %cst_84 : f32 to vector<2x1xf32>
    %215 = arith.addf %213, %214 : vector<2x1xf32>
    %216 = math.rsqrt %215 : vector<2x1xf32>
    %217 = vector.broadcast %216 : vector<2x1xf32> to vector<2x16xf32>
    %218 = arith.mulf %210, %217 : vector<2x16xf32>
    %219 = arith.mulf %218, %129 : vector<2x16xf32>
    %220 = vector.broadcast %206 : vector<2x1xf32> to vector<2x16xf32>
    %221 = arith.mulf %219, %220 : vector<2x16xf32>
    %cst_85 = arith.constant dense<0xFF800000> : vector<2xf32>
    %222 = vector.multi_reduction <maximumf>, %221, %cst_85 [1] : vector<2x16xf32> to vector<2xf32>
    %223 = vector.shape_cast %222 : vector<2xf32> to vector<2x1xf32>
    %224 = vector.broadcast %223 : vector<2x1xf32> to vector<2x16xf32>
    %225 = arith.subf %221, %224 : vector<2x16xf32>
    %226 = math.exp %225 : vector<2x16xf32>
    %cst_86 = arith.constant dense<0.000000e+00> : vector<2xf32>
    %227 = vector.multi_reduction <add>, %226, %cst_86 [1] : vector<2x16xf32> to vector<2xf32>
    %228 = vector.shape_cast %227 : vector<2xf32> to vector<2x1xf32>
    %229 = vector.broadcast %228 : vector<2x1xf32> to vector<2x16xf32>
    %230 = arith.divf %226, %229 : vector<2x16xf32>
    %231 = vector.broadcast %118 : vector<2x1xf32> to vector<2x16xf32>
    %232 = arith.mulf %231, %192 : vector<2x16xf32>
    %cst_87 = arith.constant 1.000000e+00 : f32
    %233 = vector.broadcast %cst_87 : f32 to vector<2x1xf32>
    %234 = arith.subf %233, %118 : vector<2x1xf32>
    %235 = vector.broadcast %234 : vector<2x1xf32> to vector<2x16xf32>
    %236 = arith.mulf %235, %230 : vector<2x16xf32>
    %237 = arith.addf %232, %236 : vector<2x16xf32>
    %238 = vector.broadcast %124 : vector<2x1xf32> to vector<2x16xf32>
    %239 = arith.mulf %238, %237 : vector<2x16xf32>
    %c2_88 = arith.constant 2 : index
    %c0_89 = arith.constant 0 : index
    %c0_90 = arith.constant 0 : index
    %240 = vector.load %arg21[%c2_88, %c0_89, %c0_90] : memref<5x2x16xf32, #tpu.memory_space<vmem>>, vector<1x2x16xf32>
    %241 = vector.shape_cast %240 : vector<1x2x16xf32> to vector<2x16xf32>
    %242 = vector.shape_cast %239 : vector<2x16xf32> to vector<1x2x16xf32>
    tpu.vector_store %arg21[%c2_88, %c0_89, %c0_90], %242 {strides = array<i32>} : memref<5x2x16xf32, #tpu.memory_space<vmem>>, vector<1x2x16xf32>,
    %243 = vector.extract_strided_slice %6 {offsets = [4, 0, 0], sizes = [1, 2, 16], strides = [1, 1, 1]} : vector<5x2x16xf32> to vector<1x2x16xf32>
    %244 = vector.shape_cast %243 : vector<1x2x16xf32> to vector<2x16xf32>
    %c0_91 = arith.constant 0 : index
    %c0_92 = arith.constant 0 : index
    %c0_93 = arith.constant 0 : index
    %c0_94 = arith.constant 0 : index
    %245 = vector.load %arg22[%c0_91, %c0_92, %c0_93, %c0_94] : memref<1x2x16x16xf32, #tpu.memory_space<vmem>>, vector<1x2x16x16xf32>
    %246 = vector.shape_cast %245 : vector<1x2x16x16xf32> to vector<2x16x16xf32>
    %247 = vector.shape_cast %239 : vector<2x16xf32> to vector<2x16x1xf32>
    %248 = vector.shape_cast %239 : vector<2x16xf32> to vector<2x1x16xf32>
    %cst_95 = arith.constant 1.000000e+00 : f32
    %249 = vector.broadcast %cst_95 : f32 to vector<2x16x1xf32>
    %250 = arith.subf %249, %247 : vector<2x16x1xf32>
    %251 = vector.broadcast %250 : vector<2x16x1xf32> to vector<2x16x16xf32>
    %252 = vector.broadcast %248 : vector<2x1x16xf32> to vector<2x16x16xf32>
    %253 = arith.subf %251, %252 : vector<2x16x16xf32>
    %254 = arith.mulf %253, %246 : vector<2x16x16xf32>
    %255 = vector.shape_cast %244 : vector<2x16xf32> to vector<2x1x16xf32>
    %256 = vector.broadcast %247 : vector<2x16x1xf32> to vector<2x16x16xf32>
    %257 = vector.broadcast %255 : vector<2x1x16xf32> to vector<2x16x16xf32>
    %258 = arith.mulf %256, %257 : vector<2x16x16xf32>
    %259 = arith.addf %254, %258 : vector<2x16x16xf32>
    %cst_96 = arith.constant 0.000000e+00 : f32
    %260 = vector.shape_cast %150 : vector<1x16x16xi1> to vector<1x16x16xi1>
    %261 = vector.broadcast %260 : vector<1x16x16xi1> to vector<2x16x16xi1>
    %262 = vector.broadcast %cst_96 : f32 to vector<2x16x16xf32>
    %263 = arith.select %261, %262, %259 : vector<2x16x16xi1>, vector<2x16x16xf32>
    %c0_97 = arith.constant 0 : index
    %c0_98 = arith.constant 0 : index
    %c0_99 = arith.constant 0 : index
    %c0_100 = arith.constant 0 : index
    %264 = vector.load %arg22[%c0_97, %c0_98, %c0_99, %c0_100] : memref<1x2x16x16xf32, #tpu.memory_space<vmem>>, vector<1x2x16x16xf32>
    %265 = vector.shape_cast %264 : vector<1x2x16x16xf32> to vector<2x16x16xf32>
    %266 = vector.shape_cast %263 : vector<2x16x16xf32> to vector<1x2x16x16xf32>
    tpu.vector_store %arg22[%c0_97, %c0_98, %c0_99, %c0_100], %266 {strides = array<i32>} : memref<1x2x16x16xf32, #tpu.memory_space<vmem>>, vector<1x2x16x16xf32>,
    %cst_101 = arith.constant dense<0.000000e+00> : vector<2xf32>
    %267 = vector.multi_reduction <add>, %239, %cst_101 [1] : vector<2x16xf32> to vector<2xf32>
    %268 = vector.shape_cast %267 : vector<2xf32> to vector<2x1xf32>
    %cst_102 = arith.constant 1.000000e+00 : f32
    %269 = vector.broadcast %cst_102 : f32 to vector<2x1xf32>
    %270 = arith.subf %269, %268 : vector<2x1xf32>
    %271 = vector.broadcast %270 : vector<2x1xf32> to vector<2x16xf32>
    %272 = arith.mulf %271, %244 : vector<2x16xf32>
    %273 = arith.addf %272, %239 : vector<2x16xf32>
    %c4 = arith.constant 4 : index
    %c0_103 = arith.constant 0 : index
    %c0_104 = arith.constant 0 : index
    %274 = vector.load %arg21[%c4, %c0_103, %c0_104] : memref<5x2x16xf32, #tpu.memory_space<vmem>>, vector<1x2x16xf32>
    %275 = vector.shape_cast %274 : vector<1x2x16xf32> to vector<2x16xf32>
    %276 = vector.shape_cast %273 : vector<2x16xf32> to vector<1x2x16xf32>
    tpu.vector_store %arg21[%c4, %c0_103, %c0_104], %276 {strides = array<i32>} : memref<5x2x16xf32, #tpu.memory_space<vmem>>, vector<1x2x16xf32>,
    %277 = vector.extract_strided_slice %106 {offsets = [0, 20], sizes = [2, 3], strides = [1, 1]} : vector<2x63xf32> to vector<2x3xf32>
    %cst_105 = arith.constant dense<0xFF800000> : vector<2xf32>
    %278 = vector.multi_reduction <maximumf>, %277, %cst_105 [1] : vector<2x3xf32> to vector<2xf32>
    %279 = vector.shape_cast %278 : vector<2xf32> to vector<2x1xf32>
    %280 = vector.broadcast %279 : vector<2x1xf32> to vector<2x3xf32>
    %281 = arith.subf %277, %280 : vector<2x3xf32>
    %282 = math.exp %281 : vector<2x3xf32>
    %cst_106 = arith.constant dense<0.000000e+00> : vector<2xf32>
    %283 = vector.multi_reduction <add>, %282, %cst_106 [1] : vector<2x3xf32> to vector<2xf32>
    %284 = vector.shape_cast %283 : vector<2xf32> to vector<2x1xf32>
    %285 = vector.broadcast %284 : vector<2x1xf32> to vector<2x3xf32>
    %286 = arith.divf %282, %285 : vector<2x3xf32>
    %287 = vector.extract_strided_slice %106 {offsets = [0, 35], sizes = [2, 8], strides = [1, 1]} : vector<2x63xf32> to vector<2x8xf32>
    %288 = vector.extract_strided_slice %106 {offsets = [0, 51], sizes = [2, 1], strides = [1, 1]} : vector<2x63xf32> to vector<2x1xf32>
    %cst_107 = arith.constant 0.000000e+00 : f32
    %289 = vector.broadcast %cst_107 : f32 to vector<2x1xf32>
    %290 = arith.maximumf %288, %289 : vector<2x1xf32>
    %291 = math.absf %288 : vector<2x1xf32>
    %cst_108 = arith.constant 0.000000e+00 : f32
    %292 = vector.broadcast %cst_108 : f32 to vector<2x1xf32>
    %293 = arith.subf %292, %291 : vector<2x1xf32>
    %294 = math.exp %293 : vector<2x1xf32>
    %cst_109 = arith.constant 1.000000e+00 : f32
    %295 = vector.broadcast %cst_109 : f32 to vector<2x1xf32>
    %296 = arith.addf %295, %294 : vector<2x1xf32>
    %297 = math.log %296 : vector<2x1xf32>
    %298 = arith.addf %290, %297 : vector<2x1xf32>
    %cst_110 = arith.constant 1.000000e+00 : f32
    %299 = vector.broadcast %cst_110 : f32 to vector<2x1xf32>
    %300 = arith.addf %299, %298 : vector<2x1xf32>
    %301 = vector.shape_cast %287 : vector<2x8xf32> to vector<2x1x8xf32>
    %302 = vector.broadcast %301 : vector<2x1x8xf32> to vector<2x16x8xf32>
    %303 = arith.mulf %302, %7 : vector<2x16x8xf32>
    %cst_111 = arith.constant dense<0.000000e+00> : vector<2x16xf32>
    %304 = vector.multi_reduction <add>, %303, %cst_111 [2] : vector<2x16x8xf32> to vector<2x16xf32>
    %305 = arith.mulf %287, %287 : vector<2x8xf32>
    %cst_112 = arith.constant dense<0.000000e+00> : vector<2xf32>
    %306 = vector.multi_reduction <add>, %305, %cst_112 [1] : vector<2x8xf32> to vector<2xf32>
    %307 = vector.shape_cast %306 : vector<2xf32> to vector<2x1xf32>
    %cst_113 = arith.constant 9.99999993E-9 : f32
    %308 = vector.broadcast %cst_113 : f32 to vector<2x1xf32>
    %309 = arith.addf %307, %308 : vector<2x1xf32>
    %310 = math.rsqrt %309 : vector<2x1xf32>
    %311 = vector.broadcast %310 : vector<2x1xf32> to vector<2x16xf32>
    %312 = arith.mulf %304, %311 : vector<2x16xf32>
    %313 = arith.mulf %312, %129 : vector<2x16xf32>
    %314 = vector.broadcast %300 : vector<2x1xf32> to vector<2x16xf32>
    %315 = arith.mulf %313, %314 : vector<2x16xf32>
    %cst_114 = arith.constant dense<0xFF800000> : vector<2xf32>
    %316 = vector.multi_reduction <maximumf>, %315, %cst_114 [1] : vector<2x16xf32> to vector<2xf32>
    %317 = vector.shape_cast %316 : vector<2xf32> to vector<2x1xf32>
    %318 = vector.broadcast %317 : vector<2x1xf32> to vector<2x16xf32>
    %319 = arith.subf %315, %318 : vector<2x16xf32>
    %320 = math.exp %319 : vector<2x16xf32>
    %cst_115 = arith.constant dense<0.000000e+00> : vector<2xf32>
    %321 = vector.multi_reduction <add>, %320, %cst_115 [1] : vector<2x16xf32> to vector<2xf32>
    %322 = vector.shape_cast %321 : vector<2xf32> to vector<2x1xf32>
    %323 = vector.broadcast %322 : vector<2x1xf32> to vector<2x16xf32>
    %324 = arith.divf %320, %323 : vector<2x16xf32>
    %325 = vector.extract_strided_slice %6 {offsets = [0, 0, 0], sizes = [1, 2, 16], strides = [1, 1, 1]} : vector<5x2x16xf32> to vector<1x2x16xf32>
    %326 = vector.shape_cast %325 : vector<1x2x16xf32> to vector<2x16xf32>
    %327 = vector.extract_strided_slice %286 {offsets = [0, 1], sizes = [2, 1], strides = [1, 1]} : vector<2x3xf32> to vector<2x1xf32>
    %328 = vector.broadcast %327 : vector<2x1xf32> to vector<2x16xf32>
    %329 = arith.mulf %328, %324 : vector<2x16xf32>
    %330 = vector.shape_cast %326 : vector<2x16xf32> to vector<2x1x16xf32>
    %331 = vector.broadcast %330 : vector<2x1x16xf32> to vector<2x16x16xf32>
    %332 = arith.mulf %331, %263 : vector<2x16x16xf32>
    %cst_116 = arith.constant dense<0.000000e+00> : vector<2x16xf32>
    %333 = vector.multi_reduction <add>, %332, %cst_116 [2] : vector<2x16x16xf32> to vector<2x16xf32>
    %334 = vector.shape_cast %326 : vector<2x16xf32> to vector<2x16x1xf32>
    %335 = vector.broadcast %334 : vector<2x16x1xf32> to vector<2x16x16xf32>
    %336 = arith.mulf %335, %263 : vector<2x16x16xf32>
    %cst_117 = arith.constant dense<0.000000e+00> : vector<2x16xf32>
    %337 = vector.multi_reduction <add>, %336, %cst_117 [1] : vector<2x16x16xf32> to vector<2x16xf32>
    %338 = vector.extract_strided_slice %286 {offsets = [0, 0], sizes = [2, 1], strides = [1, 1]} : vector<2x3xf32> to vector<2x1xf32>
    %339 = vector.broadcast %338 : vector<2x1xf32> to vector<2x16xf32>
    %340 = arith.mulf %339, %337 : vector<2x16xf32>
    %341 = arith.addf %329, %340 : vector<2x16xf32>
    %342 = vector.extract_strided_slice %286 {offsets = [0, 2], sizes = [2, 1], strides = [1, 1]} : vector<2x3xf32> to vector<2x1xf32>
    %343 = vector.broadcast %342 : vector<2x1xf32> to vector<2x16xf32>
    %344 = arith.mulf %343, %333 : vector<2x16xf32>
    %345 = arith.addf %341, %344 : vector<2x16xf32>
    %c0_118 = arith.constant 0 : index
    %c0_119 = arith.constant 0 : index
    %c0_120 = arith.constant 0 : index
    %346 = vector.load %arg21[%c0_118, %c0_119, %c0_120] : memref<5x2x16xf32, #tpu.memory_space<vmem>>, vector<1x2x16xf32>
    %347 = vector.shape_cast %346 : vector<1x2x16xf32> to vector<2x16xf32>
    %348 = vector.shape_cast %345 : vector<2x16xf32> to vector<1x2x16xf32>
    tpu.vector_store %arg21[%c0_118, %c0_119, %c0_120], %348 {strides = array<i32>} : memref<5x2x16xf32, #tpu.memory_space<vmem>>, vector<1x2x16xf32>,
    %349 = vector.shape_cast %345 : vector<2x16xf32> to vector<2x16x1xf32>
    %350 = vector.broadcast %349 : vector<2x16x1xf32> to vector<2x16x8xf32>
    %351 = arith.mulf %350, %7 : vector<2x16x8xf32>
    %cst_121 = arith.constant dense<0.000000e+00> : vector<2x8xf32>
    %352 = vector.multi_reduction <add>, %351, %cst_121 [1] : vector<2x16x8xf32> to vector<2x8xf32>
    %c0_122 = arith.constant 0 : index
    %c0_123 = arith.constant 0 : index
    %353 = vector.load %arg19[%c0_122, %c0_123] : memref<2x16xf32, #tpu.memory_space<vmem>>, vector<2x8xf32>
    tpu.vector_store %arg19[%c0_122, %c0_123], %352 {strides = array<i32>} : memref<2x16xf32, #tpu.memory_space<vmem>>, vector<2x8xf32>,
    %354 = vector.extract_strided_slice %106 {offsets = [0, 23], sizes = [2, 3], strides = [1, 1]} : vector<2x63xf32> to vector<2x3xf32>
    %cst_124 = arith.constant dense<0xFF800000> : vector<2xf32>
    %355 = vector.multi_reduction <maximumf>, %354, %cst_124 [1] : vector<2x3xf32> to vector<2xf32>
    %356 = vector.shape_cast %355 : vector<2xf32> to vector<2x1xf32>
    %357 = vector.broadcast %356 : vector<2x1xf32> to vector<2x3xf32>
    %358 = arith.subf %354, %357 : vector<2x3xf32>
    %359 = math.exp %358 : vector<2x3xf32>
    %cst_125 = arith.constant dense<0.000000e+00> : vector<2xf32>
    %360 = vector.multi_reduction <add>, %359, %cst_125 [1] : vector<2x3xf32> to vector<2xf32>
    %361 = vector.shape_cast %360 : vector<2xf32> to vector<2x1xf32>
    %362 = vector.broadcast %361 : vector<2x1xf32> to vector<2x3xf32>
    %363 = arith.divf %359, %362 : vector<2x3xf32>
    %364 = vector.extract_strided_slice %106 {offsets = [0, 43], sizes = [2, 8], strides = [1, 1]} : vector<2x63xf32> to vector<2x8xf32>
    %365 = vector.extract_strided_slice %106 {offsets = [0, 52], sizes = [2, 1], strides = [1, 1]} : vector<2x63xf32> to vector<2x1xf32>
    %cst_126 = arith.constant 0.000000e+00 : f32
    %366 = vector.broadcast %cst_126 : f32 to vector<2x1xf32>
    %367 = arith.maximumf %365, %366 : vector<2x1xf32>
    %368 = math.absf %365 : vector<2x1xf32>
    %cst_127 = arith.constant 0.000000e+00 : f32
    %369 = vector.broadcast %cst_127 : f32 to vector<2x1xf32>
    %370 = arith.subf %369, %368 : vector<2x1xf32>
    %371 = math.exp %370 : vector<2x1xf32>
    %cst_128 = arith.constant 1.000000e+00 : f32
    %372 = vector.broadcast %cst_128 : f32 to vector<2x1xf32>
    %373 = arith.addf %372, %371 : vector<2x1xf32>
    %374 = math.log %373 : vector<2x1xf32>
    %375 = arith.addf %367, %374 : vector<2x1xf32>
    %cst_129 = arith.constant 1.000000e+00 : f32
    %376 = vector.broadcast %cst_129 : f32 to vector<2x1xf32>
    %377 = arith.addf %376, %375 : vector<2x1xf32>
    %378 = vector.shape_cast %364 : vector<2x8xf32> to vector<2x1x8xf32>
    %379 = vector.broadcast %378 : vector<2x1x8xf32> to vector<2x16x8xf32>
    %380 = arith.mulf %379, %7 : vector<2x16x8xf32>
    %cst_130 = arith.constant dense<0.000000e+00> : vector<2x16xf32>
    %381 = vector.multi_reduction <add>, %380, %cst_130 [2] : vector<2x16x8xf32> to vector<2x16xf32>
    %382 = arith.mulf %364, %364 : vector<2x8xf32>
    %cst_131 = arith.constant dense<0.000000e+00> : vector<2xf32>
    %383 = vector.multi_reduction <add>, %382, %cst_131 [1] : vector<2x8xf32> to vector<2xf32>
    %384 = vector.shape_cast %383 : vector<2xf32> to vector<2x1xf32>
    %cst_132 = arith.constant 9.99999993E-9 : f32
    %385 = vector.broadcast %cst_132 : f32 to vector<2x1xf32>
    %386 = arith.addf %384, %385 : vector<2x1xf32>
    %387 = math.rsqrt %386 : vector<2x1xf32>
    %388 = vector.broadcast %387 : vector<2x1xf32> to vector<2x16xf32>
    %389 = arith.mulf %381, %388 : vector<2x16xf32>
    %390 = arith.mulf %389, %129 : vector<2x16xf32>
    %391 = vector.broadcast %377 : vector<2x1xf32> to vector<2x16xf32>
    %392 = arith.mulf %390, %391 : vector<2x16xf32>
    %cst_133 = arith.constant dense<0xFF800000> : vector<2xf32>
    %393 = vector.multi_reduction <maximumf>, %392, %cst_133 [1] : vector<2x16xf32> to vector<2xf32>
    %394 = vector.shape_cast %393 : vector<2xf32> to vector<2x1xf32>
    %395 = vector.broadcast %394 : vector<2x1xf32> to vector<2x16xf32>
    %396 = arith.subf %392, %395 : vector<2x16xf32>
    %397 = math.exp %396 : vector<2x16xf32>
    %cst_134 = arith.constant dense<0.000000e+00> : vector<2xf32>
    %398 = vector.multi_reduction <add>, %397, %cst_134 [1] : vector<2x16xf32> to vector<2xf32>
    %399 = vector.shape_cast %398 : vector<2xf32> to vector<2x1xf32>
    %400 = vector.broadcast %399 : vector<2x1xf32> to vector<2x16xf32>
    %401 = arith.divf %397, %400 : vector<2x16xf32>
    %402 = vector.extract_strided_slice %6 {offsets = [1, 0, 0], sizes = [1, 2, 16], strides = [1, 1, 1]} : vector<5x2x16xf32> to vector<1x2x16xf32>
    %403 = vector.shape_cast %402 : vector<1x2x16xf32> to vector<2x16xf32>
    %404 = vector.extract_strided_slice %363 {offsets = [0, 1], sizes = [2, 1], strides = [1, 1]} : vector<2x3xf32> to vector<2x1xf32>
    %405 = vector.broadcast %404 : vector<2x1xf32> to vector<2x16xf32>
    %406 = arith.mulf %405, %401 : vector<2x16xf32>
    %407 = vector.shape_cast %403 : vector<2x16xf32> to vector<2x1x16xf32>
    %408 = vector.broadcast %407 : vector<2x1x16xf32> to vector<2x16x16xf32>
    %409 = arith.mulf %408, %263 : vector<2x16x16xf32>
    %cst_135 = arith.constant dense<0.000000e+00> : vector<2x16xf32>
    %410 = vector.multi_reduction <add>, %409, %cst_135 [2] : vector<2x16x16xf32> to vector<2x16xf32>
    %411 = vector.shape_cast %403 : vector<2x16xf32> to vector<2x16x1xf32>
    %412 = vector.broadcast %411 : vector<2x16x1xf32> to vector<2x16x16xf32>
    %413 = arith.mulf %412, %263 : vector<2x16x16xf32>
    %cst_136 = arith.constant dense<0.000000e+00> : vector<2x16xf32>
    %414 = vector.multi_reduction <add>, %413, %cst_136 [1] : vector<2x16x16xf32> to vector<2x16xf32>
    %415 = vector.extract_strided_slice %363 {offsets = [0, 0], sizes = [2, 1], strides = [1, 1]} : vector<2x3xf32> to vector<2x1xf32>
    %416 = vector.broadcast %415 : vector<2x1xf32> to vector<2x16xf32>
    %417 = arith.mulf %416, %414 : vector<2x16xf32>
    %418 = arith.addf %406, %417 : vector<2x16xf32>
    %419 = vector.extract_strided_slice %363 {offsets = [0, 2], sizes = [2, 1], strides = [1, 1]} : vector<2x3xf32> to vector<2x1xf32>
    %420 = vector.broadcast %419 : vector<2x1xf32> to vector<2x16xf32>
    %421 = arith.mulf %420, %410 : vector<2x16xf32>
    %422 = arith.addf %418, %421 : vector<2x16xf32>
    %c1_137 = arith.constant 1 : index
    %c0_138 = arith.constant 0 : index
    %c0_139 = arith.constant 0 : index
    %423 = vector.load %arg21[%c1_137, %c0_138, %c0_139] : memref<5x2x16xf32, #tpu.memory_space<vmem>>, vector<1x2x16xf32>
    %424 = vector.shape_cast %423 : vector<1x2x16xf32> to vector<2x16xf32>
    %425 = vector.shape_cast %422 : vector<2x16xf32> to vector<1x2x16xf32>
    tpu.vector_store %arg21[%c1_137, %c0_138, %c0_139], %425 {strides = array<i32>} : memref<5x2x16xf32, #tpu.memory_space<vmem>>, vector<1x2x16xf32>,
    %426 = vector.shape_cast %422 : vector<2x16xf32> to vector<2x16x1xf32>
    %427 = vector.broadcast %426 : vector<2x16x1xf32> to vector<2x16x8xf32>
    %428 = arith.mulf %427, %7 : vector<2x16x8xf32>
    %cst_140 = arith.constant dense<0.000000e+00> : vector<2x8xf32>
    %429 = vector.multi_reduction <add>, %428, %cst_140 [1] : vector<2x16x8xf32> to vector<2x8xf32>
    %c0_141 = arith.constant 0 : index
    %c8 = arith.constant 8 : index
    %430 = vector.load %arg19[%c0_141, %c8] : memref<2x16xf32, #tpu.memory_space<vmem>>, vector<2x8xf32>
    tpu.vector_store %arg19[%c0_141, %c8], %429 {strides = array<i32>} : memref<2x16xf32, #tpu.memory_space<vmem>>, vector<2x8xf32>,
    %c0_142 = arith.constant 0 : index
    %c0_143 = arith.constant 0 : index
    %431 = vector.load %arg19[%c0_142, %c0_143] : memref<2x16xf32, #tpu.memory_space<vmem>>, vector<2x16xf32>
    %432 = vector.extract_strided_slice %106 {offsets = [0, 53], sizes = [2, 10], strides = [1, 1]} : vector<2x63xf32> to vector<2x10xf32>
    %c0_144 = arith.constant 0 : index
    %c0_145 = arith.constant 0 : index
    %433 = vector.load %arg12[%c0_144, %c0_145] : memref<16x10xf32, #tpu.memory_space<vmem>>, vector<16x10xf32>
    %cst_146 = arith.constant dense<0.000000e+00> : vector<2x10xf32>
    %434 = tpu.matmul %431, %433, %cst_146 {dimension_numbers = #tpu.dot_dimension_numbers<[1], [0], [0], [1], [0, 0, 1, 1], [], []>} : vector<2x16xf32>, vector<16x10xf32>, vector<2x10xf32> -> vector<2x10xf32>
    %435 = arith.addf %432, %434 : vector<2x10xf32>
    %c0_147 = arith.constant 0 : index
    %c0_148 = arith.constant 0 : index
    %c0_149 = arith.constant 0 : index
    %436 = vector.load %arg14[%c0_147, %c0_148, %c0_149] : memref<1x2x10xf32, #tpu.memory_space<vmem>>, vector<1x2x10xf32>
    %437 = vector.shape_cast %436 : vector<1x2x10xf32> to vector<2x10xf32>
    %438 = vector.shape_cast %435 : vector<2x10xf32> to vector<1x2x10xf32>
    tpu.vector_store %arg14[%c0_147, %c0_148, %c0_149], %438 {strides = array<i32>} : memref<1x2x10xf32, #tpu.memory_space<vmem>>, vector<1x2x10xf32>,
    %c7_i32 = arith.constant 7 : i32
    %439 = arith.cmpi eq, %arg0, %c7_i32 : i32
    %440 = arith.extui %439 : i1 to i32
    %c0_i32_150 = arith.constant 0 : i32
    %441 = arith.cmpi ne, %440, %c0_i32_150 : i32
    scf.if %441 {
      %c0_151 = arith.constant 0 : index
      %c0_152 = arith.constant 0 : index
      %442 = vector.load %arg19[%c0_151, %c0_152] : memref<2x16xf32, #tpu.memory_space<vmem>>, vector<2x16xf32>
      %c0_153 = arith.constant 0 : index
      %c0_154 = arith.constant 0 : index
      %443 = vector.load %arg15[%c0_153, %c0_154] : memref<2x16xf32, #tpu.memory_space<vmem>>, vector<2x16xf32>
      tpu.vector_store %arg15[%c0_153, %c0_154], %442 {strides = array<i32>} : memref<2x16xf32, #tpu.memory_space<vmem>>, vector<2x16xf32>,
      %c0_155 = arith.constant 0 : index
      %c0_156 = arith.constant 0 : index
      %c0_157 = arith.constant 0 : index
      %444 = vector.load %arg20[%c0_155, %c0_156, %c0_157] : memref<4x2x32xf32, #tpu.memory_space<vmem>>, vector<4x2x32xf32>
      %c0_158 = arith.constant 0 : index
      %c0_159 = arith.constant 0 : index
      %c0_160 = arith.constant 0 : index
      %445 = vector.load %arg16[%c0_158, %c0_159, %c0_160] : memref<4x2x32xf32, #tpu.memory_space<vmem>>, vector<4x2x32xf32>
      tpu.vector_store %arg16[%c0_158, %c0_159, %c0_160], %444 {strides = array<i32>} : memref<4x2x32xf32, #tpu.memory_space<vmem>>, vector<4x2x32xf32>,
      %c0_161 = arith.constant 0 : index
      %c0_162 = arith.constant 0 : index
      %c0_163 = arith.constant 0 : index
      %446 = vector.load %arg21[%c0_161, %c0_162, %c0_163] : memref<5x2x16xf32, #tpu.memory_space<vmem>>, vector<5x2x16xf32>
      %c0_164 = arith.constant 0 : index
      %c0_165 = arith.constant 0 : index
      %c0_166 = arith.constant 0 : index
      %447 = vector.load %arg17[%c0_164, %c0_165, %c0_166] : memref<5x2x16xf32, #tpu.memory_space<vmem>>, vector<5x2x16xf32>
      tpu.vector_store %arg17[%c0_164, %c0_165, %c0_166], %446 {strides = array<i32>} : memref<5x2x16xf32, #tpu.memory_space<vmem>>, vector<5x2x16xf32>,
      %c0_167 = arith.constant 0 : index
      %c0_168 = arith.constant 0 : index
      %c0_169 = arith.constant 0 : index
      %c0_170 = arith.constant 0 : index
      %448 = vector.load %arg22[%c0_167, %c0_168, %c0_169, %c0_170] : memref<1x2x16x16xf32, #tpu.memory_space<vmem>>, vector<1x2x16x16xf32>
      %c0_171 = arith.constant 0 : index
      %c0_172 = arith.constant 0 : index
      %c0_173 = arith.constant 0 : index
      %c0_174 = arith.constant 0 : index
      %449 = vector.load %arg18[%c0_171, %c0_172, %c0_173, %c0_174] : memref<1x2x16x16xf32, #tpu.memory_space<vmem>>, vector<1x2x16x16xf32>
      tpu.vector_store %arg18[%c0_171, %c0_172, %c0_173, %c0_174], %448 {strides = array<i32>} : memref<1x2x16x16xf32, #tpu.memory_space<vmem>>, vector<1x2x16x16xf32>,
    } else {
    }
    return
  }
  func.func @transform_0(%arg0: i32) -> (i32, i32, i32) {
    %c0_i32 = arith.constant 0 : i32
    %c0_i32_0 = arith.constant 0 : i32
    %c0_i32_1 = arith.constant 0 : i32
    return %arg0, %c0_i32, %c0_i32_0 : i32, i32, i32
  }
  func.func @transform_1(%arg0: i32) -> (i32, i32) {
    %c0_i32 = arith.constant 0 : i32
    %c0_i32_0 = arith.constant 0 : i32
    %c0_i32_1 = arith.constant 0 : i32
    return %c0_i32, %c0_i32_0 : i32, i32
  }
  func.func @transform_2(%arg0: i32) -> (i32, i32, i32) {
    %c0_i32 = arith.constant 0 : i32
    %c0_i32_0 = arith.constant 0 : i32
    %c0_i32_1 = arith.constant 0 : i32
    %c0_i32_2 = arith.constant 0 : i32
    return %c0_i32, %c0_i32_0, %c0_i32_1 : i32, i32, i32
  }
  func.func @transform_3(%arg0: i32) -> (i32, i32, i32) {
    %c0_i32 = arith.constant 0 : i32
    %c0_i32_0 = arith.constant 0 : i32
    %c0_i32_1 = arith.constant 0 : i32
    %c0_i32_2 = arith.constant 0 : i32
    return %c0_i32, %c0_i32_0, %c0_i32_1 : i32, i32, i32
  }
  func.func @transform_4(%arg0: i32) -> (i32, i32, i32, i32) {
    %c0_i32 = arith.constant 0 : i32
    %c0_i32_0 = arith.constant 0 : i32
    %c0_i32_1 = arith.constant 0 : i32
    %c0_i32_2 = arith.constant 0 : i32
    %c0_i32_3 = arith.constant 0 : i32
    return %c0_i32, %c0_i32_0, %c0_i32_1, %c0_i32_2 : i32, i32, i32, i32
  }
  func.func @transform_5(%arg0: i32) -> (i32, i32) {
    %c0_i32 = arith.constant 0 : i32
    %c0_i32_0 = arith.constant 0 : i32
    %c0_i32_1 = arith.constant 0 : i32
    return %c0_i32, %c0_i32_0 : i32, i32
  }
  func.func @transform_6(%arg0: i32) -> (i32, i32) {
    %c0_i32 = arith.constant 0 : i32
    %c0_i32_0 = arith.constant 0 : i32
    %c0_i32_1 = arith.constant 0 : i32
    return %c0_i32, %c0_i32_0 : i32, i32
  }
  func.func @transform_7(%arg0: i32) -> (i32, i32, i32) {
    %c0_i32 = arith.constant 0 : i32
    %c0_i32_0 = arith.constant 0 : i32
    %c0_i32_1 = arith.constant 0 : i32
    %c0_i32_2 = arith.constant 0 : i32
    return %c0_i32, %c0_i32_0, %c0_i32_1 : i32, i32, i32
  }
  func.func @transform_8(%arg0: i32) -> (i32, i32, i32) {
    %c0_i32 = arith.constant 0 : i32
    %c0_i32_0 = arith.constant 0 : i32
    %c0_i32_1 = arith.constant 0 : i32
    %c0_i32_2 = arith.constant 0 : i32
    return %c0_i32, %c0_i32_0, %c0_i32_1 : i32, i32, i32
  }
  func.func @transform_9(%arg0: i32) -> (i32, i32) {
    %c0_i32 = arith.constant 0 : i32
    %c0_i32_0 = arith.constant 0 : i32
    %c0_i32_1 = arith.constant 0 : i32
    return %c0_i32, %c0_i32_0 : i32, i32
  }
  func.func @transform_10(%arg0: i32) -> (i32, i32) {
    %c0_i32 = arith.constant 0 : i32
    %c0_i32_0 = arith.constant 0 : i32
    %c0_i32_1 = arith.constant 0 : i32
    return %c0_i32, %c0_i32_0 : i32, i32
  }
  func.func @transform_11(%arg0: i32) -> (i32, i32) {
    %c0_i32 = arith.constant 0 : i32
    %c0_i32_0 = arith.constant 0 : i32
    %c0_i32_1 = arith.constant 0 : i32
    return %c0_i32, %c0_i32_0 : i32, i32
  }
  func.func @transform_12(%arg0: i32) -> (i32, i32, i32) {
    %c0_i32 = arith.constant 0 : i32
    %c0_i32_0 = arith.constant 0 : i32
    %c0_i32_1 = arith.constant 0 : i32
    %c0_i32_2 = arith.constant 0 : i32
    return %c0_i32, %c0_i32_0, %c0_i32_1 : i32, i32, i32
  }
  func.func @transform_13(%arg0: i32) -> (i32, i32, i32) {
    %c0_i32 = arith.constant 0 : i32
    %c0_i32_0 = arith.constant 0 : i32
    %c0_i32_1 = arith.constant 0 : i32
    return %arg0, %c0_i32, %c0_i32_0 : i32, i32, i32
  }
  func.func @transform_14(%arg0: i32) -> (i32, i32) {
    %c0_i32 = arith.constant 0 : i32
    %c0_i32_0 = arith.constant 0 : i32
    %c0_i32_1 = arith.constant 0 : i32
    return %c0_i32, %c0_i32_0 : i32, i32
  }
  func.func @transform_15(%arg0: i32) -> (i32, i32, i32) {
    %c0_i32 = arith.constant 0 : i32
    %c0_i32_0 = arith.constant 0 : i32
    %c0_i32_1 = arith.constant 0 : i32
    %c0_i32_2 = arith.constant 0 : i32
    return %c0_i32, %c0_i32_0, %c0_i32_1 : i32, i32, i32
  }
  func.func @transform_16(%arg0: i32) -> (i32, i32, i32) {
    %c0_i32 = arith.constant 0 : i32
    %c0_i32_0 = arith.constant 0 : i32
    %c0_i32_1 = arith.constant 0 : i32
    %c0_i32_2 = arith.constant 0 : i32
    return %c0_i32, %c0_i32_0, %c0_i32_1 : i32, i32, i32
  }
  func.func @transform_17(%arg0: i32) -> (i32, i32, i32, i32) {
    %c0_i32 = arith.constant 0 : i32
    %c0_i32_0 = arith.constant 0 : i32
    %c0_i32_1 = arith.constant 0 : i32
    %c0_i32_2 = arith.constant 0 : i32
    %c0_i32_3 = arith.constant 0 : i32
    return %c0_i32, %c0_i32_0, %c0_i32_1, %c0_i32_2 : i32, i32, i32, i32
  }
}

</mosaic_0001>

<llo_original>
// kernel: processor_forward_seq.1
$region0: #{processor_forward_seq.1}
  #allocation0 [shape = 'u32[]', space=smem, size = 0x4, offset = 0x4, fixed_abs, tag = 'smem constant byte address 0x4 - core index']
  #allocation1 [shape = 'u32[144,128]{1,0:T(1,128)}', space=vmem, size = 0x12000, scoped, tag = 'internal scratch']
  #allocation2 [shape = 'f32[2,16]{1,0:T(2,128)}', space=vmem, size = 0x400, scoped, tag = 'scratch operand']
  #allocation3 [shape = 'f32[4,2,32]{2,1,0:T(2,128)}', space=vmem, size = 0x1000, scoped, tag = 'scratch operand']
  #allocation4 [shape = 'f32[5,2,16]{2,1,0:T(2,128)}', space=vmem, size = 0x1400, scoped, tag = 'scratch operand']
  #allocation5 [shape = 'f32[1,2,16,16]{3,2,1,0:T(8,128)}', space=vmem, size = 0x4000, scoped, tag = 'scratch operand']
  %s0 = inlined_call_operand.vmem [shape: f32[8,2,8], index: 0, kind: input, shape index: {}]
  %s1 = inlined_call_operand.hbm [shape: f32[2,16], index: 1, kind: input, shape index: {}]
  %s2 = inlined_call_operand.vmem [shape: f32[4,2,32], index: 2, kind: input, shape index: {}]
  %s3 = inlined_call_operand.vmem [shape: f32[5,2,16], index: 3, kind: input, shape index: {}]
  %s4 = inlined_call_operand.vmem [shape: f32[1,2,16,16], index: 4, kind: input, shape index: {}]
  %s5 = inlined_call_operand.hbm [shape: f32[8,128], index: 5, kind: input, shape index: {}]
  %s6 = inlined_call_operand.hbm [shape: f32[16,128], index: 6, kind: input, shape index: {}]
  %s7 = inlined_call_operand.hbm [shape: f32[3,32,128], index: 7, kind: input, shape index: {}]
  %s8 = inlined_call_operand.hbm [shape: f32[2,1,128], index: 8, kind: input, shape index: {}]
  %s9 = inlined_call_operand.hbm [shape: f32[32,63], index: 9, kind: input, shape index: {}]
  %s10 = inlined_call_operand.hbm [shape: f32[1,63], index: 10, kind: input, shape index: {}]
  %s11 = inlined_call_operand.hbm [shape: f32[16,10], index: 11, kind: input, shape index: {}]
  %s12 = inlined_call_operand.vmem [shape: f32[2,16,8], index: 12, kind: input, shape index: {}]
  %s13 = inlined_call_operand.hbm [shape: f32[8,2,10], index: 13, kind: output, shape index: {0}]
  %s14 = inlined_call_operand.hbm [shape: f32[2,16], index: 14, kind: output, shape index: {1}]
  %s15 = inlined_call_operand.hbm [shape: f32[4,2,32], index: 15, kind: output, shape index: {2}]
  %s16 = inlined_call_operand.hbm [shape: f32[5,2,16], index: 16, kind: output, shape index: {3}]
  %s17 = inlined_call_operand.hbm [shape: f32[1,2,16,16], index: 17, kind: output, shape index: {4}]
  %18 = xla_tuple %s13, %s14, %s15, %s16, %s17
  %s19 = sld [smem:[#allocation0]]
  $region157: #{processor_forward_seq.1} parent=0
    _
  %s21 = ssub.s32 1, %s19
  %s22 = scalar_select 0, %s21, %s19
  $region1: #{processor_forward_seq.1} parent=0
    #allocation6 [shape = 'u8[1024]{0}', space=vmem, size = 0x400, scoped, tag = 'input window, operand 1, single buffered']
    #allocation7 [shape = 's32[2]{0}', space=sflag, size = 0x8, scoped, tag = 'scoped memory for processor_forward_seq.1']
    #allocation8 [shape = 's32[2]{0}', space=sflag, size = 0x8, scoped, tag = 'scoped memory for processor_forward_seq.1']
    #allocation9 [shape = 'u8[4096]{0}', space=vmem, size = 0x1000, scoped, tag = 'input window, operand 5, single buffered']
    #allocation10 [shape = 's32[1]{0}', space=sflag, size = 0x4, scoped, tag = 'scoped memory for processor_forward_seq.1']
    #allocation11 [shape = 'u8[8192]{0}', space=vmem, size = 0x2000, scoped, tag = 'input window, operand 6, single buffered']
    #allocation12 [shape = 'u8[49152]{0}', space=vmem, size = 0xc000, scoped, tag = 'input window, operand 7, single buffered']
    #allocation13 [shape = 's32[1]{0}', space=sflag, size = 0x4, scoped, tag = 'scoped memory for processor_forward_seq.1']
    #allocation14 [shape = 'u8[1024]{0}', space=vmem, size = 0x400, scoped, tag = 'input window, operand 8, single buffered']
    #allocation15 [shape = 'u8[16384]{0}', space=vmem, size = 0x4000, scoped, tag = 'input window, operand 9, single buffered']
    #allocation16 [shape = 's32[1]{0}', space=sflag, size = 0x4, scoped, tag = 'scoped memory for processor_forward_seq.1']
    #allocation17 [shape = 'u8[512]{0}', space=vmem, size = 0x400, scoped, tag = 'input window, operand 10, single buffered']
    #allocation18 [shape = 'u8[8192]{0}', space=vmem, size = 0x2000, scoped, tag = 'input window, operand 11, single buffered']
    #allocation19 [shape = 's32[1]{0}', space=sflag, size = 0x4, scoped, tag = 'scoped memory for processor_forward_seq.1']
    #allocation20 [shape = 'u8[2048]{0}', space=vmem, size = 0x800, scoped, tag = 'output window, operand 0']
    #allocation21 [shape = 'u8[1024]{0}', space=vmem, size = 0x400, scoped, tag = 'output window, operand 1, single buffered']
    #allocation22 [shape = 's32[1]{0}', space=sflag, size = 0x4, scoped, tag = 'scoped memory for processor_forward_seq.1']
    #allocation23 [shape = 'u8[4096]{0}', space=vmem, size = 0x1000, scoped, tag = 'output window, operand 2, single buffered']
    #allocation24 [shape = 'u8[5120]{0}', space=vmem, size = 0x1400, scoped, tag = 'output window, operand 3, single buffered']
    #allocation25 [shape = 's32[1]{0}', space=sflag, size = 0x4, scoped, tag = 'scoped memory for processor_forward_seq.1']
    #allocation26 [shape = 'u8[16384]{0}', space=vmem, size = 0x4000, scoped, tag = 'output window, operand 4, single buffered']
    %23 = vsyncpa [#allocation7], 0
    %24 = vsyncpa [#allocation10], 0
    %25 = vsyncpa [#allocation13], 0
    %26 = vsyncpa [#allocation16], 0
    %27 = vsyncpa [#allocation19], 0
    %28 = vsyncpa [#allocation8], 0
    %s29 = scalar_lea.sflag [#allocation8], 1
    %30 = vsyncpa %s29, 0
    %31 = vsyncpa [#allocation22], 0
    %32 = vsyncpa [#allocation25], 0
    loop: start=0, step=1, limit=10
    $region2: #{processor_forward_seq.1} parent=1 // loop_pre_header
      _
    $region3: #{processor_forward_seq.1} parent=1 // loop_header
      %s34 = sphi 0, %s38
      %p35 = scmp.ge.s32.totalorder %s34, 10
      %s44 = sphi 0, %s46
      %s47 = sphi 0, %s44
      %s48 = sphi 0, %s47
      %s64 = sphi 0, %s48
      %s68 = sphi 0, %s68
      %s70 = sphi 0, %s68
      %s71 = sphi 0, %s70
      %s85 = sphi 0, %s71
      %s89 = sphi 0, %s89
      %s91 = sphi 0, %s89
      %s92 = sphi 0, %s91
      %s106 = sphi 0, %s92
      %s110 = sphi 0, %s110
      %s112 = sphi 0, %s110
      %s113 = sphi 0, %s112
      %s127 = sphi 0, %s113
      %s131 = sphi 0, %s131
      %s133 = sphi 0, %s131
      %s134 = sphi 0, %s133
      %s148 = sphi 0, %s134
      %s152 = sphi 0, %s152
      %s154 = sphi 0, %s152
      %s155 = sphi 0, %s154
      %s169 = sphi 0, %s155
      %s173 = sphi 0, %s173
      %s175 = sphi 0, %s173
      %s176 = sphi 0, %s175
      %s190 = sphi 0, %s176
      %s194 = sphi 0, %s194
      %s196 = sphi 0, %s194
      %s197 = sphi 0, %s196
      %s211 = sphi 0, %s197
      %s215 = sphi 0, %s215
      %s217 = sphi 0, %s215
      %s218 = sphi 0, %s217
      %s232 = sphi 0, %s218
      %s236 = sphi 0, %s236
      %s238 = sphi 0, %s236
      %s239 = sphi 0, %s238
      %s253 = sphi 0, %s239
      %s257 = sphi 0, %s257
      %s259 = sphi 0, %s257
      %s260 = sphi 0, %s259
      %s274 = sphi 0, %s260
      %s278 = sphi 0, %s278
      %s280 = sphi 0, %s278
      %s281 = sphi 0, %s280
      %s295 = sphi 0, %s281
      %s299 = sphi 0, %s299
      %s301 = sphi 0, %s299
      %s302 = sphi 0, %s301
      %s316 = sphi 0, %s302
      %s322 = sphi 0, %s324
      %s325 = sphi 0, %s322
      %s326 = sphi 0, %s325
      %s342 = sphi 0, %s326
      %s346 = sphi 0, %s346
      %s348 = sphi 0, %s346
      %s349 = sphi 0, %s348
      %s363 = sphi 0, %s349
      %s367 = sphi 0, %s367
      %s369 = sphi 0, %s367
      %s370 = sphi 0, %s369
      %s384 = sphi 0, %s370
      %s388 = sphi 0, %s388
      %s390 = sphi 0, %s388
      %s391 = sphi 0, %s390
      %s405 = sphi 0, %s391
      %s409 = sphi 0, %s409
      %s411 = sphi 0, %s409
      %s412 = sphi 0, %s411
      %s426 = sphi 0, %s412
    $region4: #{processor_forward_seq.1} parent=1 // loop_header_branch
      %37 = sbr.rel (%p35) target = $region8
    $region5: #{processor_forward_seq.1} parent=1 // loop_body
      %s39 = ssub.s32 %s34, 1
      %s40 = ssub.s32 %s34, 2
      %s41 = sadd.s32 %s34, 1
      %s42 = ssub.s32 %s34, %s41
      %p43 = scmp.eq.s32.totalorder %s42, 0
      %s45 = sadd.s32 %s44, 1
      %s46 = scalar_select %p43, %s44, %s45
      %p49 = pneg %p43
      %p50 = scmp.eq.s32.totalorder %s34, 7
      %p51 = por %p49, %p50
      %p52 = scmp.ne.s32.totalorder %s44, %s47
      %p53 = scmp.eq.s32.totalorder %s34, 0
      %p54 = por %p52, %p53
      %p55 = scmp.ne.s32.totalorder %s44, %s47
      %p56 = scmp.eq.s32.totalorder %s39, 7
      %p57 = por %p55, %p56
      %p58 = scmp.ne.s32.totalorder %s47, %s48
      %p59 = scmp.eq.s32.totalorder %s39, 0
      %p60 = por %p58, %p59
      %p61 = scmp.ne.s32.totalorder %s47, %s48
      %p62 = scmp.eq.s32.totalorder %s40, 7
      %p63 = por %p61, %p62
      %p65 = scmp.ne.s32.totalorder %s48, %s64
      %p66 = scmp.eq.s32.totalorder %s40, 0
      %p67 = por %p65, %p66
      %s69 = sadd.s32 %s68, 1
      %p72 = scmp.eq.s32.totalorder %s34, 7
      %p73 = scmp.ne.s32.totalorder %s68, %s70
      %p74 = scmp.eq.s32.totalorder %s34, 0
      %p75 = por %p73, %p74
      %p76 = scmp.ne.s32.totalorder %s68, %s70
      %p77 = scmp.eq.s32.totalorder %s39, 7
      %p78 = por %p76, %p77
      %p79 = scmp.ne.s32.totalorder %s70, %s71
      %p80 = scmp.eq.s32.totalorder %s39, 0
      %p81 = por %p79, %p80
      %p82 = scmp.ne.s32.totalorder %s70, %s71
      %p83 = scmp.eq.s32.totalorder %s40, 7
      %p84 = por %p82, %p83
      %p86 = scmp.ne.s32.totalorder %s71, %s85
      %p87 = scmp.eq.s32.totalorder %s40, 0
      %p88 = por %p86, %p87
      %s90 = sadd.s32 %s89, 1
      %p93 = scmp.eq.s32.totalorder %s34, 7
      %p94 = scmp.ne.s32.totalorder %s89, %s91
      %p95 = scmp.eq.s32.totalorder %s34, 0
      %p96 = por %p94, %p95
      %p97 = scmp.ne.s32.totalorder %s89, %s91
      %p98 = scmp.eq.s32.totalorder %s39, 7
      %p99 = por %p97, %p98
      %p100 = scmp.ne.s32.totalorder %s91, %s92
      %p101 = scmp.eq.s32.totalorder %s39, 0
      %p102 = por %p100, %p101
      %p103 = scmp.ne.s32.totalorder %s91, %s92
      %p104 = scmp.eq.s32.totalorder %s40, 7
      %p105 = por %p103, %p104
      %p107 = scmp.ne.s32.totalorder %s92, %s106
      %p108 = scmp.eq.s32.totalorder %s40, 0
      %p109 = por %p107, %p108
      %s111 = sadd.s32 %s110, 1
      %p114 = scmp.eq.s32.totalorder %s34, 7
      %p115 = scmp.ne.s32.totalorder %s110, %s112
      %p116 = scmp.eq.s32.totalorder %s34, 0
      %p117 = por %p115, %p116
      %p118 = scmp.ne.s32.totalorder %s110, %s112
      %p119 = scmp.eq.s32.totalorder %s39, 7
      %p120 = por %p118, %p119
      %p121 = scmp.ne.s32.totalorder %s112, %s113
      %p122 = scmp.eq.s32.totalorder %s39, 0
      %p123 = por %p121, %p122
      %p124 = scmp.ne.s32.totalorder %s112, %s113
      %p125 = scmp.eq.s32.totalorder %s40, 7
      %p126 = por %p124, %p125
      %p128 = scmp.ne.s32.totalorder %s113, %s127
      %p129 = scmp.eq.s32.totalorder %s40, 0
      %p130 = por %p128, %p129
      %s132 = sadd.s32 %s131, 1
      %p135 = scmp.eq.s32.totalorder %s34, 7
      %p136 = scmp.ne.s32.totalorder %s131, %s133
      %p137 = scmp.eq.s32.totalorder %s34, 0
      %p138 = por %p136, %p137
      %p139 = scmp.ne.s32.totalorder %s131, %s133
      %p140 = scmp.eq.s32.totalorder %s39, 7
      %p141 = por %p139, %p140
      %p142 = scmp.ne.s32.totalorder %s133, %s134
      %p143 = scmp.eq.s32.totalorder %s39, 0
      %p144 = por %p142, %p143
      %p145 = scmp.ne.s32.totalorder %s133, %s134
      %p146 = scmp.eq.s32.totalorder %s40, 7
      %p147 = por %p145, %p146
      %p149 = scmp.ne.s32.totalorder %s134, %s148
      %p150 = scmp.eq.s32.totalorder %s40, 0
      %p151 = por %p149, %p150
      %s153 = sadd.s32 %s152, 1
      %p156 = scmp.eq.s32.totalorder %s34, 7
      %p157 = scmp.ne.s32.totalorder %s152, %s154
      %p158 = scmp.eq.s32.totalorder %s34, 0
      %p159 = por %p157, %p158
      %p160 = scmp.ne.s32.totalorder %s152, %s154
      %p161 = scmp.eq.s32.totalorder %s39, 7
      %p162 = por %p160, %p161
      %p163 = scmp.ne.s32.totalorder %s154, %s155
      %p164 = scmp.eq.s32.totalorder %s39, 0
      %p165 = por %p163, %p164
      %p166 = scmp.ne.s32.totalorder %s154, %s155
      %p167 = scmp.eq.s32.totalorder %s40, 7
      %p168 = por %p166, %p167
      %p170 = scmp.ne.s32.totalorder %s155, %s169
      %p171 = scmp.eq.s32.totalorder %s40, 0
      %p172 = por %p170, %p171
      %s174 = sadd.s32 %s173, 1
      %p177 = scmp.eq.s32.totalorder %s34, 7
      %p178 = scmp.ne.s32.totalorder %s173, %s175
      %p179 = scmp.eq.s32.totalorder %s34, 0
      %p180 = por %p178, %p179
      %p181 = scmp.ne.s32.totalorder %s173, %s175
      %p182 = scmp.eq.s32.totalorder %s39, 7
      %p183 = por %p181, %p182
      %p184 = scmp.ne.s32.totalorder %s175, %s176
      %p185 = scmp.eq.s32.totalorder %s39, 0
      %p186 = por %p184, %p185
      %p187 = scmp.ne.s32.totalorder %s175, %s176
      %p188 = scmp.eq.s32.totalorder %s40, 7
      %p189 = por %p187, %p188
      %p191 = scmp.ne.s32.totalorder %s176, %s190
      %p192 = scmp.eq.s32.totalorder %s40, 0
      %p193 = por %p191, %p192
      %s195 = sadd.s32 %s194, 1
      %p198 = scmp.eq.s32.totalorder %s34, 7
      %p199 = scmp.ne.s32.totalorder %s194, %s196
      %p200 = scmp.eq.s32.totalorder %s34, 0
      %p201 = por %p199, %p200
      %p202 = scmp.ne.s32.totalorder %s194, %s196
      %p203 = scmp.eq.s32.totalorder %s39, 7
      %p204 = por %p202, %p203
      %p205 = scmp.ne.s32.totalorder %s196, %s197
      %p206 = scmp.eq.s32.totalorder %s39, 0
      %p207 = por %p205, %p206
      %p208 = scmp.ne.s32.totalorder %s196, %s197
      %p209 = scmp.eq.s32.totalorder %s40, 7
      %p210 = por %p208, %p209
      %p212 = scmp.ne.s32.totalorder %s197, %s211
      %p213 = scmp.eq.s32.totalorder %s40, 0
      %p214 = por %p212, %p213
      %s216 = sadd.s32 %s215, 1
      %p219 = scmp.eq.s32.totalorder %s34, 7
      %p220 = scmp.ne.s32.totalorder %s215, %s217
      %p221 = scmp.eq.s32.totalorder %s34, 0
      %p222 = por %p220, %p221
      %p223 = scmp.ne.s32.totalorder %s215, %s217
      %p224 = scmp.eq.s32.totalorder %s39, 7
      %p225 = por %p223, %p224
      %p226 = scmp.ne.s32.totalorder %s217, %s218
      %p227 = scmp.eq.s32.totalorder %s39, 0
      %p228 = por %p226, %p227
      %p229 = scmp.ne.s32.totalorder %s217, %s218
      %p230 = scmp.eq.s32.totalorder %s40, 7
      %p231 = por %p229, %p230
      %p233 = scmp.ne.s32.totalorder %s218, %s232
      %p234 = scmp.eq.s32.totalorder %s40, 0
      %p235 = por %p233, %p234
      %s237 = sadd.s32 %s236, 1
      %p240 = scmp.eq.s32.totalorder %s34, 7
      %p241 = scmp.ne.s32.totalorder %s236, %s238
      %p242 = scmp.eq.s32.totalorder %s34, 0
      %p243 = por %p241, %p242
      %p244 = scmp.ne.s32.totalorder %s236, %s238
      %p245 = scmp.eq.s32.totalorder %s39, 7
      %p246 = por %p244, %p245
      %p247 = scmp.ne.s32.totalorder %s238, %s239
      %p248 = scmp.eq.s32.totalorder %s39, 0
      %p249 = por %p247, %p248
      %p250 = scmp.ne.s32.totalorder %s238, %s239
      %p251 = scmp.eq.s32.totalorder %s40, 7
      %p252 = por %p250, %p251
      %p254 = scmp.ne.s32.totalorder %s239, %s253
      %p255 = scmp.eq.s32.totalorder %s40, 0
      %p256 = por %p254, %p255
      %s258 = sadd.s32 %s257, 1
      %p261 = scmp.eq.s32.totalorder %s34, 7
      %p262 = scmp.ne.s32.totalorder %s257, %s259
      %p263 = scmp.eq.s32.totalorder %s34, 0
      %p264 = por %p262, %p263
      %p265 = scmp.ne.s32.totalorder %s257, %s259
      %p266 = scmp.eq.s32.totalorder %s39, 7
      %p267 = por %p265, %p266
      %p268 = scmp.ne.s32.totalorder %s259, %s260
      %p269 = scmp.eq.s32.totalorder %s39, 0
      %p270 = por %p268, %p269
      %p271 = scmp.ne.s32.totalorder %s259, %s260
      %p272 = scmp.eq.s32.totalorder %s40, 7
      %p273 = por %p271, %p272
      %p275 = scmp.ne.s32.totalorder %s260, %s274
      %p276 = scmp.eq.s32.totalorder %s40, 0
      %p277 = por %p275, %p276
      %s279 = sadd.s32 %s278, 1
      %p282 = scmp.eq.s32.totalorder %s34, 7
      %p283 = scmp.ne.s32.totalorder %s278, %s280
      %p284 = scmp.eq.s32.totalorder %s34, 0
      %p285 = por %p283, %p284
      %p286 = scmp.ne.s32.totalorder %s278, %s280
      %p287 = scmp.eq.s32.totalorder %s39, 7
      %p288 = por %p286, %p287
      %p289 = scmp.ne.s32.totalorder %s280, %s281
      %p290 = scmp.eq.s32.totalorder %s39, 0
      %p291 = por %p289, %p290
      %p292 = scmp.ne.s32.totalorder %s280, %s281
      %p293 = scmp.eq.s32.totalorder %s40, 7
      %p294 = por %p292, %p293
      %p296 = scmp.ne.s32.totalorder %s281, %s295
      %p297 = scmp.eq.s32.totalorder %s40, 0
      %p298 = por %p296, %p297
      %s300 = sadd.s32 %s299, 1
      %p303 = scmp.eq.s32.totalorder %s34, 7
      %p304 = scmp.ne.s32.totalorder %s299, %s301
      %p305 = scmp.eq.s32.totalorder %s34, 0
      %p306 = por %p304, %p305
      %p307 = scmp.ne.s32.totalorder %s299, %s301
      %p308 = scmp.eq.s32.totalorder %s39, 7
      %p309 = por %p307, %p308
      %p310 = scmp.ne.s32.totalorder %s301, %s302
      %p311 = scmp.eq.s32.totalorder %s39, 0
      %p312 = por %p310, %p311
      %p313 = scmp.ne.s32.totalorder %s301, %s302
      %p314 = scmp.eq.s32.totalorder %s40, 7
      %p315 = por %p313, %p314
      %p317 = scmp.ne.s32.totalorder %s302, %s316
      %p318 = scmp.eq.s32.totalorder %s40, 0
      %p319 = por %p317, %p318
      %s320 = ssub.s32 %s34, %s41
      %p321 = scmp.eq.s32.totalorder %s320, 0
      %s323 = sadd.s32 %s322, 1
      %s324 = scalar_select %p321, %s322, %s323
      %p327 = pneg %p321
      %p328 = scmp.eq.s32.totalorder %s34, 7
      %p329 = por %p327, %p328
      %p330 = scmp.ne.s32.totalorder %s322, %s325
      %p331 = scmp.eq.s32.totalorder %s34, 0
      %p332 = por %p330, %p331
      %p333 = scmp.ne.s32.totalorder %s322, %s325
      %p334 = scmp.eq.s32.totalorder %s39, 7
      %p335 = por %p333, %p334
      %p336 = scmp.ne.s32.totalorder %s325, %s326
      %p337 = scmp.eq.s32.totalorder %s39, 0
      %p338 = por %p336, %p337
      %p339 = scmp.ne.s32.totalorder %s325, %s326
      %p340 = scmp.eq.s32.totalorder %s40, 7
      %p341 = por %p339, %p340
      %p343 = scmp.ne.s32.totalorder %s326, %s342
      %p344 = scmp.eq.s32.totalorder %s40, 0
      %p345 = por %p343, %p344
      %s347 = sadd.s32 %s346, 1
      %p350 = scmp.eq.s32.totalorder %s34, 7
      %p351 = scmp.ne.s32.totalorder %s346, %s348
      %p352 = scmp.eq.s32.totalorder %s34, 0
      %p353 = por %p351, %p352
      %p354 = scmp.ne.s32.totalorder %s346, %s348
      %p355 = scmp.eq.s32.totalorder %s39, 7
      %p356 = por %p354, %p355
      %p357 = scmp.ne.s32.totalorder %s348, %s349
      %p358 = scmp.eq.s32.totalorder %s39, 0
      %p359 = por %p357, %p358
      %p360 = scmp.ne.s32.totalorder %s348, %s349
      %p361 = scmp.eq.s32.totalorder %s40, 7
      %p362 = por %p360, %p361
      %p364 = scmp.ne.s32.totalorder %s349, %s363
      %p365 = scmp.eq.s32.totalorder %s40, 0
      %p366 = por %p364, %p365
      %s368 = sadd.s32 %s367, 1
      %p371 = scmp.eq.s32.totalorder %s34, 7
      %p372 = scmp.ne.s32.totalorder %s367, %s369
      %p373 = scmp.eq.s32.totalorder %s34, 0
      %p374 = por %p372, %p373
      %p375 = scmp.ne.s32.totalorder %s367, %s369
      %p376 = scmp.eq.s32.totalorder %s39, 7
      %p377 = por %p375, %p376
      %p378 = scmp.ne.s32.totalorder %s369, %s370
      %p379 = scmp.eq.s32.totalorder %s39, 0
      %p380 = por %p378, %p379
      %p381 = scmp.ne.s32.totalorder %s369, %s370
      %p382 = scmp.eq.s32.totalorder %s40, 7
      %p383 = por %p381, %p382
      %p385 = scmp.ne.s32.totalorder %s370, %s384
      %p386 = scmp.eq.s32.totalorder %s40, 0
      %p387 = por %p385, %p386
      %s389 = sadd.s32 %s388, 1
      %p392 = scmp.eq.s32.totalorder %s34, 7
      %p393 = scmp.ne.s32.totalorder %s388, %s390
      %p394 = scmp.eq.s32.totalorder %s34, 0
      %p395 = por %p393, %p394
      %p396 = scmp.ne.s32.totalorder %s388, %s390
      %p397 = scmp.eq.s32.totalorder %s39, 7
      %p398 = por %p396, %p397
      %p399 = scmp.ne.s32.totalorder %s390, %s391
      %p400 = scmp.eq.s32.totalorder %s39, 0
      %p401 = por %p399, %p400
      %p402 = scmp.ne.s32.totalorder %s390, %s391
      %p403 = scmp.eq.s32.totalorder %s40, 7
      %p404 = por %p402, %p403
      %p406 = scmp.ne.s32.totalorder %s391, %s405
      %p407 = scmp.eq.s32.totalorder %s40, 0
      %p408 = por %p406, %p407
      %s410 = sadd.s32 %s409, 1
      %p413 = scmp.eq.s32.totalorder %s34, 7
      %p414 = scmp.ne.s32.totalorder %s409, %s411
      %p415 = scmp.eq.s32.totalorder %s34, 0
      %p416 = por %p414, %p415
      %p417 = scmp.ne.s32.totalorder %s409, %s411
      %p418 = scmp.eq.s32.totalorder %s39, 7
      %p419 = por %p417, %p418
      %p420 = scmp.ne.s32.totalorder %s411, %s412
      %p421 = scmp.eq.s32.totalorder %s39, 0
      %p422 = por %p420, %p421
      %p423 = scmp.ne.s32.totalorder %s411, %s412
      %p424 = scmp.eq.s32.totalorder %s40, 7
      %p425 = por %p423, %p424
      %p427 = scmp.ne.s32.totalorder %s412, %s426
      %p428 = scmp.eq.s32.totalorder %s40, 0
      %p429 = por %p427, %p428
      %p430 = scmp.le.s32.totalorder 1, %s34
      %p431 = scmp.lt.s32.totalorder %s34, 9
      %p432 = pnand %p430, %p431
      %p433 = pneg %p432
      // Predicated region
      $region9: #{processor_forward_seq.1} parent=5 // pred_check
        _
      $region10: #{processor_forward_seq.1} parent=5 // pred_check_branch
        %435 = sbr.rel (%p432) target = $region12
      $region11: #{processor_forward_seq.1} parent=5 // pred_region
        %s436 = ssub.s32 %s34, 1
        // Predicated region
        $region13: #{processor_forward_seq.1} parent=11 // pred_check
          %p437 = pneg %p81
        $region14: #{processor_forward_seq.1} parent=11 // pred_check_branch
          %439 = sbr.rel (%p437) target = $region16
        $region15: #{processor_forward_seq.1} parent=11 // pred_region
          %s441 = ssub.s32 32, 32
          %442 = vsyncadd [#allocation7], %s441
          %s444 = sshll.u32 [#allocation6], 4
          %s445 = int_to_ptr.vmem [resolvable:$true] %s444
          %447 = dma.hbm_to_vmem [thread:$0]  %s1, 32, %s445, [#allocation7]
        $region16: #{processor_forward_seq.1} parent=11 // pred_fallthru
          _
        // Predicated region
        $region17: #{processor_forward_seq.1} parent=11 // pred_check
          %p448 = pneg %p102
        $region18: #{processor_forward_seq.1} parent=11 // pred_check_branch
          %450 = sbr.rel (%p448) target = $region20
        $region19: #{processor_forward_seq.1} parent=11 // pred_region
          _
        $region20: #{processor_forward_seq.1} parent=11 // pred_fallthru
          _
        // Predicated region
        $region21: #{processor_forward_seq.1} parent=11 // pred_check
          %p451 = pneg %p123
        $region22: #{processor_forward_seq.1} parent=11 // pred_check_branch
          %453 = sbr.rel (%p451) target = $region24
        $region23: #{processor_forward_seq.1} parent=11 // pred_region
          _
        $region24: #{processor_forward_seq.1} parent=11 // pred_fallthru
          _
        // Predicated region
        $region25: #{processor_forward_seq.1} parent=11 // pred_check
          %p454 = pneg %p144
        $region26: #{processor_forward_seq.1} parent=11 // pred_check_branch
          %456 = sbr.rel (%p454) target = $region28
        $region27: #{processor_forward_seq.1} parent=11 // pred_region
          _
        $region28: #{processor_forward_seq.1} parent=11 // pred_fallthru
          _
        // Predicated region
        $region29: #{processor_forward_seq.1} parent=11 // pred_check
          %p457 = pneg %p165
        $region30: #{processor_forward_seq.1} parent=11 // pred_check_branch
          %459 = sbr.rel (%p457) target = $region32
        $region31: #{processor_forward_seq.1} parent=11 // pred_region
          %s461 = ssub.s32 128, 128
          %462 = vsyncadd [#allocation10], %s461
          %s464 = sshll.u32 [#allocation9], 4
          %s465 = int_to_ptr.vmem [resolvable:$true] %s464
          %467 = dma.hbm_to_vmem [thread:$0]  %s5, 128, %s465, [#allocation10]
        $region32: #{processor_forward_seq.1} parent=11 // pred_fallthru
          _
        // Predicated region
        $region33: #{processor_forward_seq.1} parent=11 // pred_check
          %p468 = pneg %p186
        $region34: #{processor_forward_seq.1} parent=11 // pred_check_branch
          %470 = sbr.rel (%p468) target = $region36
        $region35: #{processor_forward_seq.1} parent=11 // pred_region
          %s472 = ssub.s32 256, 256
          %473 = vsyncadd [#allocation10], %s472
          %s474 = sshll.u32 [#allocation11], 4
          %s475 = int_to_ptr.vmem [resolvable:$true] %s474
          %480 = dma.hbm_to_vmem [thread:$0]  %s6, 256, %s475, [#allocation10], 128, 128, 8
        $region36: #{processor_forward_seq.1} parent=11 // pred_fallthru
          _
        // Predicated region
        $region37: #{processor_forward_seq.1} parent=11 // pred_check
          %p481 = pneg %p207
        $region38: #{processor_forward_seq.1} parent=11 // pred_check_branch
          %483 = sbr.rel (%p481) target = $region40
        $region39: #{processor_forward_seq.1} parent=11 // pred_region
          %s485 = ssub.s32 1536, 1536
          %486 = vsyncadd [#allocation13], %s485
          %s487 = sshll.u32 [#allocation12], 4
          %s488 = int_to_ptr.vmem [resolvable:$true] %s487
          %493 = dma.hbm_to_vmem [thread:$0]  %s7, 1536, %s488, [#allocation13], 128, 128, 8
        $region40: #{processor_forward_seq.1} parent=11 // pred_fallthru
          _
        // Predicated region
        $region41: #{processor_forward_seq.1} parent=11 // pred_check
          %p494 = pneg %p228
        $region42: #{processor_forward_seq.1} parent=11 // pred_check_branch
          %496 = sbr.rel (%p494) target = $region44
        $region43: #{processor_forward_seq.1} parent=11 // pred_region
          %s498 = ssub.s32 32, 32
          %499 = vsyncadd [#allocation13], %s498
          %s500 = sshll.u32 [#allocation14], 4
          %s501 = int_to_ptr.vmem [resolvable:$true] %s500
          %506 = dma.hbm_to_vmem [thread:$0]  %s8, 32, %s501, [#allocation13], 16, 16, 1
        $region44: #{processor_forward_seq.1} parent=11 // pred_fallthru
          _
        // Predicated region
        $region45: #{processor_forward_seq.1} parent=11 // pred_check
          %p507 = pneg %p249
        $region46: #{processor_forward_seq.1} parent=11 // pred_check_branch
          %509 = sbr.rel (%p507) target = $region48
        $region47: #{processor_forward_seq.1} parent=11 // pred_region
          %s511 = ssub.s32 512, 512
          %512 = vsyncadd [#allocation16], %s511
          %s513 = sshll.u32 [#allocation15], 4
          %s514 = int_to_ptr.vmem [resolvable:$true] %s513
          %519 = dma.hbm_to_vmem [thread:$0]  %s9, 512, %s514, [#allocation16], 128, 128, 8
        $region48: #{processor_forward_seq.1} parent=11 // pred_fallthru
          _
        // Predicated region
        $region49: #{processor_forward_seq.1} parent=11 // pred_check
          %p520 = pneg %p270
        $region50: #{processor_forward_seq.1} parent=11 // pred_check_branch
          %522 = sbr.rel (%p520) target = $region52
        $region51: #{processor_forward_seq.1} parent=11 // pred_region
          %s524 = ssub.s32 16, 16
          %525 = vsyncadd [#allocation16], %s524
          %s527 = sshll.u32 [#allocation17], 4
          %s528 = int_to_ptr.vmem [resolvable:$true] %s527
          %530 = dma.hbm_to_vmem [thread:$0]  %s10, 16, %s528, [#allocation16]
        $region52: #{processor_forward_seq.1} parent=11 // pred_fallthru
          _
        // Predicated region
        $region53: #{processor_forward_seq.1} parent=11 // pred_check
          %p531 = pneg %p291
        $region54: #{processor_forward_seq.1} parent=11 // pred_check_branch
          %533 = sbr.rel (%p531) target = $region56
        $region55: #{processor_forward_seq.1} parent=11 // pred_region
          %s535 = ssub.s32 256, 256
          %536 = vsyncadd [#allocation19], %s535
          %s537 = sshll.u32 [#allocation18], 4
          %s538 = int_to_ptr.vmem [resolvable:$true] %s537
          %543 = dma.hbm_to_vmem [thread:$0]  %s11, 256, %s538, [#allocation19], 128, 128, 8
        $region56: #{processor_forward_seq.1} parent=11 // pred_fallthru
          _
        // Predicated region
        $region57: #{processor_forward_seq.1} parent=11 // pred_check
          %p544 = pneg %p312
        $region58: #{processor_forward_seq.1} parent=11 // pred_check_branch
          %546 = sbr.rel (%p544) target = $region60
        $region59: #{processor_forward_seq.1} parent=11 // pred_region
          _
        $region60: #{processor_forward_seq.1} parent=11 // pred_fallthru
          _
      $region12: #{processor_forward_seq.1} parent=5 // pred_fallthru
        _
      %p547 = scmp.lt.s32.totalorder %s34, 8
      // Predicated region
      $region61: #{processor_forward_seq.1} parent=5 // pred_check
        %p548 = pneg %p547
      $region62: #{processor_forward_seq.1} parent=5 // pred_check_branch
        %550 = sbr.rel (%p548) target = $region64
      $region63: #{processor_forward_seq.1} parent=5 // pred_region
        // Predicated region
        $region65: #{processor_forward_seq.1} parent=63 // pred_check
          %p551 = pneg %p54
        $region66: #{processor_forward_seq.1} parent=63 // pred_check_branch
          %553 = sbr.rel (%p551) target = $region68
        $region67: #{processor_forward_seq.1} parent=63 // pred_region
          %p554 = scmp.lt.s32.totalorder %s34, 7
          %s555 = scalar_select %p554, %s34, 7
          %s556 = smul.addr %s555, 2
          %s557 = scalar_lea.vmem %s0, %s556
        $region68: #{processor_forward_seq.1} parent=63 // pred_fallthru
          _
      $region64: #{processor_forward_seq.1} parent=5 // pred_fallthru
        _
      %p558 = scmp.le.s32.totalorder 1, %s34
      %p559 = scmp.lt.s32.totalorder %s34, 9
      %p560 = pnand %p558, %p559
      %p561 = pneg %p560
      // Predicated region
      $region69: #{processor_forward_seq.1} parent=5 // pred_check
        _
      $region70: #{processor_forward_seq.1} parent=5 // pred_check_branch
        %563 = sbr.rel (%p560) target = $region72
      $region71: #{processor_forward_seq.1} parent=5 // pred_region
        %s564 = ssub.s32 %s34, 1
        // Predicated region
        $region73: #{processor_forward_seq.1} parent=71 // pred_check
          %p565 = pneg %p81
        $region74: #{processor_forward_seq.1} parent=71 // pred_check_branch
          %567 = sbr.rel (%p565) target = $region76
        $region75: #{processor_forward_seq.1} parent=71 // pred_region
          %568 = dma.done [#allocation7], 32
        $region76: #{processor_forward_seq.1} parent=71 // pred_fallthru
          _
        // Predicated region
        $region77: #{processor_forward_seq.1} parent=71 // pred_check
          %p569 = pneg %p165
        $region78: #{processor_forward_seq.1} parent=71 // pred_check_branch
          %571 = sbr.rel (%p569) target = $region80
        $region79: #{processor_forward_seq.1} parent=71 // pred_region
          %572 = dma.done [#allocation10], 128
        $region80: #{processor_forward_seq.1} parent=71 // pred_fallthru
          _
        // Predicated region
        $region81: #{processor_forward_seq.1} parent=71 // pred_check
          %p573 = pneg %p186
        $region82: #{processor_forward_seq.1} parent=71 // pred_check_branch
          %575 = sbr.rel (%p573) target = $region84
        $region83: #{processor_forward_seq.1} parent=71 // pred_region
          %576 = dma.done [#allocation10], 256
        $region84: #{processor_forward_seq.1} parent=71 // pred_fallthru
          _
        // Predicated region
        $region85: #{processor_forward_seq.1} parent=71 // pred_check
          %p577 = pneg %p207
        $region86: #{processor_forward_seq.1} parent=71 // pred_check_branch
          %579 = sbr.rel (%p577) target = $region88
        $region87: #{processor_forward_seq.1} parent=71 // pred_region
          %580 = dma.done [#allocation13], 1536
        $region88: #{processor_forward_seq.1} parent=71 // pred_fallthru
          _
        // Predicated region
        $region89: #{processor_forward_seq.1} parent=71 // pred_check
          %p581 = pneg %p228
        $region90: #{processor_forward_seq.1} parent=71 // pred_check_branch
          %583 = sbr.rel (%p581) target = $region92
        $region91: #{processor_forward_seq.1} parent=71 // pred_region
          %584 = dma.done [#allocation13], 32
        $region92: #{processor_forward_seq.1} parent=71 // pred_fallthru
          _
        // Predicated region
        $region93: #{processor_forward_seq.1} parent=71 // pred_check
          %p585 = pneg %p249
        $region94: #{processor_forward_seq.1} parent=71 // pred_check_branch
          %587 = sbr.rel (%p585) target = $region96
        $region95: #{processor_forward_seq.1} parent=71 // pred_region
          %588 = dma.done [#allocation16], 512
        $region96: #{processor_forward_seq.1} parent=71 // pred_fallthru
          _
        // Predicated region
        $region97: #{processor_forward_seq.1} parent=71 // pred_check
          %p589 = pneg %p270
        $region98: #{processor_forward_seq.1} parent=71 // pred_check_branch
          %591 = sbr.rel (%p589) target = $region100
        $region99: #{processor_forward_seq.1} parent=71 // pred_region
          %592 = dma.done [#allocation16], 16
        $region100: #{processor_forward_seq.1} parent=71 // pred_fallthru
          _
        // Predicated region
        $region101: #{processor_forward_seq.1} parent=71 // pred_check
          %p593 = pneg %p291
        $region102: #{processor_forward_seq.1} parent=71 // pred_check_branch
          %595 = sbr.rel (%p593) target = $region104
        $region103: #{processor_forward_seq.1} parent=71 // pred_region
          %596 = dma.done [#allocation19], 256
        $region104: #{processor_forward_seq.1} parent=71 // pred_fallthru
          _
        %p597 = scmp.lt.s32.totalorder %s39, 7
        %s598 = scalar_select %p597, %s39, 7
        %s599 = smul.addr %s598, 2
        %s600 = scalar_lea.vmem %s0, %s599
        %p601 = pneg %p60
        %p602 = pneg %p57
        %p603 = pneg %p81
        %p604 = pneg %p78
        %p605 = pneg %p102
        %p606 = pneg %p99
        %p607 = pneg %p123
        %p608 = pneg %p120
        %p609 = pneg %p144
        %p610 = pneg %p141
        %p611 = pneg %p165
        %p612 = pneg %p162
        %p613 = pneg %p186
        %p614 = pneg %p183
        %p615 = pneg %p207
        %p616 = pneg %p204
        %p617 = pneg %p228
        %p618 = pneg %p225
        %p619 = pneg %p249
        %p620 = pneg %p246
        %p621 = pneg %p270
        %p622 = pneg %p267
        %p623 = pneg %p291
        %p624 = pneg %p288
        %p625 = pneg %p312
        %p626 = pneg %p309
        %p627 = pneg %p338
        %p628 = pneg %p335
        %s629 = sand.u32 %s325, 1
        %s630 = scalar_lea.sflag [#allocation8], %s629
        %s631 = sand.u32 %s325, 1
        %s632 = smul.addr %s631, 2
        %s633 = scalar_lea.vmem [#allocation20], %s632
        %p634 = pneg %p359
        %p635 = pneg %p356
        %p636 = pneg %p380
        %p637 = pneg %p377
        %p638 = pneg %p401
        %p639 = pneg %p398
        %p640 = pneg %p422
        %p641 = pneg %p419
        %p642 = scmp.lt.s32.totalorder %s39, 7
        %s643 = scalar_select %p642, %s39, 7
        %s644 = smul.addr %s643, 2
        %s645 = scalar_lea.vmem %s0, %s644
        %p646 = scmp.eq.s32.totalorder %s39, 0
        // Predicated region
        $region105: #{processor_forward_seq.1} parent=71 // pred_check
          %p647 = pneg %p646
        $region106: #{processor_forward_seq.1} parent=71 // pred_check_branch
          %649 = sbr.rel (%p647) target = $region108
        $region107: #{processor_forward_seq.1} parent=71 // pred_region
          %v650 = vld [vmem:[#allocation6] sm:$0x3]
          %vm651 = vcmask 123904
          %652 = vst.msk [vmem:[#allocation2] sm:$0x3] %vm651, %v650
          %v653 = vld [vmem:[%s2] sm:$0x3]
          %v654 = vld [vmem:[%s2 + $0x2] sm:$0x3]
          %v655 = vld [vmem:[%s2 + $0x4] sm:$0x3]
          %v656 = vld [vmem:[%s2 + $0x6] sm:$0x3]
          %vm657 = vcmask 254976
          %658 = vst.msk [vmem:[#allocation3] sm:$0x3] %vm657, %v653
          %659 = vst.msk [vmem:[#allocation3 + $0x2] sm:$0x3] %vm657, %v654
          %660 = vst.msk [vmem:[#allocation3 + $0x4] sm:$0x3] %vm657, %v655
          %661 = vst.msk [vmem:[#allocation3 + $0x6] sm:$0x3] %vm657, %v656
          %v662 = vld [vmem:[%s3] sm:$0x3]
          %v663 = vld [vmem:[%s3 + $0x2] sm:$0x3]
          %v664 = vld [vmem:[%s3 + $0x4] sm:$0x3]
          %v665 = vld [vmem:[%s3 + $0x6] sm:$0x3]
          %v666 = vld [vmem:[%s3 + $0x8] sm:$0x3]
          %667 = vst.msk [vmem:[#allocation4] sm:$0x3] %vm651, %v662
          %668 = vst.msk [vmem:[#allocation4 + $0x2] sm:$0x3] %vm651, %v663
          %669 = vst.msk [vmem:[#allocation4 + $0x4] sm:$0x3] %vm651, %v664
          %670 = vst.msk [vmem:[#allocation4 + $0x6] sm:$0x3] %vm651, %v665
          %671 = vst.msk [vmem:[#allocation4 + $0x8] sm:$0x3] %vm651, %v666
          %v672 = vld [vmem:[%s4] sm:$0xff]
          %v673 = vld [vmem:[%s4 + $0x8] sm:$0xff]
          %v674 = vld [vmem:[%s4 + $0x10] sm:$0xff]
          %v675 = vld [vmem:[%s4 + $0x18] sm:$0xff]
          %vm676 = vcmask 130048
          %677 = vst.msk [vmem:[#allocation5] sm:$0xff] %vm676, %v672
          %678 = vst.msk [vmem:[#allocation5 + $0x8] sm:$0xff] %vm676, %v673
          %679 = vst.msk [vmem:[#allocation5 + $0x10] sm:$0xff] %vm676, %v674
          %680 = vst.msk [vmem:[#allocation5 + $0x18] sm:$0xff] %vm676, %v675
        $region108: #{processor_forward_seq.1} parent=71 // pred_fallthru
          _
        %v681 = vld [vmem:[%s645] sm:$0x3]
        %v682 = vld [vmem:[#allocation2] sm:$0x3]
        %v683 = vld [vmem:[#allocation4] sm:$0x3]
        %v684 = vld [vmem:[#allocation4 + $0x2] sm:$0x3]
        %v685 = vld [vmem:[#allocation4 + $0x4] sm:$0x3]
        %v686 = vld [vmem:[#allocation4 + $0x6] sm:$0x3]
        %v687 = vld [vmem:[#allocation4 + $0x8] sm:$0x3]
        %v688 = vld [vmem:[%s12] sm:$0xff]
        %v689 = vld [vmem:[%s12 + $0x8] sm:$0xff]
        %v690 = vld [vmem:[%s12 + $0x10] sm:$0xff]
        %v691 = vld [vmem:[%s12 + $0x18] sm:$0xff]
        %v692 = vld [vmem:[#allocation3] sm:$0x3]
        %s693 = scalar_lea.vmem [#allocation3], 4
        %v694 = vld [vmem:[%s693] sm:$0x3]
        %v695 = vld [vmem:[#allocation14] sm:$0x1]
        %v696 = vld [vmem:[#allocation9] sm:$0xff]
        %v697 = vld [vmem:[#allocation11] sm:$0xff]
        %v698 = vld [vmem:[#allocation11 + $0x8] sm:$0xff]
        %vm699 = vcmask 130048
        %v701 = vsel %vm699, %v682, 0
        %703 = vmatprep.subr.mxu0 0.0
        %704 = vmatpush1.msra.mxu0 %v697
        %705 = vmatprep.subr.mxu0 0.0
        %706 = vmatpush1.msra.mxu0 %v698
        %707 = vmatprep.subr.mxu0 0.0
        %708 = vmatpush1.msra.mxu0 0.0
        %709 = vmatprep.subr.mxu0 0.0
        %710 = vmatpush1.msra.mxu0 0.0
        %711 = vmatprep.subr.mxu0 0.0
        %712 = vmatpush1.msra.mxu0 0.0
        %713 = vmatprep.subr.mxu0 0.0
        %714 = vmatpush1.msra.mxu0 0.0
        %715 = vmatprep.subr.mxu0 0.0
        %716 = vmatpush1.msra.mxu0 0.0
        %717 = vmatprep.subr.mxu0 0.0
        %718 = vmatpush1.msra.mxu0 0.0
        %719 = vmatprep.subr.mxu0 0.0
        %720 = vmatpush1.msra.mxu0 0.0
        %721 = vmatprep.subr.mxu0 0.0
        %722 = vmatpush1.msra.mxu0 0.0
        %723 = vmatprep.subr.mxu0 0.0
        %724 = vmatpush1.msra.mxu0 0.0
        %725 = vmatprep.subr.mxu0 0.0
        %726 = vmatpush1.msra.mxu0 0.0
        %727 = vmatprep.subr.mxu0 0.0
        %728 = vmatpush1.msra.mxu0 0.0
        %729 = vmatprep.subr.mxu0 0.0
        %730 = vmatpush1.msra.mxu0 0.0
        %731 = vmatprep.subr.mxu0 0.0
        %732 = vmatpush1.msra.mxu0 0.0
        %733 = vmatprep.subr.mxu0 0.0
        %734 = vmatpush1.msra.mxu0 0.0
        %735 = vmatprep.subr.mxu0 0.0
        %736 = vmatpush1.msra.mxu0 0.0
        %737 = vmatprep.subr.mxu0 0.0
        %738 = vmatpush1.msra.mxu0 0.0
        %739 = vmatprep.subr.mxu0 0.0
        %740 = vmatpush1.msra.mxu0 0.0
        %741 = vmatprep.subr.mxu0 0.0
        %742 = vmatpush1.msra.mxu0 0.0
        %743 = vmatprep.subr.mxu0 0.0
        %744 = vmatpush1.msra.mxu0 0.0
        %745 = vmatprep.subr.mxu0 0.0
        %746 = vmatpush1.msra.mxu0 0.0
        %747 = vmatprep.subr.mxu0 0.0
        %748 = vmatpush1.msra.mxu0 0.0
        %749 = vmatprep.subr.mxu0 0.0
        %750 = vmatpush1.msra.mxu0 0.0
        %751 = vmatprep.subr.mxu0 0.0
        %752 = vmatpush1.msra.mxu0 0.0
        %753 = vmatprep.subr.mxu0 0.0
        %754 = vmatpush1.msra.mxu0 0.0
        %755 = vmatprep.subr.mxu0 0.0
        %756 = vmatpush1.msra.mxu0 0.0
        %757 = vmatprep.subr.mxu0 0.0
        %758 = vmatpush1.msra.mxu0 0.0
        %759 = vmatprep.subr.mxu0 0.0
        %760 = vmatpush1.msra.mxu0 0.0
        %761 = vmatprep.subr.mxu0 0.0
        %762 = vmatpush1.msra.mxu0 0.0
        %763 = vmatprep.subr.mxu0 0.0
        %764 = vmatpush1.msra.mxu0 0.0
        %765 = vmatprep.subr.mxu0 0.0
        %766 = vmatpush1.msra.mxu0 0.0
        %767 = vmatprep.mubr.f32.mxu0 0.0
        %768 = vmatmul.mubr.f32.gmra.mrb[0].mxu0 %v701
        %v769 = vpop.f32.mrb[0].mxu0
        %v770 = vadd.f32 0.0, %v769
        %v771 = vpop.f32.mrb[0].mxu0
        %772 = vdwg.mxu0
        %vm773 = vcmask 64512
        %v775 = vsel %vm773, %v681, 0
        %777 = vmatprep.subr.mxu0 0.0
        %778 = vmatpush1.msra.mxu0 %v696
        %779 = vmatprep.subr.mxu0 0.0
        %780 = vmatpush1.msra.mxu0 0.0
        %781 = vmatprep.subr.mxu0 0.0
        %782 = vmatpush1.msra.mxu0 0.0
        %783 = vmatprep.subr.mxu0 0.0
        %784 = vmatpush1.msra.mxu0 0.0
        %785 = vmatprep.subr.mxu0 0.0
        %786 = vmatpush1.msra.mxu0 0.0
        %787 = vmatprep.subr.mxu0 0.0
        %788 = vmatpush1.msra.mxu0 0.0
        %789 = vmatprep.subr.mxu0 0.0
        %790 = vmatpush1.msra.mxu0 0.0
        %791 = vmatprep.subr.mxu0 0.0
        %792 = vmatpush1.msra.mxu0 0.0
        %793 = vmatprep.subr.mxu0 0.0
        %794 = vmatpush1.msra.mxu0 0.0
        %795 = vmatprep.subr.mxu0 0.0
        %796 = vmatpush1.msra.mxu0 0.0
        %797 = vmatprep.subr.mxu0 0.0
        %798 = vmatpush1.msra.mxu0 0.0
        %799 = vmatprep.subr.mxu0 0.0
        %800 = vmatpush1.msra.mxu0 0.0
        %801 = vmatprep.subr.mxu0 0.0
        %802 = vmatpush1.msra.mxu0 0.0
        %803 = vmatprep.subr.mxu0 0.0
        %804 = vmatpush1.msra.mxu0 0.0
        %805 = vmatprep.subr.mxu0 0.0
        %806 = vmatpush1.msra.mxu0 0.0
        %807 = vmatprep.subr.mxu0 0.0
        %808 = vmatpush1.msra.mxu0 0.0
        %809 = vmatprep.subr.mxu0 0.0
        %810 = vmatpush1.msra.mxu0 0.0
        %811 = vmatprep.subr.mxu0 0.0
        %812 = vmatpush1.msra.mxu0 0.0
        %813 = vmatprep.subr.mxu0 0.0
        %814 = vmatpush1.msra.mxu0 0.0
        %815 = vmatprep.subr.mxu0 0.0
        %816 = vmatpush1.msra.mxu0 0.0
        %817 = vmatprep.subr.mxu0 0.0
        %818 = vmatpush1.msra.mxu0 0.0
        %819 = vmatprep.subr.mxu0 0.0
        %820 = vmatpush1.msra.mxu0 0.0
        %821 = vmatprep.subr.mxu0 0.0
        %822 = vmatpush1.msra.mxu0 0.0
        %823 = vmatprep.subr.mxu0 0.0
        %824 = vmatpush1.msra.mxu0 0.0
        %825 = vmatprep.subr.mxu0 0.0
        %826 = vmatpush1.msra.mxu0 0.0
        %827 = vmatprep.subr.mxu0 0.0
        %828 = vmatpush1.msra.mxu0 0.0
        %829 = vmatprep.subr.mxu0 0.0
        %830 = vmatpush1.msra.mxu0 0.0
        %831 = vmatprep.subr.mxu0 0.0
        %832 = vmatpush1.msra.mxu0 0.0
        %833 = vmatprep.subr.mxu0 0.0
        %834 = vmatpush1.msra.mxu0 0.0
        %835 = vmatprep.subr.mxu0 0.0
        %836 = vmatpush1.msra.mxu0 0.0
        %837 = vmatprep.subr.mxu0 0.0
        %838 = vmatpush1.msra.mxu0 0.0
        %839 = vmatprep.subr.mxu0 0.0
        %840 = vmatpush1.msra.mxu0 0.0
        %841 = vmatprep.mubr.f32.mxu0 0.0
        %842 = vmatmul.mubr.f32.gmra.mrb[0].mxu0 %v775
        %v843 = vpop.f32.mrb[0].mxu0
        %v844 = vadd.f32 %v770, %v843
        %v845 = vpop.f32.mrb[0].mxu0
        %846 = vdwg.mxu0
        %v847 = vld [vmem:[#allocation12] sm:$0xff]
        %v848 = vld [vmem:[#allocation12 + $0x8] sm:$0xff]
        %v849 = vld [vmem:[#allocation12 + $0x10] sm:$0xff]
        %v850 = vld [vmem:[#allocation12 + $0x18] sm:$0xff]
        %vm851 = vcmask 261120
        %v853 = vsel %vm851, %v692, 0
        %855 = vmatprep.subr.mxu0 0.0
        %856 = vmatpush1.msra.mxu0 %v847
        %857 = vmatprep.subr.mxu0 0.0
        %858 = vmatpush1.msra.mxu0 %v848
        %859 = vmatprep.subr.mxu0 0.0
        %860 = vmatpush1.msra.mxu0 %v849
        %861 = vmatprep.subr.mxu0 0.0
        %862 = vmatpush1.msra.mxu0 %v850
        %863 = vmatprep.subr.mxu0 0.0
        %864 = vmatpush1.msra.mxu0 0.0
        %865 = vmatprep.subr.mxu0 0.0
        %866 = vmatpush1.msra.mxu0 0.0
        %867 = vmatprep.subr.mxu0 0.0
        %868 = vmatpush1.msra.mxu0 0.0
        %869 = vmatprep.subr.mxu0 0.0
        %870 = vmatpush1.msra.mxu0 0.0
        %871 = vmatprep.subr.mxu0 0.0
        %872 = vmatpush1.msra.mxu0 0.0
        %873 = vmatprep.subr.mxu0 0.0
        %874 = vmatpush1.msra.mxu0 0.0
        %875 = vmatprep.subr.mxu0 0.0
        %876 = vmatpush1.msra.mxu0 0.0
        %877 = vmatprep.subr.mxu0 0.0
        %878 = vmatpush1.msra.mxu0 0.0
        %879 = vmatprep.subr.mxu0 0.0
        %880 = vmatpush1.msra.mxu0 0.0
        %881 = vmatprep.subr.mxu0 0.0
        %882 = vmatpush1.msra.mxu0 0.0
        %883 = vmatprep.subr.mxu0 0.0
        %884 = vmatpush1.msra.mxu0 0.0
        %885 = vmatprep.subr.mxu0 0.0
        %886 = vmatpush1.msra.mxu0 0.0
        %887 = vmatprep.subr.mxu0 0.0
        %888 = vmatpush1.msra.mxu0 0.0
        %889 = vmatprep.subr.mxu0 0.0
        %890 = vmatpush1.msra.mxu0 0.0
        %891 = vmatprep.subr.mxu0 0.0
        %892 = vmatpush1.msra.mxu0 0.0
        %893 = vmatprep.subr.mxu0 0.0
        %894 = vmatpush1.msra.mxu0 0.0
        %895 = vmatprep.subr.mxu0 0.0
        %896 = vmatpush1.msra.mxu0 0.0
        %897 = vmatprep.subr.mxu0 0.0
        %898 = vmatpush1.msra.mxu0 0.0
        %899 = vmatprep.subr.mxu0 0.0
        %900 = vmatpush1.msra.mxu0 0.0
        %901 = vmatprep.subr.mxu0 0.0
        %902 = vmatpush1.msra.mxu0 0.0
        %903 = vmatprep.subr.mxu0 0.0
        %904 = vmatpush1.msra.mxu0 0.0
        %905 = vmatprep.subr.mxu0 0.0
        %906 = vmatpush1.msra.mxu0 0.0
        %907 = vmatprep.subr.mxu0 0.0
        %908 = vmatpush1.msra.mxu0 0.0
        %909 = vmatprep.subr.mxu0 0.0
        %910 = vmatpush1.msra.mxu0 0.0
        %911 = vmatprep.subr.mxu0 0.0
        %912 = vmatpush1.msra.mxu0 0.0
        %913 = vmatprep.subr.mxu0 0.0
        %914 = vmatpush1.msra.mxu0 0.0
        %915 = vmatprep.subr.mxu0 0.0
        %916 = vmatpush1.msra.mxu0 0.0
        %917 = vmatprep.subr.mxu0 0.0
        %918 = vmatpush1.msra.mxu0 0.0
        %919 = vmatprep.mubr.f32.mxu0 0.0
        %920 = vmatmul.mubr.f32.gmra.mrb[0].mxu0 %v853
        %v921 = vpop.f32.mrb[0].mxu0
        %v922 = vadd.f32 0.0, %v921
        %v923 = vpop.f32.mrb[0].mxu0
        %924 = vdwg.mxu0
        %v925 = vadd.f32 %v844, %v922
        %v927 = vlaneseq
        %v928 = vshrl.u32 %v927, 7
        %v929 = vsub.s32 0, %v928
        %v930 = vrot.slane %v695, %v929
        %v932 = vadd.f32 %v925, %v930
        %v933 = vxor.u32 %v932, 2147483648
        %v934 = vmul.f32 %v933, 1.442695
        %v935 = vpow.pop %v934
        %v936 = vadd.f32 %v935, 1.0
        %v937 = vrcp.pop %v936
        %v938 = vmul.f32 1.0, %v937
        %v939 = vtanh.pop %v932
        %941 = vrot.lane.b32.xlu0 %v694, 32
        %v942 = vpop.permute.xlu0 %941
        %v944 = vmul.f32 %v938, %v942
        %946 = vrot.lane.b32.xlu0 %v939, 64
        %v947 = vpop.permute.xlu0 %946
        %v949 = vmul.f32 %v938, %v947
        %951 = vrot.lane.b32.xlu0 %v949, 32
        %v952 = vpop.permute.xlu0 %951
        %v954 = vadd.f32 %v944, %v952
        %v955 = vtanh.pop %v954
        %957 = vrot.lane.b32.xlu0 %v955, 64
        %v958 = vpop.permute.xlu0 %957
        %v960 = vmul.f32 %v938, %v958
        %962 = vrot.lane.b32.xlu0 %v960, 32
        %v963 = vpop.permute.xlu0 %962
        %vm965 = vcmask 254976
        %966 = vst.msk [vmem:[#allocation3] sm:$0x3] %vm965, %v963
        %968 = vrot.lane.b32.xlu0 %v954, 96
        %v969 = vpop.permute.xlu0 %968
        %971 = vst.msk [vmem:[%s693] sm:$0x3] %vm965, %v969
        %s972 = scalar_lea.vmem [#allocation3], 2
        %v973 = vld [vmem:[%s972] sm:$0x3]
        %s974 = scalar_lea.vmem [#allocation3], 6
        %v975 = vld [vmem:[%s974] sm:$0x3]
        %s976 = scalar_lea.vmem [#allocation14], 1
        %v977 = vld [vmem:[%s976] sm:$0x1]
        %s978 = scalar_lea.vmem [#allocation12], 32
        %v979 = vld [vmem:[%s978] sm:$0xff]
        %v980 = vld [vmem:[%s978 + $0x8] sm:$0xff]
        %v981 = vld [vmem:[%s978 + $0x10] sm:$0xff]
        %v982 = vld [vmem:[%s978 + $0x18] sm:$0xff]
        %s983 = scalar_lea.vmem [#allocation12], 64
        %v984 = vld [vmem:[%s983] sm:$0xff]
        %v985 = vld [vmem:[%s983 + $0x8] sm:$0xff]
        %v986 = vld [vmem:[%s983 + $0x10] sm:$0xff]
        %v987 = vld [vmem:[%s983 + $0x18] sm:$0xff]
        %v989 = vsel %vm851, %v973, 0
        %991 = vmatprep.subr.mxu0 0.0
        %992 = vmatpush1.msra.mxu0 %v984
        %993 = vmatprep.subr.mxu0 0.0
        %994 = vmatpush1.msra.mxu0 %v985
        %995 = vmatprep.subr.mxu0 0.0
        %996 = vmatpush1.msra.mxu0 %v986
        %997 = vmatprep.subr.mxu0 0.0
        %998 = vmatpush1.msra.mxu0 %v987
        %999 = vmatprep.subr.mxu0 0.0
        %1000 = vmatpush1.msra.mxu0 0.0
        %1001 = vmatprep.subr.mxu0 0.0
        %1002 = vmatpush1.msra.mxu0 0.0
        %1003 = vmatprep.subr.mxu0 0.0
        %1004 = vmatpush1.msra.mxu0 0.0
        %1005 = vmatprep.subr.mxu0 0.0
        %1006 = vmatpush1.msra.mxu0 0.0
        %1007 = vmatprep.subr.mxu0 0.0
        %1008 = vmatpush1.msra.mxu0 0.0
        %1009 = vmatprep.subr.mxu0 0.0
        %1010 = vmatpush1.msra.mxu0 0.0
        %1011 = vmatprep.subr.mxu0 0.0
        %1012 = vmatpush1.msra.mxu0 0.0
        %1013 = vmatprep.subr.mxu0 0.0
        %1014 = vmatpush1.msra.mxu0 0.0
        %1015 = vmatprep.subr.mxu0 0.0
        %1016 = vmatpush1.msra.mxu0 0.0
        %1017 = vmatprep.subr.mxu0 0.0
        %1018 = vmatpush1.msra.mxu0 0.0
        %1019 = vmatprep.subr.mxu0 0.0
        %1020 = vmatpush1.msra.mxu0 0.0
        %1021 = vmatprep.subr.mxu0 0.0
        %1022 = vmatpush1.msra.mxu0 0.0
        %1023 = vmatprep.subr.mxu0 0.0
        %1024 = vmatpush1.msra.mxu0 0.0
        %1025 = vmatprep.subr.mxu0 0.0
        %1026 = vmatpush1.msra.mxu0 0.0
        %1027 = vmatprep.subr.mxu0 0.0
        %1028 = vmatpush1.msra.mxu0 0.0
        %1029 = vmatprep.subr.mxu0 0.0
        %1030 = vmatpush1.msra.mxu0 0.0
        %1031 = vmatprep.subr.mxu0 0.0
        %1032 = vmatpush1.msra.mxu0 0.0
        %1033 = vmatprep.subr.mxu0 0.0
        %1034 = vmatpush1.msra.mxu0 0.0
        %1035 = vmatprep.subr.mxu0 0.0
        %1036 = vmatpush1.msra.mxu0 0.0
        %1037 = vmatprep.subr.mxu0 0.0
        %1038 = vmatpush1.msra.mxu0 0.0
        %1039 = vmatprep.subr.mxu0 0.0
        %1040 = vmatpush1.msra.mxu0 0.0
        %1041 = vmatprep.subr.mxu0 0.0
        %1042 = vmatpush1.msra.mxu0 0.0
        %1043 = vmatprep.subr.mxu0 0.0
        %1044 = vmatpush1.msra.mxu0 0.0
        %1045 = vmatprep.subr.mxu0 0.0
        %1046 = vmatpush1.msra.mxu0 0.0
        %1047 = vmatprep.subr.mxu0 0.0
        %1048 = vmatpush1.msra.mxu0 0.0
        %1049 = vmatprep.subr.mxu0 0.0
        %1050 = vmatpush1.msra.mxu0 0.0
        %1051 = vmatprep.subr.mxu0 0.0
        %1052 = vmatpush1.msra.mxu0 0.0
        %1053 = vmatprep.subr.mxu0 0.0
        %1054 = vmatpush1.msra.mxu0 0.0
        %1055 = vmatprep.mubr.f32.mxu0 0.0
        %1056 = vmatmul.mubr.f32.gmra.mrb[0].mxu0 %v989
        %v1057 = vpop.f32.mrb[0].mxu0
        %v1058 = vadd.f32 0.0, %v1057
        %v1059 = vpop.f32.mrb[0].mxu0
        %1060 = vdwg.mxu0
        %v1061 = vsel %vm851, %v963, 0
        %1063 = vmatprep.subr.mxu0 0.0
        %1064 = vmatpush1.msra.mxu0 %v979
        %1065 = vmatprep.subr.mxu0 0.0
        %1066 = vmatpush1.msra.mxu0 %v980
        %1067 = vmatprep.subr.mxu0 0.0
        %1068 = vmatpush1.msra.mxu0 %v981
        %1069 = vmatprep.subr.mxu0 0.0
        %1070 = vmatpush1.msra.mxu0 %v982
        %1071 = vmatprep.subr.mxu0 0.0
        %1072 = vmatpush1.msra.mxu0 0.0
        %1073 = vmatprep.subr.mxu0 0.0
        %1074 = vmatpush1.msra.mxu0 0.0
        %1075 = vmatprep.subr.mxu0 0.0
        %1076 = vmatpush1.msra.mxu0 0.0
        %1077 = vmatprep.subr.mxu0 0.0
        %1078 = vmatpush1.msra.mxu0 0.0
        %1079 = vmatprep.subr.mxu0 0.0
        %1080 = vmatpush1.msra.mxu0 0.0
        %1081 = vmatprep.subr.mxu0 0.0
        %1082 = vmatpush1.msra.mxu0 0.0
        %1083 = vmatprep.subr.mxu0 0.0
        %1084 = vmatpush1.msra.mxu0 0.0
        %1085 = vmatprep.subr.mxu0 0.0
        %1086 = vmatpush1.msra.mxu0 0.0
        %1087 = vmatprep.subr.mxu0 0.0
        %1088 = vmatpush1.msra.mxu0 0.0
        %1089 = vmatprep.subr.mxu0 0.0
        %1090 = vmatpush1.msra.mxu0 0.0
        %1091 = vmatprep.subr.mxu0 0.0
        %1092 = vmatpush1.msra.mxu0 0.0
        %1093 = vmatprep.subr.mxu0 0.0
        %1094 = vmatpush1.msra.mxu0 0.0
        %1095 = vmatprep.subr.mxu0 0.0
        %1096 = vmatpush1.msra.mxu0 0.0
        %1097 = vmatprep.subr.mxu0 0.0
        %1098 = vmatpush1.msra.mxu0 0.0
        %1099 = vmatprep.subr.mxu0 0.0
        %1100 = vmatpush1.msra.mxu0 0.0
        %1101 = vmatprep.subr.mxu0 0.0
        %1102 = vmatpush1.msra.mxu0 0.0
        %1103 = vmatprep.subr.mxu0 0.0
        %1104 = vmatpush1.msra.mxu0 0.0
        %1105 = vmatprep.subr.mxu0 0.0
        %1106 = vmatpush1.msra.mxu0 0.0
        %1107 = vmatprep.subr.mxu0 0.0
        %1108 = vmatpush1.msra.mxu0 0.0
        %1109 = vmatprep.subr.mxu0 0.0
        %1110 = vmatpush1.msra.mxu0 0.0
        %1111 = vmatprep.subr.mxu0 0.0
        %1112 = vmatpush1.msra.mxu0 0.0
        %1113 = vmatprep.subr.mxu0 0.0
        %1114 = vmatpush1.msra.mxu0 0.0
        %1115 = vmatprep.subr.mxu0 0.0
        %1116 = vmatpush1.msra.mxu0 0.0
        %1117 = vmatprep.subr.mxu0 0.0
        %1118 = vmatpush1.msra.mxu0 0.0
        %1119 = vmatprep.subr.mxu0 0.0
        %1120 = vmatpush1.msra.mxu0 0.0
        %1121 = vmatprep.subr.mxu0 0.0
        %1122 = vmatpush1.msra.mxu0 0.0
        %1123 = vmatprep.subr.mxu0 0.0
        %1124 = vmatpush1.msra.mxu0 0.0
        %1125 = vmatprep.subr.mxu0 0.0
        %1126 = vmatpush1.msra.mxu0 0.0
        %1127 = vmatprep.mubr.f32.mxu0 0.0
        %1128 = vmatmul.mubr.f32.gmra.mrb[0].mxu0 %v1061
        %v1129 = vpop.f32.mrb[0].mxu0
        %v1130 = vadd.f32 %v1058, %v1129
        %v1131 = vpop.f32.mrb[0].mxu0
        %1132 = vdwg.mxu0
        %v1134 = vlaneseq
        %v1135 = vshrl.u32 %v1134, 7
        %v1136 = vsub.s32 0, %v1135
        %v1137 = vrot.slane %v977, %v1136
        %v1139 = vadd.f32 %v1130, %v1137
        %v1140 = vxor.u32 %v1139, 2147483648
        %v1141 = vmul.f32 %v1140, 1.442695
        %v1142 = vpow.pop %v1141
        %v1143 = vadd.f32 %v1142, 1.0
        %v1144 = vrcp.pop %v1143
        %v1145 = vmul.f32 1.0, %v1144
        %v1146 = vtanh.pop %v1139
        %1148 = vrot.lane.b32.xlu0 %v975, 32
        %v1149 = vpop.permute.xlu0 %1148
        %v1151 = vmul.f32 %v1145, %v1149
        %1153 = vrot.lane.b32.xlu0 %v1146, 64
        %v1154 = vpop.permute.xlu0 %1153
        %v1156 = vmul.f32 %v1145, %v1154
        %1158 = vrot.lane.b32.xlu0 %v1156, 32
        %v1159 = vpop.permute.xlu0 %1158
        %v1161 = vadd.f32 %v1151, %v1159
        %v1162 = vtanh.pop %v1161
        %1164 = vrot.lane.b32.xlu0 %v1162, 64
        %v1165 = vpop.permute.xlu0 %1164
        %v1167 = vmul.f32 %v1145, %v1165
        %1169 = vrot.lane.b32.xlu0 %v1167, 32
        %v1170 = vpop.permute.xlu0 %1169
        %1172 = vst.msk [vmem:[%s972] sm:$0x3] %vm965, %v1170
        %1174 = vrot.lane.b32.xlu0 %v1161, 96
        %v1175 = vpop.permute.xlu0 %1174
        %1177 = vst.msk [vmem:[%s974] sm:$0x3] %vm965, %v1175
        %v1178 = vld [vmem:[#allocation15] sm:$0xff]
        %v1179 = vld [vmem:[#allocation15 + $0x8] sm:$0xff]
        %v1180 = vld [vmem:[#allocation15 + $0x10] sm:$0xff]
        %v1181 = vld [vmem:[#allocation15 + $0x18] sm:$0xff]
        %v1182 = vld [vmem:[#allocation17] sm:$0x1]
        %v1184 = vlaneseq
        %v1185 = vshrl.u32 %v1184, 7
        %v1186 = vsub.s32 0, %v1185
        %v1187 = vrot.slane %v1182, %v1186
        %v1189 = vsel %vm851, %v1170, 0
        %1191 = vmatprep.subr.mxu0 0.0
        %1192 = vmatpush1.msra.mxu0 %v1178
        %1193 = vmatprep.subr.mxu0 0.0
        %1194 = vmatpush1.msra.mxu0 %v1179
        %1195 = vmatprep.subr.mxu0 0.0
        %1196 = vmatpush1.msra.mxu0 %v1180
        %1197 = vmatprep.subr.mxu0 0.0
        %1198 = vmatpush1.msra.mxu0 %v1181
        %1199 = vmatprep.subr.mxu0 0.0
        %1200 = vmatpush1.msra.mxu0 0.0
        %1201 = vmatprep.subr.mxu0 0.0
        %1202 = vmatpush1.msra.mxu0 0.0
        %1203 = vmatprep.subr.mxu0 0.0
        %1204 = vmatpush1.msra.mxu0 0.0
        %1205 = vmatprep.subr.mxu0 0.0
        %1206 = vmatpush1.msra.mxu0 0.0
        %1207 = vmatprep.subr.mxu0 0.0
        %1208 = vmatpush1.msra.mxu0 0.0
        %1209 = vmatprep.subr.mxu0 0.0
        %1210 = vmatpush1.msra.mxu0 0.0
        %1211 = vmatprep.subr.mxu0 0.0
        %1212 = vmatpush1.msra.mxu0 0.0
        %1213 = vmatprep.subr.mxu0 0.0
        %1214 = vmatpush1.msra.mxu0 0.0
        %1215 = vmatprep.subr.mxu0 0.0
        %1216 = vmatpush1.msra.mxu0 0.0
        %1217 = vmatprep.subr.mxu0 0.0
        %1218 = vmatpush1.msra.mxu0 0.0
        %1219 = vmatprep.subr.mxu0 0.0
        %1220 = vmatpush1.msra.mxu0 0.0
        %1221 = vmatprep.subr.mxu0 0.0
        %1222 = vmatpush1.msra.mxu0 0.0
        %1223 = vmatprep.subr.mxu0 0.0
        %1224 = vmatpush1.msra.mxu0 0.0
        %1225 = vmatprep.subr.mxu0 0.0
        %1226 = vmatpush1.msra.mxu0 0.0
        %1227 = vmatprep.subr.mxu0 0.0
        %1228 = vmatpush1.msra.mxu0 0.0
        %1229 = vmatprep.subr.mxu0 0.0
        %1230 = vmatpush1.msra.mxu0 0.0
        %1231 = vmatprep.subr.mxu0 0.0
        %1232 = vmatpush1.msra.mxu0 0.0
        %1233 = vmatprep.subr.mxu0 0.0
        %1234 = vmatpush1.msra.mxu0 0.0
        %1235 = vmatprep.subr.mxu0 0.0
        %1236 = vmatpush1.msra.mxu0 0.0
        %1237 = vmatprep.subr.mxu0 0.0
        %1238 = vmatpush1.msra.mxu0 0.0
        %1239 = vmatprep.subr.mxu0 0.0
        %1240 = vmatpush1.msra.mxu0 0.0
        %1241 = vmatprep.subr.mxu0 0.0
        %1242 = vmatpush1.msra.mxu0 0.0
        %1243 = vmatprep.subr.mxu0 0.0
        %1244 = vmatpush1.msra.mxu0 0.0
        %1245 = vmatprep.subr.mxu0 0.0
        %1246 = vmatpush1.msra.mxu0 0.0
        %1247 = vmatprep.subr.mxu0 0.0
        %1248 = vmatpush1.msra.mxu0 0.0
        %1249 = vmatprep.subr.mxu0 0.0
        %1250 = vmatpush1.msra.mxu0 0.0
        %1251 = vmatprep.subr.mxu0 0.0
        %1252 = vmatpush1.msra.mxu0 0.0
        %1253 = vmatprep.subr.mxu0 0.0
        %1254 = vmatpush1.msra.mxu0 0.0
        %1255 = vmatprep.mubr.f32.mxu0 0.0
        %1256 = vmatmul.mubr.f32.gmra.mrb[0].mxu0 %v1189
        %v1257 = vpop.f32.mrb[0].mxu0
        %v1258 = vadd.f32 %v1187, %v1257
        %v1259 = vpop.f32.mrb[0].mxu0
        %1260 = vdwg.mxu0
        %v1261 = vxor.u32 %v1258, 2147483648
        %v1262 = vmul.f32 %v1261, 1.442695
        %v1263 = vpow.pop %v1262
        %v1264 = vadd.f32 %v1263, 1.0
        %v1265 = vrcp.pop %v1264
        %v1266 = vmul.f32 1.0, %v1265
        %v1267 = vmul.f32 %v688, %v688
        %v1268 = vmul.f32 %v689, %v689
        %v1269 = vmul.f32 %v690, %v690
        %v1270 = vmul.f32 %v691, %v691
        %v1271 = vsel %vm773, %v1267, 0.0
        %1272 = vadd.xlane.f32.xlu0 %v1271
        %v1273 = vpop.xlane.xlu0 %1272
        %v1274 = vsel %vm773, %v1268, 0.0
        %1275 = vadd.xlane.f32.xlu0 %v1274
        %v1276 = vpop.xlane.xlu0 %1275
        %v1277 = vsel %vm773, %v1269, 0.0
        %1278 = vadd.xlane.f32.xlu0 %v1277
        %v1279 = vpop.xlane.xlu0 %1278
        %v1280 = vsel %vm773, %v1270, 0.0
        %1281 = vadd.xlane.f32.xlu0 %v1280
        %v1282 = vpop.xlane.xlu0 %1281
        %v1283 = vadd.f32 %v1273, 1e-08
        %v1284 = vadd.f32 %v1276, 1e-08
        %v1285 = vadd.f32 %v1279, 1e-08
        %v1286 = vadd.f32 %v1282, 1e-08
        %v1287 = vrsqrt.pop %v1283
        %v1288 = vrsqrt.pop %v1284
        %v1289 = vrsqrt.pop %v1285
        %v1290 = vrsqrt.pop %v1286
        %1292 = vset.pattern.permute.xlu0 16
        %1293 = vperm.xlu0 %1292, %v1266
        %v1294 = vpop.permute.xlu0 %1293
        %v1296 = vmul.f32 %v1294, %v683
        %v1297 = vsub.f32 1.0, %v1296
        %1298 = vset.pattern.permute.xlu0 17
        %1299 = vperm.xlu0 %1298, %v1266
        %v1300 = vpop.permute.xlu0 %1299
        %v1302 = vmul.f32 %v1300, %v684
        %v1303 = vsub.f32 1.0, %v1302
        %v1304 = vmul.f32 %v1297, %v1303
        %v1305 = vlaneseq
        %v1306 = vand.u32 %v1305, 127
        %v1307 = vlaneseq
        %v1308 = vshrl.u32 %v1307, 7
        %v1309 = vadd.s32 %v1308, 8
        %vm1310 = vcmp.le.s32.totalorder %v1306, %v1308
        %vm1311 = vcmp.le.s32.totalorder %v1306, %v1309
        %vm1312 = vcmp.eq.s32.totalorder %v1306, %v1308
        %vm1313 = vcmp.eq.s32.totalorder %v1306, %v1309
        %v1314 = vadd.f32 %v686, %v685
        %v1315 = vmul.f32 %v686, %v685
        %v1316 = vsub.f32 %v1314, %v1315
        %v1317 = vmul.f32 %v1316, %v1304
        %s1318 = scalar_lea.vmem [#allocation4], 6
        %vm1319 = vcmask 123904
        %1320 = vst.msk [vmem:[%s1318] sm:$0x3] %vm1319, %v1317
        %v1321 = vlaneseq
        %v1322 = vshrl.u32 %v1321, 7
        %v1323 = vsub.s32 0, %v1322
        %v1324 = vrot.slane %v1317, %v1323
        %1326 = vbcast.lane.b32.xlu0 %v1324, 256
        %v1327 = vpop.permute.xlu0 %1326
        %s1329 = sor.u32 256, 8
        %1330 = vbcast.lane.b32.xlu0 %v1324, %s1329
        %v1331 = vpop.permute.xlu0 %1330
        %v1332 = vlaneseq
        %v1333 = vshrl.u32 %v1332, 7
        %v1334 = vsub.s32 1, %v1333
        %v1335 = vrot.slane %v1317, %v1334
        %1337 = vbcast.lane.b32.xlu0 %v1335, 256
        %v1338 = vpop.permute.xlu0 %1337
        %s1340 = sor.u32 256, 8
        %1341 = vbcast.lane.b32.xlu0 %v1335, %s1340
        %v1342 = vpop.permute.xlu0 %1341
        %v1345 = vunpack.c.l.s4 1966171168
        %v1346 = vunpack.c.0.s8 %v1345
        %v1347 = vlaneseq
        %v1348 = vshrl.u32 %v1347, 7
        %v1349 = vsub.s32 %v1346, %v1348
        %v1350 = vrot.slane %v1317, %v1349
        %v1351 = vcombine.high %v1350, %v1350
        %v1353 = vunpack.c.l.s4 1966171168
        %v1354 = vunpack.c.0.s8 %v1353
        %v1355 = vlaneseq
        %v1356 = vshrl.u32 %v1355, 7
        %v1357 = vsub.s32 %v1354, %v1356
        %v1358 = vrot.slane %v1350, %v1357
        %v1360 = vunpack.c.l.s4 1966171168
        %v1361 = vunpack.c.0.s8 %v1360
        %v1362 = vlaneseq
        %v1363 = vshrl.u32 %v1362, 7
        %v1364 = vsub.s32 %v1361, %v1363
        %v1365 = vrot.slane %v1351, %v1364
        %v1366 = vlaneseq
        %v1367 = vshrl.u32 %v1366, 7
        %v1368 = vsub.s32 0, %v1367
        %v1369 = vrot.slane %v1358, %v1368
        %v1370 = vlaneseq
        %v1371 = vshrl.u32 %v1370, 7
        %v1372 = vsub.s32 0, %v1371
        %v1373 = vrot.slane %v1365, %v1372
        %vm1376 = vcmp.lt.f32.partialorder %v1369, %v1327
        %vm1377 = vcmp.lt.f32.partialorder %v1369, %v1331
        %vm1378 = vcmp.lt.f32.partialorder %v1373, %v1338
        %vm1379 = vcmp.lt.f32.partialorder %v1373, %v1342
        %vm1380 = vcmp.eq.f32.partialorder %v1369, %v1327
        %vm1381 = vcmp.eq.f32.partialorder %v1369, %v1331
        %vm1382 = vcmp.eq.f32.partialorder %v1373, %v1338
        %vm1383 = vcmp.eq.f32.partialorder %v1373, %v1342
        %v1384 = vsel %vm1310, 1, 0
        %v1385 = vsel %vm1311, 1, 0
        %vm1386 = vcmp.eq.s32.totalorder %v1384, 1
        %vm1387 = vcmp.eq.s32.totalorder %v1385, 1
        %vm1388 = vmand %vm1380, %vm1386
        %vm1389 = vmand %vm1381, %vm1387
        %vm1390 = vmand %vm1382, %vm1386
        %vm1391 = vmand %vm1383, %vm1387
        %vm1392 = vmor %vm1376, %vm1388
        %vm1393 = vmor %vm1377, %vm1389
        %vm1394 = vmor %vm1378, %vm1390
        %vm1395 = vmor %vm1379, %vm1391
        %v1396 = vsel %vm1392, %v1369, 1.0
        %v1397 = vsel %vm1393, %v1369, 1.0
        %v1398 = vsel %vm1394, %v1373, 1.0
        %v1399 = vsel %vm1395, %v1373, 1.0
        %1404 = vrot.lane.b32.xlu0 %v1396, 120
        %v1405 = vpop.permute.xlu0 %1404
        %1406 = vrot.lane.b32.xlu0 %v1397, 120
        %v1407 = vpop.permute.xlu0 %1406
        %1408 = vrot.lane.b32.xlu0 %v1398, 120
        %v1409 = vpop.permute.xlu0 %1408
        %1410 = vrot.lane.b32.xlu0 %v1399, 120
        %v1411 = vpop.permute.xlu0 %1410
        %v1416 = vmul.f32 %v1396, %v1405
        %v1417 = vmul.f32 %v1397, %v1407
        %v1418 = vmul.f32 %v1398, %v1409
        %v1419 = vmul.f32 %v1399, %v1411
        %1424 = vrot.lane.b32.xlu0 %v1416, 124
        %v1425 = vpop.permute.xlu0 %1424
        %1426 = vrot.lane.b32.xlu0 %v1417, 124
        %v1427 = vpop.permute.xlu0 %1426
        %1428 = vrot.lane.b32.xlu0 %v1418, 124
        %v1429 = vpop.permute.xlu0 %1428
        %1430 = vrot.lane.b32.xlu0 %v1419, 124
        %v1431 = vpop.permute.xlu0 %1430
        %v1436 = vmul.f32 %v1416, %v1425
        %v1437 = vmul.f32 %v1417, %v1427
        %v1438 = vmul.f32 %v1418, %v1429
        %v1439 = vmul.f32 %v1419, %v1431
        %1444 = vrot.lane.b32.xlu0 %v1436, 126
        %v1445 = vpop.permute.xlu0 %1444
        %1446 = vrot.lane.b32.xlu0 %v1437, 126
        %v1447 = vpop.permute.xlu0 %1446
        %1448 = vrot.lane.b32.xlu0 %v1438, 126
        %v1449 = vpop.permute.xlu0 %1448
        %1450 = vrot.lane.b32.xlu0 %v1439, 126
        %v1451 = vpop.permute.xlu0 %1450
        %v1456 = vmul.f32 %v1436, %v1445
        %v1457 = vmul.f32 %v1437, %v1447
        %v1458 = vmul.f32 %v1438, %v1449
        %v1459 = vmul.f32 %v1439, %v1451
        %1464 = vrot.lane.b32.xlu0 %v1456, 127
        %v1465 = vpop.permute.xlu0 %1464
        %1466 = vrot.lane.b32.xlu0 %v1457, 127
        %v1467 = vpop.permute.xlu0 %1466
        %1468 = vrot.lane.b32.xlu0 %v1458, 127
        %v1469 = vpop.permute.xlu0 %1468
        %1470 = vrot.lane.b32.xlu0 %v1459, 127
        %v1471 = vpop.permute.xlu0 %1470
        %v1476 = vmul.f32 %v1456, %v1465
        %v1477 = vmul.f32 %v1457, %v1467
        %v1478 = vmul.f32 %v1458, %v1469
        %v1479 = vmul.f32 %v1459, %v1471
        %v1480 = vsub.f32 1.0, %v1317
        %1485 = vset.pattern.permute.xlu0 0
        %1486 = vperm.xlu0 %1485, %v1476
        %v1487 = vpop.permute.xlu0 %1486
        %1488 = vset.pattern.permute.xlu0 0
        %1489 = vperm.xlu0 %1488, %v1477
        %v1490 = vpop.permute.xlu0 %1489
        %1491 = vset.pattern.permute.xlu0 0
        %1492 = vperm.xlu0 %1491, %v1478
        %v1493 = vpop.permute.xlu0 %1492
        %1494 = vset.pattern.permute.xlu0 0
        %1495 = vperm.xlu0 %1494, %v1479
        %v1496 = vpop.permute.xlu0 %1495
        %v1497 = vlaneseq
        %v1498 = vshrl.u32 %v1497, 7
        %v1499 = vsub.s32 %v1306, %v1498
        %v1500 = vrot.slane %v1487, %v1499
        %v1501 = vadd.s32 %v1306, 4294967288
        %v1502 = vlaneseq
        %v1503 = vshrl.u32 %v1502, 7
        %v1504 = vsub.s32 %v1501, %v1503
        %v1505 = vrot.slane %v1490, %v1504
        %vm1506 = vcmask 130112
        %v1507 = vsel %vm1506, %v1505, %v1500
        %v1508 = vlaneseq
        %v1509 = vshrl.u32 %v1508, 7
        %v1510 = vsub.s32 %v1306, %v1509
        %v1511 = vrot.slane %v1493, %v1510
        %v1512 = vlaneseq
        %v1513 = vshrl.u32 %v1512, 7
        %v1514 = vsub.s32 %v1501, %v1513
        %v1515 = vrot.slane %v1496, %v1514
        %v1516 = vsel %vm1506, %v1515, %v1511
        %vm1517 = vcmask 1041409
        %v1518 = vsel %vm1517, %v1516, %v1507
        %v1520 = vmul.f32 %v1480, %v1518
        %v1521 = vmax.f32 %v1258, 0.0
        %v1522 = vand.u32 2147483647, %v1258
        %v1523 = vsub.f32 0.0, %v1522
        %v1524 = vmul.f32 %v1523, 1.442695
        %v1525 = vpow.pop %v1524
        %v1526 = vadd.f32 %v1525, 1.0
        %v1527 = vlog2.pop %v1526
        %v1528 = vmul.f32 %v1527, 0.6931472
        %v1529 = vadd.f32 %v1521, %v1528
        %v1530 = vadd.f32 %v1529, 1.0
        %v1533 = vunpack.c.l.s4 1966171168
        %v1534 = vunpack.c.0.s8 %v1533
        %v1535 = vlaneseq
        %v1536 = vshrl.u32 %v1535, 7
        %v1537 = vsub.s32 %v1534, %v1536
        %v1538 = vrot.slane %v1258, %v1537
        %v1539 = vcombine.high %v1538, %v1538
        %v1541 = vunpack.c.l.s4 1966171168
        %v1542 = vunpack.c.0.s8 %v1541
        %v1543 = vlaneseq
        %v1544 = vshrl.u32 %v1543, 7
        %v1545 = vsub.s32 %v1542, %v1544
        %v1546 = vrot.slane %v1538, %v1545
        %v1548 = vunpack.c.l.s4 1966171168
        %v1549 = vunpack.c.0.s8 %v1548
        %v1550 = vlaneseq
        %v1551 = vshrl.u32 %v1550, 7
        %v1552 = vsub.s32 %v1549, %v1551
        %v1553 = vrot.slane %v1539, %v1552
        %v1554 = vlaneseq
        %v1555 = vshrl.u32 %v1554, 7
        %v1556 = vsub.s32 0, %v1555
        %v1557 = vrot.slane %v1546, %v1556
        %v1558 = vlaneseq
        %v1559 = vshrl.u32 %v1558, 7
        %v1560 = vsub.s32 0, %v1559
        %v1561 = vrot.slane %v1553, %v1560
        %1568 = vrot.lane.b32.xlu0 %v688, 26
        %v1569 = vpop.permute.xlu0 %1568
        %1570 = vrot.lane.b32.xlu0 %v689, 26
        %v1571 = vpop.permute.xlu0 %1570
        %1572 = vrot.lane.b32.xlu0 %v690, 26
        %v1573 = vpop.permute.xlu0 %1572
        %1574 = vrot.lane.b32.xlu0 %v691, 26
        %v1575 = vpop.permute.xlu0 %1574
        %v1580 = vmul.f32 %v1557, %v1569
        %v1581 = vmul.f32 %v1557, %v1571
        %v1582 = vmul.f32 %v1561, %v1573
        %v1583 = vmul.f32 %v1561, %v1575
        %1588 = vrot.lane.b32.xlu0 %v1580, 102
        %v1589 = vpop.permute.xlu0 %1588
        %1590 = vrot.lane.b32.xlu0 %v1581, 102
        %v1591 = vpop.permute.xlu0 %1590
        %1592 = vrot.lane.b32.xlu0 %v1582, 102
        %v1593 = vpop.permute.xlu0 %1592
        %1594 = vrot.lane.b32.xlu0 %v1583, 102
        %v1595 = vpop.permute.xlu0 %1594
        %v1600 = vsel %vm773, %v1589, 0.0
        %1601 = vadd.xlane.f32.xlu0 %v1600
        %v1602 = vpop.xlane.xlu0 %1601
        %v1603 = vsel %vm773, %v1591, 0.0
        %1604 = vadd.xlane.f32.xlu0 %v1603
        %v1605 = vpop.xlane.xlu0 %1604
        %v1606 = vsel %vm773, %v1593, 0.0
        %1607 = vadd.xlane.f32.xlu0 %v1606
        %v1608 = vpop.xlane.xlu0 %1607
        %v1609 = vsel %vm773, %v1595, 0.0
        %1610 = vadd.xlane.f32.xlu0 %v1609
        %v1611 = vpop.xlane.xlu0 %1610
        %v1612 = vmul.f32 %v1258, %v1258
        %1614 = vrot.lane.b32.xlu0 %v1612, 102
        %v1615 = vpop.permute.xlu0 %1614
        %vm1617 = vcmask 58368
        %v1618 = vsel %vm1617, %v1615, 0.0
        %1619 = vadd.xlane.f32.xlu0 %v1618
        %v1620 = vpop.xlane.xlu0 %1619
        %v1621 = vadd.f32 %v1620, 1e-08
        %v1622 = vrsqrt.pop %v1621
        %v1624 = vlaneseq
        %v1625 = vshrl.u32 %v1624, 7
        %v1626 = vsub.s32 0, %v1625
        %v1627 = vrot.slane %v1622, %v1626
        %v1628 = vlaneseq
        %v1629 = vshrl.u32 %v1628, 7
        %v1630 = vsub.s32 1, %v1629
        %v1631 = vrot.slane %v1622, %v1630
        %v1634 = vmul.f32 %v1602, %v1627
        %v1635 = vmul.f32 %v1605, %v1627
        %v1636 = vmul.f32 %v1608, %v1631
        %v1637 = vmul.f32 %v1611, %v1631
        %v1638 = vmul.f32 %v1634, %v1287
        %v1639 = vmul.f32 %v1635, %v1288
        %v1640 = vmul.f32 %v1636, %v1289
        %v1641 = vmul.f32 %v1637, %v1290
        %1643 = vset.pattern.permute.xlu0 34
        %1644 = vperm.xlu0 %1643, %v1530
        %v1645 = vpop.permute.xlu0 %1644
        %v1646 = vlaneseq
        %v1647 = vshrl.u32 %v1646, 7
        %v1648 = vsub.s32 0, %v1647
        %v1649 = vrot.slane %v1645, %v1648
        %v1650 = vlaneseq
        %v1651 = vshrl.u32 %v1650, 7
        %v1652 = vsub.s32 1, %v1651
        %v1653 = vrot.slane %v1645, %v1652
        %v1656 = vmul.f32 %v1638, %v1649
        %v1657 = vmul.f32 %v1639, %v1649
        %v1658 = vmul.f32 %v1640, %v1653
        %v1659 = vmul.f32 %v1641, %v1653
        %1664 = vset.pattern.permute.xlu0 0
        %1665 = vperm.xlu0 %1664, %v1656
        %v1666 = vpop.permute.xlu0 %1665
        %1667 = vset.pattern.permute.xlu0 0
        %1668 = vperm.xlu0 %1667, %v1657
        %v1669 = vpop.permute.xlu0 %1668
        %1670 = vset.pattern.permute.xlu0 0
        %1671 = vperm.xlu0 %1670, %v1658
        %v1672 = vpop.permute.xlu0 %1671
        %1673 = vset.pattern.permute.xlu0 0
        %1674 = vperm.xlu0 %1673, %v1659
        %v1675 = vpop.permute.xlu0 %1674
        %v1676 = vlaneseq
        %v1677 = vshrl.u32 %v1676, 7
        %v1678 = vsub.s32 %v1306, %v1677
        %v1679 = vrot.slane %v1666, %v1678
        %v1680 = vlaneseq
        %v1681 = vshrl.u32 %v1680, 7
        %v1682 = vsub.s32 %v1501, %v1681
        %v1683 = vrot.slane %v1669, %v1682
        %v1684 = vsel %vm1506, %v1683, %v1679
        %v1685 = vlaneseq
        %v1686 = vshrl.u32 %v1685, 7
        %v1687 = vsub.s32 %v1306, %v1686
        %v1688 = vrot.slane %v1672, %v1687
        %v1689 = vlaneseq
        %v1690 = vshrl.u32 %v1689, 7
        %v1691 = vsub.s32 %v1501, %v1690
        %v1692 = vrot.slane %v1675, %v1691
        %v1693 = vsel %vm1506, %v1692, %v1688
        %v1694 = vsel %vm1517, %v1693, %v1684
        %v1696 = vsel %vm1319, %v1694, -inf
        %1697 = vmax.xlane.f32.xlu0 %v1696
        %v1698 = vpop.xlane.xlu0 %1697
        %v1700 = vlaneseq
        %v1701 = vshrl.u32 %v1700, 7
        %v1702 = vsub.s32 0, %v1701
        %v1703 = vrot.slane %v1698, %v1702
        %v1704 = vlaneseq
        %v1705 = vshrl.u32 %v1704, 7
        %v1706 = vsub.s32 1, %v1705
        %v1707 = vrot.slane %v1698, %v1706
        %v1710 = vsub.f32 %v1656, %v1703
        %v1711 = vsub.f32 %v1657, %v1703
        %v1712 = vsub.f32 %v1658, %v1707
        %v1713 = vsub.f32 %v1659, %v1707
        %v1714 = vmul.f32 %v1710, 1.442695
        %v1715 = vpow.pop %v1714
        %v1716 = vmul.f32 %v1711, 1.442695
        %v1717 = vpow.pop %v1716
        %v1718 = vmul.f32 %v1712, 1.442695
        %v1719 = vpow.pop %v1718
        %v1720 = vmul.f32 %v1713, 1.442695
        %v1721 = vpow.pop %v1720
        %1726 = vset.pattern.permute.xlu0 0
        %1727 = vperm.xlu0 %1726, %v1715
        %v1728 = vpop.permute.xlu0 %1727
        %1729 = vset.pattern.permute.xlu0 0
        %1730 = vperm.xlu0 %1729, %v1717
        %v1731 = vpop.permute.xlu0 %1730
        %1732 = vset.pattern.permute.xlu0 0
        %1733 = vperm.xlu0 %1732, %v1719
        %v1734 = vpop.permute.xlu0 %1733
        %1735 = vset.pattern.permute.xlu0 0
        %1736 = vperm.xlu0 %1735, %v1721
        %v1737 = vpop.permute.xlu0 %1736
        %v1738 = vlaneseq
        %v1739 = vshrl.u32 %v1738, 7
        %v1740 = vsub.s32 %v1306, %v1739
        %v1741 = vrot.slane %v1728, %v1740
        %v1742 = vlaneseq
        %v1743 = vshrl.u32 %v1742, 7
        %v1744 = vsub.s32 %v1501, %v1743
        %v1745 = vrot.slane %v1731, %v1744
        %v1746 = vsel %vm1506, %v1745, %v1741
        %v1747 = vlaneseq
        %v1748 = vshrl.u32 %v1747, 7
        %v1749 = vsub.s32 %v1306, %v1748
        %v1750 = vrot.slane %v1734, %v1749
        %v1751 = vlaneseq
        %v1752 = vshrl.u32 %v1751, 7
        %v1753 = vsub.s32 %v1501, %v1752
        %v1754 = vrot.slane %v1737, %v1753
        %v1755 = vsel %vm1506, %v1754, %v1750
        %v1756 = vsel %vm1517, %v1755, %v1746
        %v1758 = vsel %vm1319, %v1756, 0.0
        %1759 = vadd.xlane.f32.xlu0 %v1758
        %v1760 = vpop.xlane.xlu0 %1759
        %v1762 = vlaneseq
        %v1763 = vshrl.u32 %v1762, 7
        %v1764 = vsub.s32 0, %v1763
        %v1765 = vrot.slane %v1760, %v1764
        %v1766 = vlaneseq
        %v1767 = vshrl.u32 %v1766, 7
        %v1768 = vsub.s32 1, %v1767
        %v1769 = vrot.slane %v1760, %v1768
        %v1772 = vrcp.pop %v1765
        %v1773 = vmul.f32 %v1715, %v1772
        %v1774 = vmul.f32 %v1717, %v1772
        %v1775 = vrcp.pop %v1769
        %v1776 = vmul.f32 %v1719, %v1775
        %v1777 = vmul.f32 %v1721, %v1775
        %1778 = vset.pattern.permute.xlu0 18
        %1779 = vperm.xlu0 %1778, %v1266
        %v1780 = vpop.permute.xlu0 %1779
        %v1782 = vmul.f32 %v1780, %v1520
        %v1783 = vsub.f32 1.0, %v1266
        %1785 = vset.pattern.permute.xlu0 18
        %1786 = vperm.xlu0 %1785, %v1783
        %v1787 = vpop.permute.xlu0 %1786
        %1793 = vset.pattern.permute.xlu0 0
        %1794 = vperm.xlu0 %1793, %v1773
        %v1795 = vpop.permute.xlu0 %1794
        %1796 = vset.pattern.permute.xlu0 0
        %1797 = vperm.xlu0 %1796, %v1774
        %v1798 = vpop.permute.xlu0 %1797
        %1799 = vset.pattern.permute.xlu0 0
        %1800 = vperm.xlu0 %1799, %v1776
        %v1801 = vpop.permute.xlu0 %1800
        %1802 = vset.pattern.permute.xlu0 0
        %1803 = vperm.xlu0 %1802, %v1777
        %v1804 = vpop.permute.xlu0 %1803
        %v1805 = vlaneseq
        %v1806 = vshrl.u32 %v1805, 7
        %v1807 = vsub.s32 %v1306, %v1806
        %v1808 = vrot.slane %v1795, %v1807
        %v1809 = vlaneseq
        %v1810 = vshrl.u32 %v1809, 7
        %v1811 = vsub.s32 %v1501, %v1810
        %v1812 = vrot.slane %v1798, %v1811
        %v1813 = vsel %vm1506, %v1812, %v1808
        %v1814 = vlaneseq
        %v1815 = vshrl.u32 %v1814, 7
        %v1816 = vsub.s32 %v1306, %v1815
        %v1817 = vrot.slane %v1801, %v1816
        %v1818 = vlaneseq
        %v1819 = vshrl.u32 %v1818, 7
        %v1820 = vsub.s32 %v1501, %v1819
        %v1821 = vrot.slane %v1804, %v1820
        %v1822 = vsel %vm1506, %v1821, %v1817
        %v1823 = vsel %vm1517, %v1822, %v1813
        %v1825 = vmul.f32 %v1787, %v1823
        %v1826 = vadd.f32 %v1782, %v1825
        %1827 = vset.pattern.permute.xlu0 19
        %1828 = vperm.xlu0 %1827, %v1266
        %v1829 = vpop.permute.xlu0 %1828
        %v1831 = vmul.f32 %v1829, %v1826
        %s1832 = scalar_lea.vmem [#allocation4], 4
        %1833 = vst.msk [vmem:[%s1832] sm:$0x3] %vm1319, %v1831
        %v1834 = vld [vmem:[#allocation5] sm:$0xff]
        %v1835 = vld [vmem:[#allocation5 + $0x8] sm:$0xff]
        %v1836 = vld [vmem:[#allocation5 + $0x10] sm:$0xff]
        %v1837 = vld [vmem:[#allocation5 + $0x18] sm:$0xff]
        %v1838 = vlaneseq
        %v1839 = vshrl.u32 %v1838, 7
        %v1840 = vsub.s32 0, %v1839
        %v1841 = vrot.slane %v1831, %v1840
        %1843 = vbcast.lane.b32.xlu0 %v1841, 256
        %v1844 = vpop.permute.xlu0 %1843
        %s1846 = sor.u32 256, 8
        %1847 = vbcast.lane.b32.xlu0 %v1841, %s1846
        %v1848 = vpop.permute.xlu0 %1847
        %v1849 = vlaneseq
        %v1850 = vshrl.u32 %v1849, 7
        %v1851 = vsub.s32 1, %v1850
        %v1852 = vrot.slane %v1831, %v1851
        %1854 = vbcast.lane.b32.xlu0 %v1852, 256
        %v1855 = vpop.permute.xlu0 %1854
        %s1857 = sor.u32 256, 8
        %1858 = vbcast.lane.b32.xlu0 %v1852, %s1857
        %v1859 = vpop.permute.xlu0 %1858
        %v1862 = vunpack.c.l.s4 1966171168
        %v1863 = vunpack.c.0.s8 %v1862
        %v1864 = vlaneseq
        %v1865 = vshrl.u32 %v1864, 7
        %v1866 = vsub.s32 %v1863, %v1865
        %v1867 = vrot.slane %v1831, %v1866
        %v1868 = vcombine.high %v1867, %v1867
        %v1870 = vunpack.c.l.s4 1966171168
        %v1871 = vunpack.c.0.s8 %v1870
        %v1872 = vlaneseq
        %v1873 = vshrl.u32 %v1872, 7
        %v1874 = vsub.s32 %v1871, %v1873
        %v1875 = vrot.slane %v1867, %v1874
        %v1877 = vunpack.c.l.s4 1966171168
        %v1878 = vunpack.c.0.s8 %v1877
        %v1879 = vlaneseq
        %v1880 = vshrl.u32 %v1879, 7
        %v1881 = vsub.s32 %v1878, %v1880
        %v1882 = vrot.slane %v1868, %v1881
        %v1883 = vsub.f32 1.0, %v1844
        %v1884 = vsub.f32 1.0, %v1848
        %v1885 = vsub.f32 1.0, %v1855
        %v1886 = vsub.f32 1.0, %v1859
        %v1887 = vlaneseq
        %v1888 = vshrl.u32 %v1887, 7
        %v1889 = vsub.s32 0, %v1888
        %v1890 = vrot.slane %v1875, %v1889
        %v1891 = vlaneseq
        %v1892 = vshrl.u32 %v1891, 7
        %v1893 = vsub.s32 0, %v1892
        %v1894 = vrot.slane %v1882, %v1893
        %v1897 = vsub.f32 %v1883, %v1890
        %v1898 = vsub.f32 %v1884, %v1890
        %v1899 = vsub.f32 %v1885, %v1894
        %v1900 = vsub.f32 %v1886, %v1894
        %v1901 = vmul.f32 %v1897, %v1834
        %v1902 = vmul.f32 %v1898, %v1835
        %v1903 = vmul.f32 %v1899, %v1836
        %v1904 = vmul.f32 %v1900, %v1837
        %v1907 = vunpack.c.l.s4 1966171168
        %v1908 = vunpack.c.0.s8 %v1907
        %v1909 = vlaneseq
        %v1910 = vshrl.u32 %v1909, 7
        %v1911 = vsub.s32 %v1908, %v1910
        %v1912 = vrot.slane %v687, %v1911
        %v1913 = vcombine.high %v1912, %v1912
        %v1915 = vunpack.c.l.s4 1966171168
        %v1916 = vunpack.c.0.s8 %v1915
        %v1917 = vlaneseq
        %v1918 = vshrl.u32 %v1917, 7
        %v1919 = vsub.s32 %v1916, %v1918
        %v1920 = vrot.slane %v1912, %v1919
        %v1922 = vunpack.c.l.s4 1966171168
        %v1923 = vunpack.c.0.s8 %v1922
        %v1924 = vlaneseq
        %v1925 = vshrl.u32 %v1924, 7
        %v1926 = vsub.s32 %v1923, %v1925
        %v1927 = vrot.slane %v1913, %v1926
        %v1928 = vlaneseq
        %v1929 = vshrl.u32 %v1928, 7
        %v1930 = vsub.s32 0, %v1929
        %v1931 = vrot.slane %v1920, %v1930
        %v1932 = vlaneseq
        %v1933 = vshrl.u32 %v1932, 7
        %v1934 = vsub.s32 0, %v1933
        %v1935 = vrot.slane %v1927, %v1934
        %v1938 = vmul.f32 %v1844, %v1931
        %v1939 = vmul.f32 %v1848, %v1931
        %v1940 = vmul.f32 %v1855, %v1935
        %v1941 = vmul.f32 %v1859, %v1935
        %v1942 = vadd.f32 %v1901, %v1938
        %v1943 = vadd.f32 %v1902, %v1939
        %v1944 = vadd.f32 %v1903, %v1940
        %v1945 = vadd.f32 %v1904, %v1941
        %v1946 = vsel %vm1312, 1, 0
        %v1947 = vsel %vm1313, 1, 0
        %vm1948 = vcmp.eq.s32.totalorder %v1946, 1
        %vm1949 = vcmp.eq.s32.totalorder %v1947, 1
        %v1950 = vsel %vm1948, 0.0, %v1942
        %v1951 = vsel %vm1949, 0.0, %v1943
        %v1952 = vsel %vm1948, 0.0, %v1944
        %v1953 = vsel %vm1949, 0.0, %v1945
        %1954 = vst.msk [vmem:[#allocation5] sm:$0xff] %vm699, %v1950
        %1955 = vst.msk [vmem:[#allocation5 + $0x8] sm:$0xff] %vm699, %v1951
        %1956 = vst.msk [vmem:[#allocation5 + $0x10] sm:$0xff] %vm699, %v1952
        %1957 = vst.msk [vmem:[#allocation5 + $0x18] sm:$0xff] %vm699, %v1953
        %v1958 = vsel %vm1319, %v1831, 0.0
        %1959 = vadd.xlane.f32.xlu0 %v1958
        %v1960 = vpop.xlane.xlu0 %1959
        %v1961 = vsub.f32 1.0, %v1960
        %v1962 = vmul.f32 %v1961, %v687
        %v1963 = vadd.f32 %v1962, %v1831
        %s1964 = scalar_lea.vmem [#allocation4], 8
        %1965 = vst.msk [vmem:[%s1964] sm:$0x3] %vm1319, %v1963
        %vm1966 = vcmask 181408
        %v1967 = vsel %vm1966, %v1258, -inf
        %1968 = vmax.xlane.f32.xlu0 %v1967
        %v1969 = vpop.xlane.xlu0 %1968
        %v1970 = vsub.f32 %v1258, %v1969
        %v1971 = vmul.f32 %v1970, 1.442695
        %v1972 = vpow.pop %v1971
        %1974 = vrot.lane.b32.xlu0 %v1972, 108
        %v1975 = vpop.permute.xlu0 %1974
        %vm1977 = vcmask 17408
        %v1978 = vsel %vm1977, %v1975, 0.0
        %1979 = vadd.xlane.f32.xlu0 %v1978
        %v1980 = vpop.xlane.xlu0 %1979
        %v1981 = vrcp.pop %v1980
        %v1982 = vmul.f32 %v1972, %v1981
        %1983 = vrot.lane.b32.xlu0 %v688, 35
        %v1984 = vpop.permute.xlu0 %1983
        %1985 = vrot.lane.b32.xlu0 %v689, 35
        %v1986 = vpop.permute.xlu0 %1985
        %1987 = vrot.lane.b32.xlu0 %v690, 35
        %v1988 = vpop.permute.xlu0 %1987
        %1989 = vrot.lane.b32.xlu0 %v691, 35
        %v1990 = vpop.permute.xlu0 %1989
        %v1995 = vmul.f32 %v1557, %v1984
        %v1996 = vmul.f32 %v1557, %v1986
        %v1997 = vmul.f32 %v1561, %v1988
        %v1998 = vmul.f32 %v1561, %v1990
        %2003 = vrot.lane.b32.xlu0 %v1995, 93
        %v2004 = vpop.permute.xlu0 %2003
        %2005 = vrot.lane.b32.xlu0 %v1996, 93
        %v2006 = vpop.permute.xlu0 %2005
        %2007 = vrot.lane.b32.xlu0 %v1997, 93
        %v2008 = vpop.permute.xlu0 %2007
        %2009 = vrot.lane.b32.xlu0 %v1998, 93
        %v2010 = vpop.permute.xlu0 %2009
        %v2015 = vsel %vm773, %v2004, 0.0
        %2016 = vadd.xlane.f32.xlu0 %v2015
        %v2017 = vpop.xlane.xlu0 %2016
        %v2018 = vsel %vm773, %v2006, 0.0
        %2019 = vadd.xlane.f32.xlu0 %v2018
        %v2020 = vpop.xlane.xlu0 %2019
        %v2021 = vsel %vm773, %v2008, 0.0
        %2022 = vadd.xlane.f32.xlu0 %v2021
        %v2023 = vpop.xlane.xlu0 %2022
        %v2024 = vsel %vm773, %v2010, 0.0
        %2025 = vadd.xlane.f32.xlu0 %v2024
        %v2026 = vpop.xlane.xlu0 %2025
        %2027 = vrot.lane.b32.xlu0 %v1612, 93
        %v2028 = vpop.permute.xlu0 %2027
        %v2030 = vsel %vm1617, %v2028, 0.0
        %2031 = vadd.xlane.f32.xlu0 %v2030
        %v2032 = vpop.xlane.xlu0 %2031
        %v2033 = vadd.f32 %v2032, 1e-08
        %v2034 = vrsqrt.pop %v2033
        %v2036 = vlaneseq
        %v2037 = vshrl.u32 %v2036, 7
        %v2038 = vsub.s32 0, %v2037
        %v2039 = vrot.slane %v2034, %v2038
        %v2040 = vlaneseq
        %v2041 = vshrl.u32 %v2040, 7
        %v2042 = vsub.s32 1, %v2041
        %v2043 = vrot.slane %v2034, %v2042
        %v2046 = vmul.f32 %v2017, %v2039
        %v2047 = vmul.f32 %v2020, %v2039
        %v2048 = vmul.f32 %v2023, %v2043
        %v2049 = vmul.f32 %v2026, %v2043
        %v2050 = vmul.f32 %v2046, %v1287
        %v2051 = vmul.f32 %v2047, %v1288
        %v2052 = vmul.f32 %v2048, %v1289
        %v2053 = vmul.f32 %v2049, %v1290
        %2054 = vset.pattern.permute.xlu0 51
        %2055 = vperm.xlu0 %2054, %v1530
        %v2056 = vpop.permute.xlu0 %2055
        %v2057 = vlaneseq
        %v2058 = vshrl.u32 %v2057, 7
        %v2059 = vsub.s32 0, %v2058
        %v2060 = vrot.slane %v2056, %v2059
        %v2061 = vlaneseq
        %v2062 = vshrl.u32 %v2061, 7
        %v2063 = vsub.s32 1, %v2062
        %v2064 = vrot.slane %v2056, %v2063
        %v2067 = vmul.f32 %v2050, %v2060
        %v2068 = vmul.f32 %v2051, %v2060
        %v2069 = vmul.f32 %v2052, %v2064
        %v2070 = vmul.f32 %v2053, %v2064
        %2075 = vset.pattern.permute.xlu0 0
        %2076 = vperm.xlu0 %2075, %v2067
        %v2077 = vpop.permute.xlu0 %2076
        %2078 = vset.pattern.permute.xlu0 0
        %2079 = vperm.xlu0 %2078, %v2068
        %v2080 = vpop.permute.xlu0 %2079
        %2081 = vset.pattern.permute.xlu0 0
        %2082 = vperm.xlu0 %2081, %v2069
        %v2083 = vpop.permute.xlu0 %2082
        %2084 = vset.pattern.permute.xlu0 0
        %2085 = vperm.xlu0 %2084, %v2070
        %v2086 = vpop.permute.xlu0 %2085
        %v2087 = vlaneseq
        %v2088 = vshrl.u32 %v2087, 7
        %v2089 = vsub.s32 %v1306, %v2088
        %v2090 = vrot.slane %v2077, %v2089
        %v2091 = vlaneseq
        %v2092 = vshrl.u32 %v2091, 7
        %v2093 = vsub.s32 %v1501, %v2092
        %v2094 = vrot.slane %v2080, %v2093
        %v2095 = vsel %vm1506, %v2094, %v2090
        %v2096 = vlaneseq
        %v2097 = vshrl.u32 %v2096, 7
        %v2098 = vsub.s32 %v1306, %v2097
        %v2099 = vrot.slane %v2083, %v2098
        %v2100 = vlaneseq
        %v2101 = vshrl.u32 %v2100, 7
        %v2102 = vsub.s32 %v1501, %v2101
        %v2103 = vrot.slane %v2086, %v2102
        %v2104 = vsel %vm1506, %v2103, %v2099
        %v2105 = vsel %vm1517, %v2104, %v2095
        %v2107 = vsel %vm1319, %v2105, -inf
        %2108 = vmax.xlane.f32.xlu0 %v2107
        %v2109 = vpop.xlane.xlu0 %2108
        %v2111 = vlaneseq
        %v2112 = vshrl.u32 %v2111, 7
        %v2113 = vsub.s32 0, %v2112
        %v2114 = vrot.slane %v2109, %v2113
        %v2115 = vlaneseq
        %v2116 = vshrl.u32 %v2115, 7
        %v2117 = vsub.s32 1, %v2116
        %v2118 = vrot.slane %v2109, %v2117
        %v2121 = vsub.f32 %v2067, %v2114
        %v2122 = vsub.f32 %v2068, %v2114
        %v2123 = vsub.f32 %v2069, %v2118
        %v2124 = vsub.f32 %v2070, %v2118
        %v2125 = vmul.f32 %v2121, 1.442695
        %v2126 = vpow.pop %v2125
        %v2127 = vmul.f32 %v2122, 1.442695
        %v2128 = vpow.pop %v2127
        %v2129 = vmul.f32 %v2123, 1.442695
        %v2130 = vpow.pop %v2129
        %v2131 = vmul.f32 %v2124, 1.442695
        %v2132 = vpow.pop %v2131
        %2137 = vset.pattern.permute.xlu0 0
        %2138 = vperm.xlu0 %2137, %v2126
        %v2139 = vpop.permute.xlu0 %2138
        %2140 = vset.pattern.permute.xlu0 0
        %2141 = vperm.xlu0 %2140, %v2128
        %v2142 = vpop.permute.xlu0 %2141
        %2143 = vset.pattern.permute.xlu0 0
        %2144 = vperm.xlu0 %2143, %v2130
        %v2145 = vpop.permute.xlu0 %2144
        %2146 = vset.pattern.permute.xlu0 0
        %2147 = vperm.xlu0 %2146, %v2132
        %v2148 = vpop.permute.xlu0 %2147
        %v2149 = vlaneseq
        %v2150 = vshrl.u32 %v2149, 7
        %v2151 = vsub.s32 %v1306, %v2150
        %v2152 = vrot.slane %v2139, %v2151
        %v2153 = vlaneseq
        %v2154 = vshrl.u32 %v2153, 7
        %v2155 = vsub.s32 %v1501, %v2154
        %v2156 = vrot.slane %v2142, %v2155
        %v2157 = vsel %vm1506, %v2156, %v2152
        %v2158 = vlaneseq
        %v2159 = vshrl.u32 %v2158, 7
        %v2160 = vsub.s32 %v1306, %v2159
        %v2161 = vrot.slane %v2145, %v2160
        %v2162 = vlaneseq
        %v2163 = vshrl.u32 %v2162, 7
        %v2164 = vsub.s32 %v1501, %v2163
        %v2165 = vrot.slane %v2148, %v2164
        %v2166 = vsel %vm1506, %v2165, %v2161
        %v2167 = vsel %vm1517, %v2166, %v2157
        %v2169 = vsel %vm1319, %v2167, 0.0
        %2170 = vadd.xlane.f32.xlu0 %v2169
        %v2171 = vpop.xlane.xlu0 %2170
        %v2173 = vlaneseq
        %v2174 = vshrl.u32 %v2173, 7
        %v2175 = vsub.s32 0, %v2174
        %v2176 = vrot.slane %v2171, %v2175
        %v2177 = vlaneseq
        %v2178 = vshrl.u32 %v2177, 7
        %v2179 = vsub.s32 1, %v2178
        %v2180 = vrot.slane %v2171, %v2179
        %v2183 = vrcp.pop %v2176
        %v2184 = vmul.f32 %v2126, %v2183
        %v2185 = vmul.f32 %v2128, %v2183
        %v2186 = vrcp.pop %v2180
        %v2187 = vmul.f32 %v2130, %v2186
        %v2188 = vmul.f32 %v2132, %v2186
        %2190 = vset.pattern.permute.xlu0 21
        %2191 = vperm.xlu0 %2190, %v1982
        %v2192 = vpop.permute.xlu0 %2191
        %2198 = vset.pattern.permute.xlu0 0
        %2199 = vperm.xlu0 %2198, %v2184
        %v2200 = vpop.permute.xlu0 %2199
        %2201 = vset.pattern.permute.xlu0 0
        %2202 = vperm.xlu0 %2201, %v2185
        %v2203 = vpop.permute.xlu0 %2202
        %2204 = vset.pattern.permute.xlu0 0
        %2205 = vperm.xlu0 %2204, %v2187
        %v2206 = vpop.permute.xlu0 %2205
        %2207 = vset.pattern.permute.xlu0 0
        %2208 = vperm.xlu0 %2207, %v2188
        %v2209 = vpop.permute.xlu0 %2208
        %v2210 = vlaneseq
        %v2211 = vshrl.u32 %v2210, 7
        %v2212 = vsub.s32 %v1306, %v2211
        %v2213 = vrot.slane %v2200, %v2212
        %v2214 = vlaneseq
        %v2215 = vshrl.u32 %v2214, 7
        %v2216 = vsub.s32 %v1501, %v2215
        %v2217 = vrot.slane %v2203, %v2216
        %v2218 = vsel %vm1506, %v2217, %v2213
        %v2219 = vlaneseq
        %v2220 = vshrl.u32 %v2219, 7
        %v2221 = vsub.s32 %v1306, %v2220
        %v2222 = vrot.slane %v2206, %v2221
        %v2223 = vlaneseq
        %v2224 = vshrl.u32 %v2223, 7
        %v2225 = vsub.s32 %v1501, %v2224
        %v2226 = vrot.slane %v2209, %v2225
        %v2227 = vsel %vm1506, %v2226, %v2222
        %v2228 = vsel %vm1517, %v2227, %v2218
        %v2230 = vmul.f32 %v2192, %v2228
        %v2233 = vunpack.c.l.s4 1966171168
        %v2234 = vunpack.c.0.s8 %v2233
        %v2235 = vlaneseq
        %v2236 = vshrl.u32 %v2235, 7
        %v2237 = vsub.s32 %v2234, %v2236
        %v2238 = vrot.slane %v683, %v2237
        %v2239 = vcombine.high %v2238, %v2238
        %v2241 = vunpack.c.l.s4 1966171168
        %v2242 = vunpack.c.0.s8 %v2241
        %v2243 = vlaneseq
        %v2244 = vshrl.u32 %v2243, 7
        %v2245 = vsub.s32 %v2242, %v2244
        %v2246 = vrot.slane %v2238, %v2245
        %v2248 = vunpack.c.l.s4 1966171168
        %v2249 = vunpack.c.0.s8 %v2248
        %v2250 = vlaneseq
        %v2251 = vshrl.u32 %v2250, 7
        %v2252 = vsub.s32 %v2249, %v2251
        %v2253 = vrot.slane %v2239, %v2252
        %v2254 = vlaneseq
        %v2255 = vshrl.u32 %v2254, 7
        %v2256 = vsub.s32 0, %v2255
        %v2257 = vrot.slane %v2246, %v2256
        %v2258 = vlaneseq
        %v2259 = vshrl.u32 %v2258, 7
        %v2260 = vsub.s32 0, %v2259
        %v2261 = vrot.slane %v2253, %v2260
        %v2264 = vmul.f32 %v2257, %v1950
        %v2265 = vmul.f32 %v2257, %v1951
        %v2266 = vmul.f32 %v2261, %v1952
        %v2267 = vmul.f32 %v2261, %v1953
        %v2268 = vsel %vm699, %v2264, 0.0
        %2269 = vadd.xlane.f32.xlu0 %v2268
        %v2270 = vpop.xlane.xlu0 %2269
        %v2271 = vsel %vm699, %v2265, 0.0
        %2272 = vadd.xlane.f32.xlu0 %v2271
        %v2273 = vpop.xlane.xlu0 %2272
        %v2274 = vsel %vm699, %v2266, 0.0
        %2275 = vadd.xlane.f32.xlu0 %v2274
        %v2276 = vpop.xlane.xlu0 %2275
        %v2277 = vsel %vm699, %v2267, 0.0
        %2278 = vadd.xlane.f32.xlu0 %v2277
        %v2279 = vpop.xlane.xlu0 %2278
        %v2280 = vlaneseq
        %v2281 = vshrl.u32 %v2280, 7
        %v2282 = vsub.s32 0, %v2281
        %v2283 = vrot.slane %v683, %v2282
        %2285 = vbcast.lane.b32.xlu0 %v2283, 256
        %v2286 = vpop.permute.xlu0 %2285
        %s2288 = sor.u32 256, 8
        %2289 = vbcast.lane.b32.xlu0 %v2283, %s2288
        %v2290 = vpop.permute.xlu0 %2289
        %v2291 = vlaneseq
        %v2292 = vshrl.u32 %v2291, 7
        %v2293 = vsub.s32 1, %v2292
        %v2294 = vrot.slane %v683, %v2293
        %2296 = vbcast.lane.b32.xlu0 %v2294, 256
        %v2297 = vpop.permute.xlu0 %2296
        %s2299 = sor.u32 256, 8
        %2300 = vbcast.lane.b32.xlu0 %v2294, %s2299
        %v2301 = vpop.permute.xlu0 %2300
        %v2302 = vmul.f32 %v2286, %v1950
        %v2303 = vmul.f32 %v2290, %v1951
        %v2304 = vmul.f32 %v2297, %v1952
        %v2305 = vmul.f32 %v2301, %v1953
        %v2306 = vsel %vm699, %v2302, 0.0
        %v2307 = vsel %vm699, %v2303, 0.0
        %v2308 = vadd.f32 %v2306, %v2307
        %v2309 = vrot.slane %v2308, 4
        %v2310 = vadd.f32 %v2308, %v2309
        %v2311 = vrot.slane %v2310, 2
        %v2312 = vadd.f32 %v2310, %v2311
        %v2313 = vrot.slane %v2312, 1
        %v2314 = vadd.f32 %v2312, %v2313
        %v2315 = vsel %vm699, %v2304, 0.0
        %v2316 = vsel %vm699, %v2305, 0.0
        %v2317 = vadd.f32 %v2315, %v2316
        %v2318 = vrot.slane %v2317, 4
        %v2319 = vadd.f32 %v2317, %v2318
        %v2320 = vrot.slane %v2319, 2
        %v2321 = vadd.f32 %v2319, %v2320
        %v2322 = vrot.slane %v2321, 1
        %v2323 = vadd.f32 %v2321, %v2322
        %2324 = vset.pattern.permute.xlu0 20
        %2325 = vperm.xlu0 %2324, %v1982
        %v2326 = vpop.permute.xlu0 %2325
        %v2330 = vsel %vm1517, %v2323, %v2314
        %v2332 = vmul.f32 %v2326, %v2330
        %v2333 = vadd.f32 %v2230, %v2332
        %2334 = vset.pattern.permute.xlu0 22
        %2335 = vperm.xlu0 %2334, %v1982
        %v2336 = vpop.permute.xlu0 %2335
        %v2342 = vlaneseq
        %v2343 = vshrl.u32 %v2342, 7
        %v2344 = vsub.s32 %v1306, %v2343
        %v2345 = vrot.slane %v2270, %v2344
        %v2346 = vlaneseq
        %v2347 = vshrl.u32 %v2346, 7
        %v2348 = vsub.s32 %v1501, %v2347
        %v2349 = vrot.slane %v2273, %v2348
        %v2350 = vsel %vm1506, %v2349, %v2345
        %v2351 = vlaneseq
        %v2352 = vshrl.u32 %v2351, 7
        %v2353 = vsub.s32 %v1306, %v2352
        %v2354 = vrot.slane %v2276, %v2353
        %v2355 = vlaneseq
        %v2356 = vshrl.u32 %v2355, 7
        %v2357 = vsub.s32 %v1501, %v2356
        %v2358 = vrot.slane %v2279, %v2357
        %v2359 = vsel %vm1506, %v2358, %v2354
        %v2360 = vsel %vm1517, %v2359, %v2350
        %v2362 = vmul.f32 %v2336, %v2360
        %v2363 = vadd.f32 %v2333, %v2362
        %2364 = vst.msk [vmem:[#allocation4] sm:$0x3] %vm1319, %v2363
        %v2365 = vlaneseq
        %v2366 = vshrl.u32 %v2365, 7
        %v2367 = vsub.s32 0, %v2366
        %v2368 = vrot.slane %v2363, %v2367
        %2370 = vbcast.lane.b32.xlu0 %v2368, 256
        %v2371 = vpop.permute.xlu0 %2370
        %s2373 = sor.u32 256, 8
        %2374 = vbcast.lane.b32.xlu0 %v2368, %s2373
        %v2375 = vpop.permute.xlu0 %2374
        %v2376 = vlaneseq
        %v2377 = vshrl.u32 %v2376, 7
        %v2378 = vsub.s32 1, %v2377
        %v2379 = vrot.slane %v2363, %v2378
        %2381 = vbcast.lane.b32.xlu0 %v2379, 256
        %v2382 = vpop.permute.xlu0 %2381
        %s2384 = sor.u32 256, 8
        %2385 = vbcast.lane.b32.xlu0 %v2379, %s2384
        %v2386 = vpop.permute.xlu0 %2385
        %v2387 = vmul.f32 %v2371, %v688
        %v2388 = vmul.f32 %v2375, %v689
        %v2389 = vmul.f32 %v2382, %v690
        %v2390 = vmul.f32 %v2386, %v691
        %v2391 = vsel %vm773, %v2387, 0.0
        %v2392 = vsel %vm773, %v2388, 0.0
        %v2393 = vadd.f32 %v2391, %v2392
        %v2394 = vrot.slane %v2393, 4
        %v2395 = vadd.f32 %v2393, %v2394
        %v2396 = vrot.slane %v2395, 2
        %v2397 = vadd.f32 %v2395, %v2396
        %v2398 = vrot.slane %v2397, 1
        %v2399 = vadd.f32 %v2397, %v2398
        %v2400 = vsel %vm773, %v2389, 0.0
        %v2401 = vsel %vm773, %v2390, 0.0
        %v2402 = vadd.f32 %v2400, %v2401
        %v2403 = vrot.slane %v2402, 4
        %v2404 = vadd.f32 %v2402, %v2403
        %v2405 = vrot.slane %v2404, 2
        %v2406 = vadd.f32 %v2404, %v2405
        %v2407 = vrot.slane %v2406, 1
        %v2408 = vadd.f32 %v2406, %v2407
        %v2411 = vsel %vm1517, %v2408, %v2399
        %2413 = vst.msk [vmem:[#allocation2] sm:$0x3] %vm1617, %v2411
        %vm2414 = vcmask 206008
        %v2415 = vsel %vm2414, %v1258, -inf
        %2416 = vmax.xlane.f32.xlu0 %v2415
        %v2417 = vpop.xlane.xlu0 %2416
        %v2418 = vsub.f32 %v1258, %v2417
        %v2419 = vmul.f32 %v2418, 1.442695
        %v2420 = vpow.pop %v2419
        %2422 = vrot.lane.b32.xlu0 %v2420, 105
        %v2423 = vpop.permute.xlu0 %2422
        %v2425 = vsel %vm1977, %v2423, 0.0
        %2426 = vadd.xlane.f32.xlu0 %v2425
        %v2427 = vpop.xlane.xlu0 %2426
        %v2428 = vrcp.pop %v2427
        %v2429 = vmul.f32 %v2420, %v2428
        %2430 = vrot.lane.b32.xlu0 %v688, 43
        %v2431 = vpop.permute.xlu0 %2430
        %2432 = vrot.lane.b32.xlu0 %v689, 43
        %v2433 = vpop.permute.xlu0 %2432
        %2434 = vrot.lane.b32.xlu0 %v690, 43
        %v2435 = vpop.permute.xlu0 %2434
        %2436 = vrot.lane.b32.xlu0 %v691, 43
        %v2437 = vpop.permute.xlu0 %2436
        %v2442 = vmul.f32 %v1557, %v2431
        %v2443 = vmul.f32 %v1557, %v2433
        %v2444 = vmul.f32 %v1561, %v2435
        %v2445 = vmul.f32 %v1561, %v2437
        %2450 = vrot.lane.b32.xlu0 %v2442, 85
        %v2451 = vpop.permute.xlu0 %2450
        %2452 = vrot.lane.b32.xlu0 %v2443, 85
        %v2453 = vpop.permute.xlu0 %2452
        %2454 = vrot.lane.b32.xlu0 %v2444, 85
        %v2455 = vpop.permute.xlu0 %2454
        %2456 = vrot.lane.b32.xlu0 %v2445, 85
        %v2457 = vpop.permute.xlu0 %2456
        %v2462 = vsel %vm773, %v2451, 0.0
        %2463 = vadd.xlane.f32.xlu0 %v2462
        %v2464 = vpop.xlane.xlu0 %2463
        %v2465 = vsel %vm773, %v2453, 0.0
        %2466 = vadd.xlane.f32.xlu0 %v2465
        %v2467 = vpop.xlane.xlu0 %2466
        %v2468 = vsel %vm773, %v2455, 0.0
        %2469 = vadd.xlane.f32.xlu0 %v2468
        %v2470 = vpop.xlane.xlu0 %2469
        %v2471 = vsel %vm773, %v2457, 0.0
        %2472 = vadd.xlane.f32.xlu0 %v2471
        %v2473 = vpop.xlane.xlu0 %2472
        %2474 = vrot.lane.b32.xlu0 %v1612, 85
        %v2475 = vpop.permute.xlu0 %2474
        %v2477 = vsel %vm1617, %v2475, 0.0
        %2478 = vadd.xlane.f32.xlu0 %v2477
        %v2479 = vpop.xlane.xlu0 %2478
        %v2480 = vadd.f32 %v2479, 1e-08
        %v2481 = vrsqrt.pop %v2480
        %v2483 = vlaneseq
        %v2484 = vshrl.u32 %v2483, 7
        %v2485 = vsub.s32 0, %v2484
        %v2486 = vrot.slane %v2481, %v2485
        %v2487 = vlaneseq
        %v2488 = vshrl.u32 %v2487, 7
        %v2489 = vsub.s32 1, %v2488
        %v2490 = vrot.slane %v2481, %v2489
        %v2493 = vmul.f32 %v2464, %v2486
        %v2494 = vmul.f32 %v2467, %v2486
        %v2495 = vmul.f32 %v2470, %v2490
        %v2496 = vmul.f32 %v2473, %v2490
        %v2497 = vmul.f32 %v2493, %v1287
        %v2498 = vmul.f32 %v2494, %v1288
        %v2499 = vmul.f32 %v2495, %v1289
        %v2500 = vmul.f32 %v2496, %v1290
        %2501 = vset.pattern.permute.xlu0 52
        %2502 = vperm.xlu0 %2501, %v1530
        %v2503 = vpop.permute.xlu0 %2502
        %v2504 = vlaneseq
        %v2505 = vshrl.u32 %v2504, 7
        %v2506 = vsub.s32 0, %v2505
        %v2507 = vrot.slane %v2503, %v2506
        %v2508 = vlaneseq
        %v2509 = vshrl.u32 %v2508, 7
        %v2510 = vsub.s32 1, %v2509
        %v2511 = vrot.slane %v2503, %v2510
        %v2514 = vmul.f32 %v2497, %v2507
        %v2515 = vmul.f32 %v2498, %v2507
        %v2516 = vmul.f32 %v2499, %v2511
        %v2517 = vmul.f32 %v2500, %v2511
        %2522 = vset.pattern.permute.xlu0 0
        %2523 = vperm.xlu0 %2522, %v2514
        %v2524 = vpop.permute.xlu0 %2523
        %2525 = vset.pattern.permute.xlu0 0
        %2526 = vperm.xlu0 %2525, %v2515
        %v2527 = vpop.permute.xlu0 %2526
        %2528 = vset.pattern.permute.xlu0 0
        %2529 = vperm.xlu0 %2528, %v2516
        %v2530 = vpop.permute.xlu0 %2529
        %2531 = vset.pattern.permute.xlu0 0
        %2532 = vperm.xlu0 %2531, %v2517
        %v2533 = vpop.permute.xlu0 %2532
        %v2534 = vlaneseq
        %v2535 = vshrl.u32 %v2534, 7
        %v2536 = vsub.s32 %v1306, %v2535
        %v2537 = vrot.slane %v2524, %v2536
        %v2538 = vlaneseq
        %v2539 = vshrl.u32 %v2538, 7
        %v2540 = vsub.s32 %v1501, %v2539
        %v2541 = vrot.slane %v2527, %v2540
        %v2542 = vsel %vm1506, %v2541, %v2537
        %v2543 = vlaneseq
        %v2544 = vshrl.u32 %v2543, 7
        %v2545 = vsub.s32 %v1306, %v2544
        %v2546 = vrot.slane %v2530, %v2545
        %v2547 = vlaneseq
        %v2548 = vshrl.u32 %v2547, 7
        %v2549 = vsub.s32 %v1501, %v2548
        %v2550 = vrot.slane %v2533, %v2549
        %v2551 = vsel %vm1506, %v2550, %v2546
        %v2552 = vsel %vm1517, %v2551, %v2542
        %v2554 = vsel %vm1319, %v2552, -inf
        %2555 = vmax.xlane.f32.xlu0 %v2554
        %v2556 = vpop.xlane.xlu0 %2555
        %v2558 = vlaneseq
        %v2559 = vshrl.u32 %v2558, 7
        %v2560 = vsub.s32 0, %v2559
        %v2561 = vrot.slane %v2556, %v2560
        %v2562 = vlaneseq
        %v2563 = vshrl.u32 %v2562, 7
        %v2564 = vsub.s32 1, %v2563
        %v2565 = vrot.slane %v2556, %v2564
        %v2568 = vsub.f32 %v2514, %v2561
        %v2569 = vsub.f32 %v2515, %v2561
        %v2570 = vsub.f32 %v2516, %v2565
        %v2571 = vsub.f32 %v2517, %v2565
        %v2572 = vmul.f32 %v2568, 1.442695
        %v2573 = vpow.pop %v2572
        %v2574 = vmul.f32 %v2569, 1.442695
        %v2575 = vpow.pop %v2574
        %v2576 = vmul.f32 %v2570, 1.442695
        %v2577 = vpow.pop %v2576
        %v2578 = vmul.f32 %v2571, 1.442695
        %v2579 = vpow.pop %v2578
        %2584 = vset.pattern.permute.xlu0 0
        %2585 = vperm.xlu0 %2584, %v2573
        %v2586 = vpop.permute.xlu0 %2585
        %2587 = vset.pattern.permute.xlu0 0
        %2588 = vperm.xlu0 %2587, %v2575
        %v2589 = vpop.permute.xlu0 %2588
        %2590 = vset.pattern.permute.xlu0 0
        %2591 = vperm.xlu0 %2590, %v2577
        %v2592 = vpop.permute.xlu0 %2591
        %2593 = vset.pattern.permute.xlu0 0
        %2594 = vperm.xlu0 %2593, %v2579
        %v2595 = vpop.permute.xlu0 %2594
        %v2596 = vlaneseq
        %v2597 = vshrl.u32 %v2596, 7
        %v2598 = vsub.s32 %v1306, %v2597
        %v2599 = vrot.slane %v2586, %v2598
        %v2600 = vlaneseq
        %v2601 = vshrl.u32 %v2600, 7
        %v2602 = vsub.s32 %v1501, %v2601
        %v2603 = vrot.slane %v2589, %v2602
        %v2604 = vsel %vm1506, %v2603, %v2599
        %v2605 = vlaneseq
        %v2606 = vshrl.u32 %v2605, 7
        %v2607 = vsub.s32 %v1306, %v2606
        %v2608 = vrot.slane %v2592, %v2607
        %v2609 = vlaneseq
        %v2610 = vshrl.u32 %v2609, 7
        %v2611 = vsub.s32 %v1501, %v2610
        %v2612 = vrot.slane %v2595, %v2611
        %v2613 = vsel %vm1506, %v2612, %v2608
        %v2614 = vsel %vm1517, %v2613, %v2604
        %v2616 = vsel %vm1319, %v2614, 0.0
        %2617 = vadd.xlane.f32.xlu0 %v2616
        %v2618 = vpop.xlane.xlu0 %2617
        %v2620 = vlaneseq
        %v2621 = vshrl.u32 %v2620, 7
        %v2622 = vsub.s32 0, %v2621
        %v2623 = vrot.slane %v2618, %v2622
        %v2624 = vlaneseq
        %v2625 = vshrl.u32 %v2624, 7
        %v2626 = vsub.s32 1, %v2625
        %v2627 = vrot.slane %v2618, %v2626
        %v2630 = vrcp.pop %v2623
        %v2631 = vmul.f32 %v2573, %v2630
        %v2632 = vmul.f32 %v2575, %v2630
        %v2633 = vrcp.pop %v2627
        %v2634 = vmul.f32 %v2577, %v2633
        %v2635 = vmul.f32 %v2579, %v2633
        %2637 = vset.pattern.permute.xlu0 24
        %2638 = vperm.xlu0 %2637, %v2429
        %v2639 = vpop.permute.xlu0 %2638
        %2645 = vset.pattern.permute.xlu0 0
        %2646 = vperm.xlu0 %2645, %v2631
        %v2647 = vpop.permute.xlu0 %2646
        %2648 = vset.pattern.permute.xlu0 0
        %2649 = vperm.xlu0 %2648, %v2632
        %v2650 = vpop.permute.xlu0 %2649
        %2651 = vset.pattern.permute.xlu0 0
        %2652 = vperm.xlu0 %2651, %v2634
        %v2653 = vpop.permute.xlu0 %2652
        %2654 = vset.pattern.permute.xlu0 0
        %2655 = vperm.xlu0 %2654, %v2635
        %v2656 = vpop.permute.xlu0 %2655
        %v2657 = vlaneseq
        %v2658 = vshrl.u32 %v2657, 7
        %v2659 = vsub.s32 %v1306, %v2658
        %v2660 = vrot.slane %v2647, %v2659
        %v2661 = vlaneseq
        %v2662 = vshrl.u32 %v2661, 7
        %v2663 = vsub.s32 %v1501, %v2662
        %v2664 = vrot.slane %v2650, %v2663
        %v2665 = vsel %vm1506, %v2664, %v2660
        %v2666 = vlaneseq
        %v2667 = vshrl.u32 %v2666, 7
        %v2668 = vsub.s32 %v1306, %v2667
        %v2669 = vrot.slane %v2653, %v2668
        %v2670 = vlaneseq
        %v2671 = vshrl.u32 %v2670, 7
        %v2672 = vsub.s32 %v1501, %v2671
        %v2673 = vrot.slane %v2656, %v2672
        %v2674 = vsel %vm1506, %v2673, %v2669
        %v2675 = vsel %vm1517, %v2674, %v2665
        %v2677 = vmul.f32 %v2639, %v2675
        %v2680 = vunpack.c.l.s4 1966171168
        %v2681 = vunpack.c.0.s8 %v2680
        %v2682 = vlaneseq
        %v2683 = vshrl.u32 %v2682, 7
        %v2684 = vsub.s32 %v2681, %v2683
        %v2685 = vrot.slane %v684, %v2684
        %v2686 = vcombine.high %v2685, %v2685
        %v2688 = vunpack.c.l.s4 1966171168
        %v2689 = vunpack.c.0.s8 %v2688
        %v2690 = vlaneseq
        %v2691 = vshrl.u32 %v2690, 7
        %v2692 = vsub.s32 %v2689, %v2691
        %v2693 = vrot.slane %v2685, %v2692
        %v2695 = vunpack.c.l.s4 1966171168
        %v2696 = vunpack.c.0.s8 %v2695
        %v2697 = vlaneseq
        %v2698 = vshrl.u32 %v2697, 7
        %v2699 = vsub.s32 %v2696, %v2698
        %v2700 = vrot.slane %v2686, %v2699
        %v2701 = vlaneseq
        %v2702 = vshrl.u32 %v2701, 7
        %v2703 = vsub.s32 0, %v2702
        %v2704 = vrot.slane %v2693, %v2703
        %v2705 = vlaneseq
        %v2706 = vshrl.u32 %v2705, 7
        %v2707 = vsub.s32 0, %v2706
        %v2708 = vrot.slane %v2700, %v2707
        %v2711 = vmul.f32 %v2704, %v1950
        %v2712 = vmul.f32 %v2704, %v1951
        %v2713 = vmul.f32 %v2708, %v1952
        %v2714 = vmul.f32 %v2708, %v1953
        %v2715 = vsel %vm699, %v2711, 0.0
        %2716 = vadd.xlane.f32.xlu0 %v2715
        %v2717 = vpop.xlane.xlu0 %2716
        %v2718 = vsel %vm699, %v2712, 0.0
        %2719 = vadd.xlane.f32.xlu0 %v2718
        %v2720 = vpop.xlane.xlu0 %2719
        %v2721 = vsel %vm699, %v2713, 0.0
        %2722 = vadd.xlane.f32.xlu0 %v2721
        %v2723 = vpop.xlane.xlu0 %2722
        %v2724 = vsel %vm699, %v2714, 0.0
        %2725 = vadd.xlane.f32.xlu0 %v2724
        %v2726 = vpop.xlane.xlu0 %2725
        %v2727 = vlaneseq
        %v2728 = vshrl.u32 %v2727, 7
        %v2729 = vsub.s32 0, %v2728
        %v2730 = vrot.slane %v684, %v2729
        %2732 = vbcast.lane.b32.xlu0 %v2730, 256
        %v2733 = vpop.permute.xlu0 %2732
        %s2735 = sor.u32 256, 8
        %2736 = vbcast.lane.b32.xlu0 %v2730, %s2735
        %v2737 = vpop.permute.xlu0 %2736
        %v2738 = vlaneseq
        %v2739 = vshrl.u32 %v2738, 7
        %v2740 = vsub.s32 1, %v2739
        %v2741 = vrot.slane %v684, %v2740
        %2743 = vbcast.lane.b32.xlu0 %v2741, 256
        %v2744 = vpop.permute.xlu0 %2743
        %s2746 = sor.u32 256, 8
        %2747 = vbcast.lane.b32.xlu0 %v2741, %s2746
        %v2748 = vpop.permute.xlu0 %2747
        %v2749 = vmul.f32 %v2733, %v1950
        %v2750 = vmul.f32 %v2737, %v1951
        %v2751 = vmul.f32 %v2744, %v1952
        %v2752 = vmul.f32 %v2748, %v1953
        %v2753 = vsel %vm699, %v2749, 0.0
        %v2754 = vsel %vm699, %v2750, 0.0
        %v2755 = vadd.f32 %v2753, %v2754
        %v2756 = vrot.slane %v2755, 4
        %v2757 = vadd.f32 %v2755, %v2756
        %v2758 = vrot.slane %v2757, 2
        %v2759 = vadd.f32 %v2757, %v2758
        %v2760 = vrot.slane %v2759, 1
        %v2761 = vadd.f32 %v2759, %v2760
        %v2762 = vsel %vm699, %v2751, 0.0
        %v2763 = vsel %vm699, %v2752, 0.0
        %v2764 = vadd.f32 %v2762, %v2763
        %v2765 = vrot.slane %v2764, 4
        %v2766 = vadd.f32 %v2764, %v2765
        %v2767 = vrot.slane %v2766, 2
        %v2768 = vadd.f32 %v2766, %v2767
        %v2769 = vrot.slane %v2768, 1
        %v2770 = vadd.f32 %v2768, %v2769
        %2771 = vset.pattern.permute.xlu0 23
        %2772 = vperm.xlu0 %2771, %v2429
        %v2773 = vpop.permute.xlu0 %2772
        %v2777 = vsel %vm1517, %v2770, %v2761
        %v2779 = vmul.f32 %v2773, %v2777
        %v2780 = vadd.f32 %v2677, %v2779
        %2781 = vset.pattern.permute.xlu0 25
        %2782 = vperm.xlu0 %2781, %v2429
        %v2783 = vpop.permute.xlu0 %2782
        %v2789 = vlaneseq
        %v2790 = vshrl.u32 %v2789, 7
        %v2791 = vsub.s32 %v1306, %v2790
        %v2792 = vrot.slane %v2717, %v2791
        %v2793 = vlaneseq
        %v2794 = vshrl.u32 %v2793, 7
        %v2795 = vsub.s32 %v1501, %v2794
        %v2796 = vrot.slane %v2720, %v2795
        %v2797 = vsel %vm1506, %v2796, %v2792
        %v2798 = vlaneseq
        %v2799 = vshrl.u32 %v2798, 7
        %v2800 = vsub.s32 %v1306, %v2799
        %v2801 = vrot.slane %v2723, %v2800
        %v2802 = vlaneseq
        %v2803 = vshrl.u32 %v2802, 7
        %v2804 = vsub.s32 %v1501, %v2803
        %v2805 = vrot.slane %v2726, %v2804
        %v2806 = vsel %vm1506, %v2805, %v2801
        %v2807 = vsel %vm1517, %v2806, %v2797
        %v2809 = vmul.f32 %v2783, %v2807
        %v2810 = vadd.f32 %v2780, %v2809
        %s2811 = scalar_lea.vmem [#allocation4], 2
        %2812 = vst.msk [vmem:[%s2811] sm:$0x3] %vm1319, %v2810
        %v2813 = vlaneseq
        %v2814 = vshrl.u32 %v2813, 7
        %v2815 = vsub.s32 0, %v2814
        %v2816 = vrot.slane %v2810, %v2815
        %2818 = vbcast.lane.b32.xlu0 %v2816, 256
        %v2819 = vpop.permute.xlu0 %2818
        %s2821 = sor.u32 256, 8
        %2822 = vbcast.lane.b32.xlu0 %v2816, %s2821
        %v2823 = vpop.permute.xlu0 %2822
        %v2824 = vlaneseq
        %v2825 = vshrl.u32 %v2824, 7
        %v2826 = vsub.s32 1, %v2825
        %v2827 = vrot.slane %v2810, %v2826
        %2829 = vbcast.lane.b32.xlu0 %v2827, 256
        %v2830 = vpop.permute.xlu0 %2829
        %s2832 = sor.u32 256, 8
        %2833 = vbcast.lane.b32.xlu0 %v2827, %s2832
        %v2834 = vpop.permute.xlu0 %2833
        %v2835 = vmul.f32 %v2819, %v688
        %v2836 = vmul.f32 %v2823, %v689
        %v2837 = vmul.f32 %v2830, %v690
        %v2838 = vmul.f32 %v2834, %v691
        %v2839 = vsel %vm773, %v2835, 0.0
        %v2840 = vsel %vm773, %v2836, 0.0
        %v2841 = vadd.f32 %v2839, %v2840
        %v2842 = vrot.slane %v2841, 4
        %v2843 = vadd.f32 %v2841, %v2842
        %v2844 = vrot.slane %v2843, 2
        %v2845 = vadd.f32 %v2843, %v2844
        %v2846 = vrot.slane %v2845, 1
        %v2847 = vadd.f32 %v2845, %v2846
        %v2848 = vsel %vm773, %v2837, 0.0
        %v2849 = vsel %vm773, %v2838, 0.0
        %v2850 = vadd.f32 %v2848, %v2849
        %v2851 = vrot.slane %v2850, 4
        %v2852 = vadd.f32 %v2850, %v2851
        %v2853 = vrot.slane %v2852, 2
        %v2854 = vadd.f32 %v2852, %v2853
        %v2855 = vrot.slane %v2854, 1
        %v2856 = vadd.f32 %v2854, %v2855
        %v2859 = vsel %vm1517, %v2856, %v2847
        %2860 = vrot.lane.b32.xlu0 %v2859, 8
        %v2861 = vpop.permute.xlu0 %2860
        %vm2863 = vcmask 123968
        %2864 = vst.msk [vmem:[#allocation2] sm:$0x3] %vm2863, %v2861
        %v2865 = vld [vmem:[#allocation2] sm:$0x3]
        %v2866 = vld [vmem:[#allocation18] sm:$0xff]
        %v2867 = vld [vmem:[#allocation18 + $0x8] sm:$0xff]
        %v2869 = vsel %vm699, %v2865, 0
        %2871 = vmatprep.subr.mxu0 0.0
        %2872 = vmatpush1.msra.mxu0 %v2866
        %2873 = vmatprep.subr.mxu0 0.0
        %2874 = vmatpush1.msra.mxu0 %v2867
        %2875 = vmatprep.subr.mxu0 0.0
        %2876 = vmatpush1.msra.mxu0 0.0
        %2877 = vmatprep.subr.mxu0 0.0
        %2878 = vmatpush1.msra.mxu0 0.0
        %2879 = vmatprep.subr.mxu0 0.0
        %2880 = vmatpush1.msra.mxu0 0.0
        %2881 = vmatprep.subr.mxu0 0.0
        %2882 = vmatpush1.msra.mxu0 0.0
        %2883 = vmatprep.subr.mxu0 0.0
        %2884 = vmatpush1.msra.mxu0 0.0
        %2885 = vmatprep.subr.mxu0 0.0
        %2886 = vmatpush1.msra.mxu0 0.0
        %2887 = vmatprep.subr.mxu0 0.0
        %2888 = vmatpush1.msra.mxu0 0.0
        %2889 = vmatprep.subr.mxu0 0.0
        %2890 = vmatpush1.msra.mxu0 0.0
        %2891 = vmatprep.subr.mxu0 0.0
        %2892 = vmatpush1.msra.mxu0 0.0
        %2893 = vmatprep.subr.mxu0 0.0
        %2894 = vmatpush1.msra.mxu0 0.0
        %2895 = vmatprep.subr.mxu0 0.0
        %2896 = vmatpush1.msra.mxu0 0.0
        %2897 = vmatprep.subr.mxu0 0.0
        %2898 = vmatpush1.msra.mxu0 0.0
        %2899 = vmatprep.subr.mxu0 0.0
        %2900 = vmatpush1.msra.mxu0 0.0
        %2901 = vmatprep.subr.mxu0 0.0
        %2902 = vmatpush1.msra.mxu0 0.0
        %2903 = vmatprep.subr.mxu0 0.0
        %2904 = vmatpush1.msra.mxu0 0.0
        %2905 = vmatprep.subr.mxu0 0.0
        %2906 = vmatpush1.msra.mxu0 0.0
        %2907 = vmatprep.subr.mxu0 0.0
        %2908 = vmatpush1.msra.mxu0 0.0
        %2909 = vmatprep.subr.mxu0 0.0
        %2910 = vmatpush1.msra.mxu0 0.0
        %2911 = vmatprep.subr.mxu0 0.0
        %2912 = vmatpush1.msra.mxu0 0.0
        %2913 = vmatprep.subr.mxu0 0.0
        %2914 = vmatpush1.msra.mxu0 0.0
        %2915 = vmatprep.subr.mxu0 0.0
        %2916 = vmatpush1.msra.mxu0 0.0
        %2917 = vmatprep.subr.mxu0 0.0
        %2918 = vmatpush1.msra.mxu0 0.0
        %2919 = vmatprep.subr.mxu0 0.0
        %2920 = vmatpush1.msra.mxu0 0.0
        %2921 = vmatprep.subr.mxu0 0.0
        %2922 = vmatpush1.msra.mxu0 0.0
        %2923 = vmatprep.subr.mxu0 0.0
        %2924 = vmatpush1.msra.mxu0 0.0
        %2925 = vmatprep.subr.mxu0 0.0
        %2926 = vmatpush1.msra.mxu0 0.0
        %2927 = vmatprep.subr.mxu0 0.0
        %2928 = vmatpush1.msra.mxu0 0.0
        %2929 = vmatprep.subr.mxu0 0.0
        %2930 = vmatpush1.msra.mxu0 0.0
        %2931 = vmatprep.subr.mxu0 0.0
        %2932 = vmatpush1.msra.mxu0 0.0
        %2933 = vmatprep.subr.mxu0 0.0
        %2934 = vmatpush1.msra.mxu0 0.0
        %2935 = vmatprep.mubr.f32.mxu0 0.0
        %2936 = vmatmul.mubr.f32.gmra.mrb[0].mxu0 %v2869
        %v2937 = vpop.f32.mrb[0].mxu0
        %v2938 = vadd.f32 0.0, %v2937
        %v2939 = vpop.f32.mrb[0].mxu0
        %2940 = vdwg.mxu0
        %2942 = vrot.lane.b32.xlu0 %v2938, 53
        %v2943 = vpop.permute.xlu0 %2942
        %v2945 = vadd.f32 %v1258, %v2943
        %2947 = vrot.lane.b32.xlu0 %v2945, 75
        %v2948 = vpop.permute.xlu0 %2947
        %vm2950 = vcmask 74752
        %2951 = vst.msk [vmem:[%s633] sm:$0x3] %vm2950, %v2948
        %p2952 = scmp.eq.s32.totalorder %s39, 7
        // Predicated region
        $region109: #{processor_forward_seq.1} parent=71 // pred_check
          %p2953 = pneg %p2952
        $region110: #{processor_forward_seq.1} parent=71 // pred_check_branch
          %2955 = sbr.rel (%p2953) target = $region112
        $region111: #{processor_forward_seq.1} parent=71 // pred_region
          %v2956 = vld [vmem:[#allocation2] sm:$0x3]
          %2957 = vst.msk [vmem:[#allocation21] sm:$0x3] %vm1319, %v2956
          %v2958 = vld [vmem:[#allocation3] sm:$0x3]
          %v2959 = vld [vmem:[#allocation3 + $0x2] sm:$0x3]
          %v2960 = vld [vmem:[#allocation3 + $0x4] sm:$0x3]
          %v2961 = vld [vmem:[#allocation3 + $0x6] sm:$0x3]
          %2962 = vst.msk [vmem:[#allocation23] sm:$0x3] %vm965, %v2958
          %2963 = vst.msk [vmem:[#allocation23 + $0x2] sm:$0x3] %vm965, %v2959
          %2964 = vst.msk [vmem:[#allocation23 + $0x4] sm:$0x3] %vm965, %v2960
          %2965 = vst.msk [vmem:[#allocation23 + $0x6] sm:$0x3] %vm965, %v2961
          %v2966 = vld [vmem:[#allocation4] sm:$0x3]
          %v2967 = vld [vmem:[#allocation4 + $0x2] sm:$0x3]
          %v2968 = vld [vmem:[#allocation4 + $0x4] sm:$0x3]
          %v2969 = vld [vmem:[#allocation4 + $0x6] sm:$0x3]
          %v2970 = vld [vmem:[#allocation4 + $0x8] sm:$0x3]
          %2971 = vst.msk [vmem:[#allocation24] sm:$0x3] %vm1319, %v2966
          %2972 = vst.msk [vmem:[#allocation24 + $0x2] sm:$0x3] %vm1319, %v2967
          %2973 = vst.msk [vmem:[#allocation24 + $0x4] sm:$0x3] %vm1319, %v2968
          %2974 = vst.msk [vmem:[#allocation24 + $0x6] sm:$0x3] %vm1319, %v2969
          %2975 = vst.msk [vmem:[#allocation24 + $0x8] sm:$0x3] %vm1319, %v2970
          %v2976 = vld [vmem:[#allocation5] sm:$0xff]
          %v2977 = vld [vmem:[#allocation5 + $0x8] sm:$0xff]
          %v2978 = vld [vmem:[#allocation5 + $0x10] sm:$0xff]
          %v2979 = vld [vmem:[#allocation5 + $0x18] sm:$0xff]
          %2980 = vst.msk [vmem:[#allocation26] sm:$0xff] %vm699, %v2976
          %2981 = vst.msk [vmem:[#allocation26 + $0x8] sm:$0xff] %vm699, %v2977
          %2982 = vst.msk [vmem:[#allocation26 + $0x10] sm:$0xff] %vm699, %v2978
          %2983 = vst.msk [vmem:[#allocation26 + $0x18] sm:$0xff] %vm699, %v2979
        $region112: #{processor_forward_seq.1} parent=71 // pred_fallthru
          _
        %s2984 = sand.u32 %s325, 1
        %s2985 = scalar_lea.sflag [#allocation8], %s2984
        %s2986 = sand.u32 %s325, 1
        %s2987 = smul.addr %s2986, 2
        %s2988 = scalar_lea.vmem [#allocation20], %s2987
        // Predicated region
        $region113: #{processor_forward_seq.1} parent=71 // pred_check
          %p2989 = pneg %p335
        $region114: #{processor_forward_seq.1} parent=71 // pred_check_branch
          %2991 = sbr.rel (%p2989) target = $region116
        $region115: #{processor_forward_seq.1} parent=71 // pred_region
          %s2993 = ssub.s32 32, 32
          %2994 = vsyncadd %s2985, %s2993
          %s2995 = smul.addr %s39, 32
          %s2996 = scalar_lea.hbm %s13, %s2995
          %s2998 = sshll.u32 %s2988, 4
          %s2999 = int_to_ptr.vmem [resolvable:$true] %s2998
          %3001 = dma.vmem_to_hbm [thread:$0]  %s2999, 32, %s2996, %s2985
        $region116: #{processor_forward_seq.1} parent=71 // pred_fallthru
          _
        // Predicated region
        $region117: #{processor_forward_seq.1} parent=71 // pred_check
          %p3002 = pneg %p356
        $region118: #{processor_forward_seq.1} parent=71 // pred_check_branch
          %3004 = sbr.rel (%p3002) target = $region120
        $region119: #{processor_forward_seq.1} parent=71 // pred_region
          %s3006 = ssub.s32 32, 32
          %3007 = vsyncadd [#allocation22], %s3006
          %s3009 = sshll.u32 [#allocation21], 4
          %s3010 = int_to_ptr.vmem [resolvable:$true] %s3009
          %3012 = dma.vmem_to_hbm [thread:$0]  %s3010, 32, %s14, [#allocation22]
        $region120: #{processor_forward_seq.1} parent=71 // pred_fallthru
          _
        // Predicated region
        $region121: #{processor_forward_seq.1} parent=71 // pred_check
          %p3013 = pneg %p377
        $region122: #{processor_forward_seq.1} parent=71 // pred_check_branch
          %3015 = sbr.rel (%p3013) target = $region124
        $region123: #{processor_forward_seq.1} parent=71 // pred_region
          %s3017 = ssub.s32 128, 128
          %3018 = vsyncadd [#allocation22], %s3017
          %s3019 = sshll.u32 [#allocation23], 4
          %s3020 = int_to_ptr.vmem [resolvable:$true] %s3019
          %3025 = dma.vmem_to_hbm [thread:$0]  %s3020, 128, %s15, [#allocation22], 32, 32, 2
        $region124: #{processor_forward_seq.1} parent=71 // pred_fallthru
          _
        // Predicated region
        $region125: #{processor_forward_seq.1} parent=71 // pred_check
          %p3026 = pneg %p398
        $region126: #{processor_forward_seq.1} parent=71 // pred_check_branch
          %3028 = sbr.rel (%p3026) target = $region128
        $region127: #{processor_forward_seq.1} parent=71 // pred_region
          %s3030 = ssub.s32 160, 160
          %3031 = vsyncadd [#allocation25], %s3030
          %s3032 = sshll.u32 [#allocation24], 4
          %s3033 = int_to_ptr.vmem [resolvable:$true] %s3032
          %3038 = dma.vmem_to_hbm [thread:$0]  %s3033, 160, %s16, [#allocation25], 32, 32, 2
        $region128: #{processor_forward_seq.1} parent=71 // pred_fallthru
          _
        // Predicated region
        $region129: #{processor_forward_seq.1} parent=71 // pred_check
          %p3039 = pneg %p419
        $region130: #{processor_forward_seq.1} parent=71 // pred_check_branch
          %3041 = sbr.rel (%p3039) target = $region132
        $region131: #{processor_forward_seq.1} parent=71 // pred_region
          %s3043 = ssub.s32 512, 512
          %3044 = vsyncadd [#allocation25], %s3043
          %s3045 = sshll.u32 [#allocation26], 4
          %s3046 = int_to_ptr.vmem [resolvable:$true] %s3045
          %3051 = dma.vmem_to_hbm [thread:$0]  %s3046, 512, %s17, [#allocation25], 128, 128, 8
        $region132: #{processor_forward_seq.1} parent=71 // pred_fallthru
          _
        // Predicated region
        $region133: #{processor_forward_seq.1} parent=71 // pred_check
          %p3052 = pneg %p356
        $region134: #{processor_forward_seq.1} parent=71 // pred_check_branch
          %3054 = sbr.rel (%p3052) target = $region136
        $region135: #{processor_forward_seq.1} parent=71 // pred_region
          %3055 = dma.done [#allocation22], 32
        $region136: #{processor_forward_seq.1} parent=71 // pred_fallthru
          _
        // Predicated region
        $region137: #{processor_forward_seq.1} parent=71 // pred_check
          %p3056 = pneg %p377
        $region138: #{processor_forward_seq.1} parent=71 // pred_check_branch
          %3058 = sbr.rel (%p3056) target = $region140
        $region139: #{processor_forward_seq.1} parent=71 // pred_region
          %3059 = dma.done [#allocation22], 128
        $region140: #{processor_forward_seq.1} parent=71 // pred_fallthru
          _
        // Predicated region
        $region141: #{processor_forward_seq.1} parent=71 // pred_check
          %p3060 = pneg %p398
        $region142: #{processor_forward_seq.1} parent=71 // pred_check_branch
          %3062 = sbr.rel (%p3060) target = $region144
        $region143: #{processor_forward_seq.1} parent=71 // pred_region
          %3063 = dma.done [#allocation25], 160
        $region144: #{processor_forward_seq.1} parent=71 // pred_fallthru
          _
        // Predicated region
        $region145: #{processor_forward_seq.1} parent=71 // pred_check
          %p3064 = pneg %p419
        $region146: #{processor_forward_seq.1} parent=71 // pred_check_branch
          %3066 = sbr.rel (%p3064) target = $region148
        $region147: #{processor_forward_seq.1} parent=71 // pred_region
          %3067 = dma.done [#allocation25], 512
        $region148: #{processor_forward_seq.1} parent=71 // pred_fallthru
          _
      $region72: #{processor_forward_seq.1} parent=5 // pred_fallthru
        _
      %p3068 = scmp.le.s32.totalorder 2, %s34
      // Predicated region
      $region149: #{processor_forward_seq.1} parent=5 // pred_check
        %p3069 = pneg %p3068
      $region150: #{processor_forward_seq.1} parent=5 // pred_check_branch
        %3071 = sbr.rel (%p3069) target = $region152
      $region151: #{processor_forward_seq.1} parent=5 // pred_region
        %s3072 = ssub.s32 %s34, 2
        // Predicated region
        $region153: #{processor_forward_seq.1} parent=151 // pred_check
          %p3073 = pneg %p341
        $region154: #{processor_forward_seq.1} parent=151 // pred_check_branch
          %3075 = sbr.rel (%p3073) target = $region156
        $region155: #{processor_forward_seq.1} parent=151 // pred_region
          %s3076 = sand.u32 %s326, 1
          %s3077 = scalar_lea.sflag [#allocation8], %s3076
          %s3078 = sand.u32 %s326, 1
          %s3079 = smul.addr %s3078, 2
          %s3080 = scalar_lea.vmem [#allocation20], %s3079
          %3081 = dma.done %s3077, 32
        $region156: #{processor_forward_seq.1} parent=151 // pred_fallthru
          _
      $region152: #{processor_forward_seq.1} parent=5 // pred_fallthru
        _
    $region6: #{processor_forward_seq.1} parent=1 // loop_footer
      %s38 = sadd.s32 1, %s34
    $region7: #{processor_forward_seq.1} parent=1 // loop_footer_branch
      %33 = sbr.rel target = $region3
    $region8: #{processor_forward_seq.1} parent=1 // loop_exit
      _
    %3082 = vsyncpa [#allocation7], 1
    %s3083 = scalar_lea.sflag [#allocation7], 1
    %3084 = vsyncpa %s3083, 1
    %3085 = vsyncpa [#allocation10], 1
    %3086 = vsyncpa [#allocation13], 1
    %3087 = vsyncpa [#allocation16], 1
    %3088 = vsyncpa [#allocation19], 1
    %3089 = vsyncpa [#allocation8], 1
    %s3090 = scalar_lea.sflag [#allocation8], 1
    %3091 = vsyncpa %s3090, 1
    %3092 = vsyncpa [#allocation22], 1
    %3093 = vsyncpa [#allocation25], 1

</llo_original>
